<compile_context>
chip_gen: v6e
topology: v6e:2x2x1
jax: 0.10.0
libtpu: 0.0.40
codegen_flags: <defaults>
</compile_context>

<pallas_src>
import jax
import jax.numpy as jnp
from jax.experimental import pallas as pl
from jax.experimental.pallas import tpu as pltpu

AFFINE_SIZE = 6         # flattened 2x3 affine matrix
POINT_SIZE = 2          # 2-D point
INPUT_SIZE = AFFINE_SIZE + POINT_SIZE   # 8
HIDDEN = 64
OUTPUT_SIZE = 2
PADDED = 128            # lane-dense / MXU-native hidden width
MAX_TILE_B = 2048       # cap on the batch tile (VMEM working set stays a few MiB)
SMALL_BATCH_MAX = 512   # at or below this, skip Pallas and let XLA fuse the tiny dots


def _pick_tile_b(batch):
    """Batch tile: >= 2 grid steps when possible (v7x dual TC), multiple of 256, <= 2048."""
    half = -(-batch // 2)                 # ceil(batch / 2)
    tile = -(-half // 256) * 256          # round up to a multiple of 256
    return max(256, min(MAX_TILE_B, tile))


def _mlp_kernel(a_ref, p_ref, w1a_ref, w1p_ref, b1_ref, w2_ref, b2_ref, w3_ref, b3_ref,
                o_ref):
    # a_ref : (TILE_B, 6)    p_ref : (TILE_B, 2)
    # w1a   : (6, 128)  w1p : (2, 128)  b1 : (1, 128)   (cols >= 64 are zero padding)
    # w2    : (128, 128)               b2 : (1, 128)
    # w3    : (128, 128)               b3 : (1, 128)    (only cols < OUTPUT_SIZE are real)
    # o_ref : (TILE_B, OUTPUT_SIZE)  -- only the 2 real columns are written back to HBM
    h1 = (jnp.dot(a_ref[...], w1a_ref[...], preferred_element_type=jnp.float32)
          + jnp.dot(p_ref[...], w1p_ref[...], preferred_element_type=jnp.float32)
          + b1_ref[...])
    h1 = jnp.maximum(h1, 0.0)                      # ReLU (Dropout identity in eval)
    h2 = jnp.dot(h1, w2_ref[...], preferred_element_type=jnp.float32) + b2_ref[...]
    h2 = jnp.maximum(h2, 0.0)                      # ReLU (Dropout identity in eval)
    out = jnp.dot(h2, w3_ref[...], preferred_element_type=jnp.float32) + b3_ref[...]
    o_ref[...] = out[:, :OUTPUT_SIZE].astype(o_ref.dtype)


def pad_params(params):
    """Zero-pad hidden dims to 128 and split w1 into its affine-rows / point-rows pieces.
    Zero padding keeps the math bit-identical to the unpadded network."""
    w1, b1, w2, b2, w3, b3 = params
    w1a = jnp.zeros((AFFINE_SIZE, PADDED), jnp.float32).at[:, :HIDDEN].set(w1[:AFFINE_SIZE])
    w1p = jnp.zeros((POINT_SIZE, PADDED), jnp.float32).at[:, :HIDDEN].set(w1[AFFINE_SIZE:])
    b1p = jnp.zeros((1, PADDED), jnp.float32).at[:, :HIDDEN].set(b1)
    w2p = jnp.zeros((PADDED, PADDED), jnp.float32).at[:HIDDEN, :HIDDEN].set(w2)
    b2p = jnp.zeros((1, PADDED), jnp.float32).at[:, :HIDDEN].set(b2)
    w3p = jnp.zeros((PADDED, PADDED), jnp.float32).at[:HIDDEN, :OUTPUT_SIZE].set(w3)
    b3p = jnp.zeros((1, PADDED), jnp.float32).at[:, :OUTPUT_SIZE].set(b3)
    return (w1a, w1p, b1p, w2p, b2p, w3p, b3p)


def _jax_forward_padded(affine_matrix, point, padded_params):
    """Fused pure-JAX path for small batches (XLA fuses the three tiny dots)."""
    w1a, w1p, b1, w2, b2, w3, b3 = padded_params
    a = affine_matrix.astype(jnp.float32)
    p = point.astype(jnp.float32)
    h1 = jnp.maximum(a @ w1a + p @ w1p + b1, 0.0)
    h2 = jnp.maximum(h1 @ w2 + b2, 0.0)
    return (h2 @ w3 + b3)[:, :OUTPUT_SIZE]


@jax.jit
def affine_transformation_network_batched(affine_matrix, point, padded_params):
    """Batched forward.  affine_matrix: (B, 6), point: (B, 2) -> (B, 2)."""
    batch = affine_matrix.shape[0]

    # Small batches: pallas_call launch overhead dominates -> single fused XLA kernel.
    if batch <= SMALL_BATCH_MAX:
        return _jax_forward_padded(affine_matrix, point, padded_params)

    w1a, w1p, b1, w2, b2, w3, b3 = padded_params
    a = affine_matrix.astype(jnp.float32)
    p = point.astype(jnp.float32)

    tile_b = _pick_tile_b(batch)
    grid = (pl.cdiv(batch, tile_b),)    # partial edge block; Pallas masks OOB writes

    out = pl.pallas_call(
        _mlp_kernel,
        out_shape=jax.ShapeDtypeStruct((batch, OUTPUT_SIZE), jnp.float32),
        grid_spec=pltpu.PrefetchScalarGridSpec(
            num_scalar_prefetch=0,
            grid=grid,
            in_specs=[
                # activations: one batch tile per grid step
                pl.BlockSpec((tile_b, AFFINE_SIZE), lambda i: (i, 0)),
                pl.BlockSpec((tile_b, POINT_SIZE), lambda i: (i, 0)),
                # parameters: constant index_map -> DMA'd once, resident across the grid
                pl.BlockSpec((AFFINE_SIZE, PADDED), lambda i: (0, 0)),
                pl.BlockSpec((POINT_SIZE, PADDED), lambda i: (0, 0)),
                pl.BlockSpec((1, PADDED), lambda i: (0, 0)),
                pl.BlockSpec((PADDED, PADDED), lambda i: (0, 0)),
                pl.BlockSpec((1, PADDED), lambda i: (0, 0)),
                pl.BlockSpec((PADDED, PADDED), lambda i: (0, 0)),
                pl.BlockSpec((1, PADDED), lambda i: (0, 0)),
            ],
            # only the 2 real output columns are written back (64x fewer HBM bytes)
            out_specs=pl.BlockSpec((tile_b, OUTPUT_SIZE), lambda i: (i, 0)),
        ),
        compiler_params=pltpu.CompilerParams(
            dimension_semantics=("parallel",)),   # shard batch tiles across TCs (v7x)
    )(a, p, w1a, w1p, b1, w2, b2, w3, b3)

    return out


def affine_transformation_network(affine_matrix, point, params):
    """Single-point forward (affine_matrix (6,), point (2,) -> (2,)). Pure JAX on purpose:
    for ~5 KFLOP the pallas_call launch + DMA is pure overhead."""
    w1, b1, w2, b2, w3, b3 = params
    x = jnp.concatenate([affine_matrix, point]).astype(jnp.float32).reshape(1, INPUT_SIZE)
    h1 = jnp.maximum(x @ w1 + b1, 0.0)
    h2 = jnp.maximum(h1 @ w2 + b2, 0.0)
    return (h2 @ w3 + b3).reshape(OUTPUT_SIZE)


def init_params(key):
    """Deterministic init matching PyTorch nn.Linear shapes:
       Linear(8,64), Linear(64,64), Linear(64,2).
       Weights stored transposed as (in, out); init ~ U(-1/sqrt(fan_in), 1/sqrt(fan_in))."""
    def linear_init(k, fan_in, fan_out):
        kw, kb = jax.random.split(k)
        bound = 1.0 / jnp.sqrt(jnp.float32(fan_in))
        w = jax.random.uniform(kw, (fan_in, fan_out), jnp.float32, -bound, bound)
        b = jax.random.uniform(kb, (1, fan_out), jnp.float32, -bound, bound)
        return w, b

    k1, k2, k3 = jax.random.split(key, 3)
    w1, b1 = linear_init(k1, INPUT_SIZE, HIDDEN)
    w2, b2 = linear_init(k2, HIDDEN, HIDDEN)
    w3, b3 = linear_init(k3, HIDDEN, OUTPUT_SIZE)
    return (w1, b1, w2, b2, w3, b3)


def _ref_forward_batched(affine_matrix, point, params):
    """Pure-JAX reference for correctness checking (unpadded params)."""
    w1, b1, w2, b2, w3, b3 = params
    x = jnp.concatenate([affine_matrix, point], axis=-1).astype(jnp.float32)
    h1 = jnp.maximum(x @ w1 + b1, 0.0)
    h2 = jnp.maximum(h1 @ w2 + b2, 0.0)
    return h2 @ w3 + b3


if __name__ == "__main__":
    key = jax.random.PRNGKey(0)
    k_params, k_aff, k_pt = jax.random.split(key, 3)

    params = init_params(k_params)
    padded_params = pad_params(params)

    # Large enough to take the Pallas path, and NOT a multiple of the 256-granular tile,
    # so the partial edge block (masked writes) is exercised.  Still tiny data (~48 KiB).
    BATCH_LARGE = 1537
    BATCH_SMALL = 200     # routed through the fused pure-JAX small-batch path

    affine_matrix = jax.random.normal(k_aff, (BATCH_LARGE, AFFINE_SIZE), jnp.float32)
    point = jax.random.normal(k_pt, (BATCH_LARGE, POINT_SIZE), jnp.float32)

    ref = _ref_forward_batched(affine_matrix, point, params)

    # Batched Pallas kernel path.
    out = affine_transformation_network_batched(affine_matrix, point, padded_params)
    out = jax.block_until_ready(out)
    assert out.shape == (BATCH_LARGE, OUTPUT_SIZE)
    assert jnp.allclose(out, ref, atol=1e-4, rtol=1e-4), (out[:4], ref[:4])

    # Small-batch dispatch (pure JAX, per perf review) agrees with the same reference.
    out_small = affine_transformation_network_batched(
        affine_matrix[:BATCH_SMALL], point[:BATCH_SMALL], padded_params)
    out_small = jax.block_until_ready(out_small)
    assert out_small.shape == (BATCH_SMALL, OUTPUT_SIZE)
    assert jnp.allclose(out_small, ref[:BATCH_SMALL], atol=1e-4, rtol=1e-4)

    # Single-point path.
    single = affine_transformation_network(affine_matrix[0], point[0], params)
    single = jax.block_until_ready(single)
    assert single.shape == (OUTPUT_SIZE,)
    assert jnp.allclose(single, ref[0], atol=1e-4, rtol=1e-4), (single, ref[0])

    print("KERNEL_OK")
</pallas_src>

<mosaic_0001>
module attributes {stable_mosaic.version = 11 : i64} {
  func.func @_mlp_kernel(%arg0: i32, %arg1: memref<1024x6xf32, #tpu.memory_space<vmem>>, %arg2: memref<1024x2xf32, #tpu.memory_space<vmem>>, %arg3: memref<6x128xf32, #tpu.memory_space<vmem>>, %arg4: memref<2x128xf32, #tpu.memory_space<vmem>>, %arg5: memref<1x128xf32, #tpu.memory_space<vmem>>, %arg6: memref<128x128xf32, #tpu.memory_space<vmem>>, %arg7: memref<1x128xf32, #tpu.memory_space<vmem>>, %arg8: memref<128x128xf32, #tpu.memory_space<vmem>>, %arg9: memref<1x128xf32, #tpu.memory_space<vmem>>, %arg10: memref<1024x2xf32, #tpu.memory_space<vmem>>) attributes {dimension_semantics = [#tpu.dimension_semantics<parallel>], iteration_bounds = array<i64: 2>, scalar_prefetch = 0 : i64, scratch_operands = 0 : i64, tpu.core_type = #tpu.core_type<tc>, window_params = [{transform_indices = @transform_0, window_bounds = array<i64: 1024, 6>}, {transform_indices = @transform_1, window_bounds = array<i64: 1024, 2>}, {pipeline_mode = #tpu.pipeline_mode<synchronous>, transform_indices = @transform_2, window_bounds = array<i64: 6, 128>}, {pipeline_mode = #tpu.pipeline_mode<synchronous>, transform_indices = @transform_3, window_bounds = array<i64: 2, 128>}, {pipeline_mode = #tpu.pipeline_mode<synchronous>, transform_indices = @transform_4, window_bounds = array<i64: 1, 128>}, {pipeline_mode = #tpu.pipeline_mode<synchronous>, transform_indices = @transform_5, window_bounds = array<i64: 128, 128>}, {pipeline_mode = #tpu.pipeline_mode<synchronous>, transform_indices = @transform_6, window_bounds = array<i64: 1, 128>}, {pipeline_mode = #tpu.pipeline_mode<synchronous>, transform_indices = @transform_7, window_bounds = array<i64: 128, 128>}, {pipeline_mode = #tpu.pipeline_mode<synchronous>, transform_indices = @transform_8, window_bounds = array<i64: 1, 128>}, {transform_indices = @transform_9, window_bounds = array<i64: 1024, 2>}]} {
    %c0 = arith.constant 0 : index
    %c0_0 = arith.constant 0 : index
    %0 = vector.load %arg1[%c0, %c0_0] : memref<1024x6xf32, #tpu.memory_space<vmem>>, vector<1024x6xf32>
    %c0_1 = arith.constant 0 : index
    %c0_2 = arith.constant 0 : index
    %1 = vector.load %arg3[%c0_1, %c0_2] : memref<6x128xf32, #tpu.memory_space<vmem>>, vector<6x128xf32>
    %cst = arith.constant dense<0.000000e+00> : vector<1024x128xf32>
    %2 = tpu.matmul %0, %1, %cst {dimension_numbers = #tpu.dot_dimension_numbers<[1], [0], [0], [1], [0, 0, 1, 1], [], []>} : vector<1024x6xf32>, vector<6x128xf32>, vector<1024x128xf32> -> vector<1024x128xf32>
    %c0_3 = arith.constant 0 : index
    %c0_4 = arith.constant 0 : index
    %3 = vector.load %arg2[%c0_3, %c0_4] : memref<1024x2xf32, #tpu.memory_space<vmem>>, vector<1024x2xf32>
    %c0_5 = arith.constant 0 : index
    %c0_6 = arith.constant 0 : index
    %4 = vector.load %arg4[%c0_5, %c0_6] : memref<2x128xf32, #tpu.memory_space<vmem>>, vector<2x128xf32>
    %cst_7 = arith.constant dense<0.000000e+00> : vector<1024x128xf32>
    %5 = tpu.matmul %3, %4, %cst_7 {dimension_numbers = #tpu.dot_dimension_numbers<[1], [0], [0], [1], [0, 0, 1, 1], [], []>} : vector<1024x2xf32>, vector<2x128xf32>, vector<1024x128xf32> -> vector<1024x128xf32>
    %6 = arith.addf %2, %5 : vector<1024x128xf32>
    %c0_8 = arith.constant 0 : index
    %c0_9 = arith.constant 0 : index
    %7 = vector.load %arg5[%c0_8, %c0_9] : memref<1x128xf32, #tpu.memory_space<vmem>>, vector<1x128xf32>
    %8 = vector.broadcast %7 : vector<1x128xf32> to vector<1024x128xf32>
    %9 = arith.addf %6, %8 : vector<1024x128xf32>
    %cst_10 = arith.constant 0.000000e+00 : f32
    %10 = vector.broadcast %cst_10 : f32 to vector<1024x128xf32>
    %11 = arith.maximumf %9, %10 : vector<1024x128xf32>
    %c0_11 = arith.constant 0 : index
    %c0_12 = arith.constant 0 : index
    %12 = vector.load %arg6[%c0_11, %c0_12] : memref<128x128xf32, #tpu.memory_space<vmem>>, vector<128x128xf32>
    %cst_13 = arith.constant dense<0.000000e+00> : vector<1024x128xf32>
    %13 = tpu.matmul %11, %12, %cst_13 {dimension_numbers = #tpu.dot_dimension_numbers<[1], [0], [0], [1], [0, 0, 1, 1], [], []>} : vector<1024x128xf32>, vector<128x128xf32>, vector<1024x128xf32> -> vector<1024x128xf32>
    %c0_14 = arith.constant 0 : index
    %c0_15 = arith.constant 0 : index
    %14 = vector.load %arg7[%c0_14, %c0_15] : memref<1x128xf32, #tpu.memory_space<vmem>>, vector<1x128xf32>
    %15 = vector.broadcast %14 : vector<1x128xf32> to vector<1024x128xf32>
    %16 = arith.addf %13, %15 : vector<1024x128xf32>
    %cst_16 = arith.constant 0.000000e+00 : f32
    %17 = vector.broadcast %cst_16 : f32 to vector<1024x128xf32>
    %18 = arith.maximumf %16, %17 : vector<1024x128xf32>
    %c0_17 = arith.constant 0 : index
    %c0_18 = arith.constant 0 : index
    %19 = vector.load %arg8[%c0_17, %c0_18] : memref<128x128xf32, #tpu.memory_space<vmem>>, vector<128x128xf32>
    %cst_19 = arith.constant dense<0.000000e+00> : vector<1024x128xf32>
    %20 = tpu.matmul %18, %19, %cst_19 {dimension_numbers = #tpu.dot_dimension_numbers<[1], [0], [0], [1], [0, 0, 1, 1], [], []>} : vector<1024x128xf32>, vector<128x128xf32>, vector<1024x128xf32> -> vector<1024x128xf32>
    %c0_20 = arith.constant 0 : index
    %c0_21 = arith.constant 0 : index
    %21 = vector.load %arg9[%c0_20, %c0_21] : memref<1x128xf32, #tpu.memory_space<vmem>>, vector<1x128xf32>
    %22 = vector.broadcast %21 : vector<1x128xf32> to vector<1024x128xf32>
    %23 = arith.addf %20, %22 : vector<1024x128xf32>
    %24 = vector.extract_strided_slice %23 {offsets = [0, 0], sizes = [1024, 2], strides = [1, 1]} : vector<1024x128xf32> to vector<1024x2xf32>
    %c0_22 = arith.constant 0 : index
    %c0_23 = arith.constant 0 : index
    %25 = vector.load %arg10[%c0_22, %c0_23] : memref<1024x2xf32, #tpu.memory_space<vmem>>, vector<1024x2xf32>
    tpu.vector_store %arg10[%c0_22, %c0_23], %24 {strides = array<i32>} : memref<1024x2xf32, #tpu.memory_space<vmem>>, vector<1024x2xf32>,
    return
  }
  func.func @transform_0(%arg0: i32) -> (i32, i32) {
    %c0_i32 = arith.constant 0 : i32
    %c0_i32_0 = arith.constant 0 : i32
    return %arg0, %c0_i32 : i32, i32
  }
  func.func @transform_1(%arg0: i32) -> (i32, i32) {
    %c0_i32 = arith.constant 0 : i32
    %c0_i32_0 = arith.constant 0 : i32
    return %arg0, %c0_i32 : i32, i32
  }
  func.func @transform_2(%arg0: i32) -> (i32, i32) {
    %c0_i32 = arith.constant 0 : i32
    %c0_i32_0 = arith.constant 0 : i32
    %c0_i32_1 = arith.constant 0 : i32
    return %c0_i32, %c0_i32_0 : i32, i32
  }
  func.func @transform_3(%arg0: i32) -> (i32, i32) {
    %c0_i32 = arith.constant 0 : i32
    %c0_i32_0 = arith.constant 0 : i32
    %c0_i32_1 = arith.constant 0 : i32
    return %c0_i32, %c0_i32_0 : i32, i32
  }
  func.func @transform_4(%arg0: i32) -> (i32, i32) {
    %c0_i32 = arith.constant 0 : i32
    %c0_i32_0 = arith.constant 0 : i32
    %c0_i32_1 = arith.constant 0 : i32
    return %c0_i32, %c0_i32_0 : i32, i32
  }
  func.func @transform_5(%arg0: i32) -> (i32, i32) {
    %c0_i32 = arith.constant 0 : i32
    %c0_i32_0 = arith.constant 0 : i32
    %c0_i32_1 = arith.constant 0 : i32
    return %c0_i32, %c0_i32_0 : i32, i32
  }
  func.func @transform_6(%arg0: i32) -> (i32, i32) {
    %c0_i32 = arith.constant 0 : i32
    %c0_i32_0 = arith.constant 0 : i32
    %c0_i32_1 = arith.constant 0 : i32
    return %c0_i32, %c0_i32_0 : i32, i32
  }
  func.func @transform_7(%arg0: i32) -> (i32, i32) {
    %c0_i32 = arith.constant 0 : i32
    %c0_i32_0 = arith.constant 0 : i32
    %c0_i32_1 = arith.constant 0 : i32
    return %c0_i32, %c0_i32_0 : i32, i32
  }
  func.func @transform_8(%arg0: i32) -> (i32, i32) {
    %c0_i32 = arith.constant 0 : i32
    %c0_i32_0 = arith.constant 0 : i32
    %c0_i32_1 = arith.constant 0 : i32
    return %c0_i32, %c0_i32_0 : i32, i32
  }
  func.func @transform_9(%arg0: i32) -> (i32, i32) {
    %c0_i32 = arith.constant 0 : i32
    %c0_i32_0 = arith.constant 0 : i32
    return %arg0, %c0_i32 : i32, i32
  }
}

</mosaic_0001>

<llo_original>
// kernel: affine_transformation_network_batched.1
$region0: #{affine_transformation_network_batched.1}
  #allocation0 [shape = 'u32[]', space=smem, size = 0x4, offset = 0x4, fixed_abs, tag = 'smem constant byte address 0x4 - core index']
  #allocation1 [shape = 'u32[144,128]{1,0:T(1,128)}', space=vmem, size = 0x12000, scoped, tag = 'internal scratch']
  %s0 = inlined_call_operand.vmem [shape: f32[1537,6], index: 0, kind: input, shape index: {}]
  %s1 = inlined_call_operand.vmem [shape: f32[1537,2], index: 1, kind: input, shape index: {}]
  %s2 = inlined_call_operand.vmem [shape: f32[6,128], index: 2, kind: input, shape index: {}]
  %s3 = inlined_call_operand.vmem [shape: f32[2,128], index: 3, kind: input, shape index: {}]
  %s4 = inlined_call_operand.vmem [shape: f32[1,128], index: 4, kind: input, shape index: {}]
  %s5 = inlined_call_operand.vmem [shape: f32[128,128], index: 5, kind: input, shape index: {}]
  %s6 = inlined_call_operand.vmem [shape: f32[1,128], index: 6, kind: input, shape index: {}]
  %s7 = inlined_call_operand.vmem [shape: f32[128,128], index: 7, kind: input, shape index: {}]
  %s8 = inlined_call_operand.vmem [shape: f32[1,128], index: 8, kind: input, shape index: {}]
  %s9 = inlined_call_operand.vmem [shape: f32[1537,2], index: 9, kind: output, shape index: {}]
  %s10 = sld [smem:[#allocation0]]
  $region117: #{affine_transformation_network_batched.1} parent=0
    _
  %s12 = ssub.s32 1, %s10
  %s13 = scalar_select 0, %s12, %s10
  $region1: #{affine_transformation_network_batched.1} parent=0
    #allocation2 [shape = 'u8[1048576]{0}', space=vmem, size = 0x100000, scoped, tag = 'output window, operand 0']
    loop: start=0, step=1, limit=4
    $region2: #{affine_transformation_network_batched.1} parent=1 // loop_pre_header
      _
    $region3: #{affine_transformation_network_batched.1} parent=1 // loop_header
      %s15 = sphi 0, %s19
      %p16 = scmp.ge.s32.totalorder %s15, 4
      %s25 = sphi 0, %s27
      %s28 = sphi 0, %s25
      %s29 = sphi 0, %s28
      %s45 = sphi 0, %s29
      %s51 = sphi 0, %s53
      %s54 = sphi 0, %s51
      %s55 = sphi 0, %s54
      %s71 = sphi 0, %s55
      %s75 = sphi 0, %s75
      %s77 = sphi 0, %s75
      %s78 = sphi 0, %s77
      %s92 = sphi 0, %s78
      %s96 = sphi 0, %s96
      %s98 = sphi 0, %s96
      %s99 = sphi 0, %s98
      %s113 = sphi 0, %s99
      %s117 = sphi 0, %s117
      %s119 = sphi 0, %s117
      %s120 = sphi 0, %s119
      %s134 = sphi 0, %s120
      %s138 = sphi 0, %s138
      %s140 = sphi 0, %s138
      %s141 = sphi 0, %s140
      %s155 = sphi 0, %s141
      %s159 = sphi 0, %s159
      %s161 = sphi 0, %s159
      %s162 = sphi 0, %s161
      %s176 = sphi 0, %s162
      %s180 = sphi 0, %s180
      %s182 = sphi 0, %s180
      %s183 = sphi 0, %s182
      %s197 = sphi 0, %s183
      %s201 = sphi 0, %s201
      %s203 = sphi 0, %s201
      %s204 = sphi 0, %s203
      %s218 = sphi 0, %s204
      %s224 = sphi 0, %s226
      %s227 = sphi 0, %s224
      %s228 = sphi 0, %s227
      %s244 = sphi 0, %s228
    $region4: #{affine_transformation_network_batched.1} parent=1 // loop_header_branch
      %18 = sbr.rel (%p16) target = $region8
    $region5: #{affine_transformation_network_batched.1} parent=1 // loop_body
      %s20 = ssub.s32 %s15, 1
      %s21 = ssub.s32 %s15, 2
      %s22 = sadd.s32 %s15, 1
      %s23 = ssub.s32 %s15, %s22
      %p24 = scmp.eq.s32.totalorder %s23, 0
      %s26 = sadd.s32 %s25, 1
      %s27 = scalar_select %p24, %s25, %s26
      %p30 = pneg %p24
      %p31 = scmp.eq.s32.totalorder %s15, 1
      %p32 = por %p30, %p31
      %p33 = scmp.ne.s32.totalorder %s25, %s28
      %p34 = scmp.eq.s32.totalorder %s15, 0
      %p35 = por %p33, %p34
      %p36 = scmp.ne.s32.totalorder %s25, %s28
      %p37 = scmp.eq.s32.totalorder %s20, 1
      %p38 = por %p36, %p37
      %p39 = scmp.ne.s32.totalorder %s28, %s29
      %p40 = scmp.eq.s32.totalorder %s20, 0
      %p41 = por %p39, %p40
      %p42 = scmp.ne.s32.totalorder %s28, %s29
      %p43 = scmp.eq.s32.totalorder %s21, 1
      %p44 = por %p42, %p43
      %p46 = scmp.ne.s32.totalorder %s29, %s45
      %p47 = scmp.eq.s32.totalorder %s21, 0
      %p48 = por %p46, %p47
      %s49 = ssub.s32 %s15, %s22
      %p50 = scmp.eq.s32.totalorder %s49, 0
      %s52 = sadd.s32 %s51, 1
      %s53 = scalar_select %p50, %s51, %s52
      %p56 = pneg %p50
      %p57 = scmp.eq.s32.totalorder %s15, 1
      %p58 = por %p56, %p57
      %p59 = scmp.ne.s32.totalorder %s51, %s54
      %p60 = scmp.eq.s32.totalorder %s15, 0
      %p61 = por %p59, %p60
      %p62 = scmp.ne.s32.totalorder %s51, %s54
      %p63 = scmp.eq.s32.totalorder %s20, 1
      %p64 = por %p62, %p63
      %p65 = scmp.ne.s32.totalorder %s54, %s55
      %p66 = scmp.eq.s32.totalorder %s20, 0
      %p67 = por %p65, %p66
      %p68 = scmp.ne.s32.totalorder %s54, %s55
      %p69 = scmp.eq.s32.totalorder %s21, 1
      %p70 = por %p68, %p69
      %p72 = scmp.ne.s32.totalorder %s55, %s71
      %p73 = scmp.eq.s32.totalorder %s21, 0
      %p74 = por %p72, %p73
      %s76 = sadd.s32 %s75, 1
      %p79 = scmp.eq.s32.totalorder %s15, 1
      %p80 = scmp.ne.s32.totalorder %s75, %s77
      %p81 = scmp.eq.s32.totalorder %s15, 0
      %p82 = por %p80, %p81
      %p83 = scmp.ne.s32.totalorder %s75, %s77
      %p84 = scmp.eq.s32.totalorder %s20, 1
      %p85 = por %p83, %p84
      %p86 = scmp.ne.s32.totalorder %s77, %s78
      %p87 = scmp.eq.s32.totalorder %s20, 0
      %p88 = por %p86, %p87
      %p89 = scmp.ne.s32.totalorder %s77, %s78
      %p90 = scmp.eq.s32.totalorder %s21, 1
      %p91 = por %p89, %p90
      %p93 = scmp.ne.s32.totalorder %s78, %s92
      %p94 = scmp.eq.s32.totalorder %s21, 0
      %p95 = por %p93, %p94
      %s97 = sadd.s32 %s96, 1
      %p100 = scmp.eq.s32.totalorder %s15, 1
      %p101 = scmp.ne.s32.totalorder %s96, %s98
      %p102 = scmp.eq.s32.totalorder %s15, 0
      %p103 = por %p101, %p102
      %p104 = scmp.ne.s32.totalorder %s96, %s98
      %p105 = scmp.eq.s32.totalorder %s20, 1
      %p106 = por %p104, %p105
      %p107 = scmp.ne.s32.totalorder %s98, %s99
      %p108 = scmp.eq.s32.totalorder %s20, 0
      %p109 = por %p107, %p108
      %p110 = scmp.ne.s32.totalorder %s98, %s99
      %p111 = scmp.eq.s32.totalorder %s21, 1
      %p112 = por %p110, %p111
      %p114 = scmp.ne.s32.totalorder %s99, %s113
      %p115 = scmp.eq.s32.totalorder %s21, 0
      %p116 = por %p114, %p115
      %s118 = sadd.s32 %s117, 1
      %p121 = scmp.eq.s32.totalorder %s15, 1
      %p122 = scmp.ne.s32.totalorder %s117, %s119
      %p123 = scmp.eq.s32.totalorder %s15, 0
      %p124 = por %p122, %p123
      %p125 = scmp.ne.s32.totalorder %s117, %s119
      %p126 = scmp.eq.s32.totalorder %s20, 1
      %p127 = por %p125, %p126
      %p128 = scmp.ne.s32.totalorder %s119, %s120
      %p129 = scmp.eq.s32.totalorder %s20, 0
      %p130 = por %p128, %p129
      %p131 = scmp.ne.s32.totalorder %s119, %s120
      %p132 = scmp.eq.s32.totalorder %s21, 1
      %p133 = por %p131, %p132
      %p135 = scmp.ne.s32.totalorder %s120, %s134
      %p136 = scmp.eq.s32.totalorder %s21, 0
      %p137 = por %p135, %p136
      %s139 = sadd.s32 %s138, 1
      %p142 = scmp.eq.s32.totalorder %s15, 1
      %p143 = scmp.ne.s32.totalorder %s138, %s140
      %p144 = scmp.eq.s32.totalorder %s15, 0
      %p145 = por %p143, %p144
      %p146 = scmp.ne.s32.totalorder %s138, %s140
      %p147 = scmp.eq.s32.totalorder %s20, 1
      %p148 = por %p146, %p147
      %p149 = scmp.ne.s32.totalorder %s140, %s141
      %p150 = scmp.eq.s32.totalorder %s20, 0
      %p151 = por %p149, %p150
      %p152 = scmp.ne.s32.totalorder %s140, %s141
      %p153 = scmp.eq.s32.totalorder %s21, 1
      %p154 = por %p152, %p153
      %p156 = scmp.ne.s32.totalorder %s141, %s155
      %p157 = scmp.eq.s32.totalorder %s21, 0
      %p158 = por %p156, %p157
      %s160 = sadd.s32 %s159, 1
      %p163 = scmp.eq.s32.totalorder %s15, 1
      %p164 = scmp.ne.s32.totalorder %s159, %s161
      %p165 = scmp.eq.s32.totalorder %s15, 0
      %p166 = por %p164, %p165
      %p167 = scmp.ne.s32.totalorder %s159, %s161
      %p168 = scmp.eq.s32.totalorder %s20, 1
      %p169 = por %p167, %p168
      %p170 = scmp.ne.s32.totalorder %s161, %s162
      %p171 = scmp.eq.s32.totalorder %s20, 0
      %p172 = por %p170, %p171
      %p173 = scmp.ne.s32.totalorder %s161, %s162
      %p174 = scmp.eq.s32.totalorder %s21, 1
      %p175 = por %p173, %p174
      %p177 = scmp.ne.s32.totalorder %s162, %s176
      %p178 = scmp.eq.s32.totalorder %s21, 0
      %p179 = por %p177, %p178
      %s181 = sadd.s32 %s180, 1
      %p184 = scmp.eq.s32.totalorder %s15, 1
      %p185 = scmp.ne.s32.totalorder %s180, %s182
      %p186 = scmp.eq.s32.totalorder %s15, 0
      %p187 = por %p185, %p186
      %p188 = scmp.ne.s32.totalorder %s180, %s182
      %p189 = scmp.eq.s32.totalorder %s20, 1
      %p190 = por %p188, %p189
      %p191 = scmp.ne.s32.totalorder %s182, %s183
      %p192 = scmp.eq.s32.totalorder %s20, 0
      %p193 = por %p191, %p192
      %p194 = scmp.ne.s32.totalorder %s182, %s183
      %p195 = scmp.eq.s32.totalorder %s21, 1
      %p196 = por %p194, %p195
      %p198 = scmp.ne.s32.totalorder %s183, %s197
      %p199 = scmp.eq.s32.totalorder %s21, 0
      %p200 = por %p198, %p199
      %s202 = sadd.s32 %s201, 1
      %p205 = scmp.eq.s32.totalorder %s15, 1
      %p206 = scmp.ne.s32.totalorder %s201, %s203
      %p207 = scmp.eq.s32.totalorder %s15, 0
      %p208 = por %p206, %p207
      %p209 = scmp.ne.s32.totalorder %s201, %s203
      %p210 = scmp.eq.s32.totalorder %s20, 1
      %p211 = por %p209, %p210
      %p212 = scmp.ne.s32.totalorder %s203, %s204
      %p213 = scmp.eq.s32.totalorder %s20, 0
      %p214 = por %p212, %p213
      %p215 = scmp.ne.s32.totalorder %s203, %s204
      %p216 = scmp.eq.s32.totalorder %s21, 1
      %p217 = por %p215, %p216
      %p219 = scmp.ne.s32.totalorder %s204, %s218
      %p220 = scmp.eq.s32.totalorder %s21, 0
      %p221 = por %p219, %p220
      %s222 = ssub.s32 %s15, %s22
      %p223 = scmp.eq.s32.totalorder %s222, 0
      %s225 = sadd.s32 %s224, 1
      %s226 = scalar_select %p223, %s224, %s225
      %p229 = pneg %p223
      %p230 = scmp.eq.s32.totalorder %s15, 1
      %p231 = por %p229, %p230
      %p232 = scmp.ne.s32.totalorder %s224, %s227
      %p233 = scmp.eq.s32.totalorder %s15, 0
      %p234 = por %p232, %p233
      %p235 = scmp.ne.s32.totalorder %s224, %s227
      %p236 = scmp.eq.s32.totalorder %s20, 1
      %p237 = por %p235, %p236
      %p238 = scmp.ne.s32.totalorder %s227, %s228
      %p239 = scmp.eq.s32.totalorder %s20, 0
      %p240 = por %p238, %p239
      %p241 = scmp.ne.s32.totalorder %s227, %s228
      %p242 = scmp.eq.s32.totalorder %s21, 1
      %p243 = por %p241, %p242
      %p245 = scmp.ne.s32.totalorder %s228, %s244
      %p246 = scmp.eq.s32.totalorder %s21, 0
      %p247 = por %p245, %p246
      %p248 = scmp.le.s32.totalorder 1, %s15
      %p249 = scmp.lt.s32.totalorder %s15, 3
      %p250 = pnand %p248, %p249
      %p251 = pneg %p250
      // Predicated region
      $region9: #{affine_transformation_network_batched.1} parent=5 // pred_check
        _
      $region10: #{affine_transformation_network_batched.1} parent=5 // pred_check_branch
        %253 = sbr.rel (%p250) target = $region12
      $region11: #{affine_transformation_network_batched.1} parent=5 // pred_region
        %s254 = ssub.s32 %s15, 1
        // Predicated region
        $region13: #{affine_transformation_network_batched.1} parent=11 // pred_check
          %p255 = pneg %p88
        $region14: #{affine_transformation_network_batched.1} parent=11 // pred_check_branch
          %257 = sbr.rel (%p255) target = $region16
        $region15: #{affine_transformation_network_batched.1} parent=11 // pred_region
          _
        $region16: #{affine_transformation_network_batched.1} parent=11 // pred_fallthru
          _
        // Predicated region
        $region17: #{affine_transformation_network_batched.1} parent=11 // pred_check
          %p258 = pneg %p109
        $region18: #{affine_transformation_network_batched.1} parent=11 // pred_check_branch
          %260 = sbr.rel (%p258) target = $region20
        $region19: #{affine_transformation_network_batched.1} parent=11 // pred_region
          _
        $region20: #{affine_transformation_network_batched.1} parent=11 // pred_fallthru
          _
        // Predicated region
        $region21: #{affine_transformation_network_batched.1} parent=11 // pred_check
          %p261 = pneg %p130
        $region22: #{affine_transformation_network_batched.1} parent=11 // pred_check_branch
          %263 = sbr.rel (%p261) target = $region24
        $region23: #{affine_transformation_network_batched.1} parent=11 // pred_region
          _
        $region24: #{affine_transformation_network_batched.1} parent=11 // pred_fallthru
          _
        // Predicated region
        $region25: #{affine_transformation_network_batched.1} parent=11 // pred_check
          %p264 = pneg %p151
        $region26: #{affine_transformation_network_batched.1} parent=11 // pred_check_branch
          %266 = sbr.rel (%p264) target = $region28
        $region27: #{affine_transformation_network_batched.1} parent=11 // pred_region
          _
        $region28: #{affine_transformation_network_batched.1} parent=11 // pred_fallthru
          _
        // Predicated region
        $region29: #{affine_transformation_network_batched.1} parent=11 // pred_check
          %p267 = pneg %p172
        $region30: #{affine_transformation_network_batched.1} parent=11 // pred_check_branch
          %269 = sbr.rel (%p267) target = $region32
        $region31: #{affine_transformation_network_batched.1} parent=11 // pred_region
          _
        $region32: #{affine_transformation_network_batched.1} parent=11 // pred_fallthru
          _
        // Predicated region
        $region33: #{affine_transformation_network_batched.1} parent=11 // pred_check
          %p270 = pneg %p193
        $region34: #{affine_transformation_network_batched.1} parent=11 // pred_check_branch
          %272 = sbr.rel (%p270) target = $region36
        $region35: #{affine_transformation_network_batched.1} parent=11 // pred_region
          _
        $region36: #{affine_transformation_network_batched.1} parent=11 // pred_fallthru
          _
        // Predicated region
        $region37: #{affine_transformation_network_batched.1} parent=11 // pred_check
          %p273 = pneg %p214
        $region38: #{affine_transformation_network_batched.1} parent=11 // pred_check_branch
          %275 = sbr.rel (%p273) target = $region40
        $region39: #{affine_transformation_network_batched.1} parent=11 // pred_region
          _
        $region40: #{affine_transformation_network_batched.1} parent=11 // pred_fallthru
          _
      $region12: #{affine_transformation_network_batched.1} parent=5 // pred_fallthru
        _
      %p276 = scmp.lt.s32.totalorder %s15, 2
      // Predicated region
      $region41: #{affine_transformation_network_batched.1} parent=5 // pred_check
        %p277 = pneg %p276
      $region42: #{affine_transformation_network_batched.1} parent=5 // pred_check_branch
        %279 = sbr.rel (%p277) target = $region44
      $region43: #{affine_transformation_network_batched.1} parent=5 // pred_region
        // Predicated region
        $region45: #{affine_transformation_network_batched.1} parent=43 // pred_check
          %p280 = pneg %p35
        $region46: #{affine_transformation_network_batched.1} parent=43 // pred_check_branch
          %282 = sbr.rel (%p280) target = $region48
        $region47: #{affine_transformation_network_batched.1} parent=43 // pred_region
          %s283 = smul.u32 128, %s15
          %s284 = ssub.s32 193, %s283
          %p285 = scmp.lt.s32.totalorder %s284, 128
          %s286 = scalar_select %p285, %s284, 128
          %s287 = smul.u32 128, %s286
          %p288 = scmp.lt.s32.totalorder %s283, 192
          %s289 = scalar_select %p288, %s283, 192
          %s290 = smul.addr %s289, 8
          %s291 = scalar_lea.vmem %s0, %s290
          %s292 = smul.u32 128, %s15
          %s293 = ssub.s32 193, %s292
          %p294 = scmp.lt.s32.totalorder %s293, 128
          %s295 = scalar_select %p294, %s293, 128
          %s296 = smul.u32 128, %s295
        $region48: #{affine_transformation_network_batched.1} parent=43 // pred_fallthru
          _
        // Predicated region
        $region49: #{affine_transformation_network_batched.1} parent=43 // pred_check
          %p297 = pneg %p61
        $region50: #{affine_transformation_network_batched.1} parent=43 // pred_check_branch
          %299 = sbr.rel (%p297) target = $region52
        $region51: #{affine_transformation_network_batched.1} parent=43 // pred_region
          %s300 = smul.u32 128, %s15
          %s301 = ssub.s32 193, %s300
          %p302 = scmp.lt.s32.totalorder %s301, 128
          %s303 = scalar_select %p302, %s301, 128
          %s304 = smul.u32 128, %s303
          %p305 = scmp.lt.s32.totalorder %s300, 192
          %s306 = scalar_select %p305, %s300, 192
          %s307 = smul.addr %s306, 8
          %s308 = scalar_lea.vmem %s1, %s307
          %s309 = smul.u32 128, %s15
          %s310 = ssub.s32 193, %s309
          %p311 = scmp.lt.s32.totalorder %s310, 128
          %s312 = scalar_select %p311, %s310, 128
          %s313 = smul.u32 128, %s312
        $region52: #{affine_transformation_network_batched.1} parent=43 // pred_fallthru
          _
      $region44: #{affine_transformation_network_batched.1} parent=5 // pred_fallthru
        _
      %p314 = scmp.le.s32.totalorder 1, %s15
      %p315 = scmp.lt.s32.totalorder %s15, 3
      %p316 = pnand %p314, %p315
      %p317 = pneg %p316
      // Predicated region
      $region53: #{affine_transformation_network_batched.1} parent=5 // pred_check
        _
      $region54: #{affine_transformation_network_batched.1} parent=5 // pred_check_branch
        %319 = sbr.rel (%p316) target = $region56
      $region55: #{affine_transformation_network_batched.1} parent=5 // pred_region
        %s320 = ssub.s32 %s15, 1
        %s321 = smul.u32 128, %s20
        %s322 = ssub.s32 193, %s321
        %p323 = scmp.lt.s32.totalorder %s322, 128
        %s324 = scalar_select %p323, %s322, 128
        %s325 = smul.u32 128, %s324
        %p326 = scmp.lt.s32.totalorder %s321, 192
        %s327 = scalar_select %p326, %s321, 192
        %s328 = smul.addr %s327, 8
        %s329 = scalar_lea.vmem %s0, %s328
        %p330 = pneg %p41
        %p331 = pneg %p38
        %s332 = smul.u32 128, %s20
        %s333 = ssub.s32 193, %s332
        %p334 = scmp.lt.s32.totalorder %s333, 128
        %s335 = scalar_select %p334, %s333, 128
        %s336 = smul.u32 128, %s335
        %p337 = scmp.lt.s32.totalorder %s332, 192
        %s338 = scalar_select %p337, %s332, 192
        %s339 = smul.addr %s338, 8
        %s340 = scalar_lea.vmem %s1, %s339
        %p341 = pneg %p67
        %p342 = pneg %p64
        %p343 = pneg %p88
        %p344 = pneg %p85
        %p345 = pneg %p109
        %p346 = pneg %p106
        %p347 = pneg %p130
        %p348 = pneg %p127
        %p349 = pneg %p151
        %p350 = pneg %p148
        %p351 = pneg %p172
        %p352 = pneg %p169
        %p353 = pneg %p193
        %p354 = pneg %p190
        %p355 = pneg %p214
        %p356 = pneg %p211
        %p357 = pneg %p240
        %p358 = pneg %p237
        %s359 = sand.u32 %s227, 1
        %s360 = sand.u32 %s227, 1
        %s361 = smul.addr %s360, 1024
        %s362 = scalar_lea.vmem [#allocation2], %s361
        %s363 = smul.u32 128, %s20
        %s364 = ssub.s32 193, %s363
        %p365 = scmp.lt.s32.totalorder %s364, 128
        %s366 = scalar_select %p365, %s364, 128
        %s367 = smul.u32 128, %s366
        %p368 = scmp.lt.s32.totalorder %s363, 192
        %s369 = scalar_select %p368, %s363, 192
        %s370 = smul.addr %s369, 8
        %s371 = scalar_lea.vmem %s0, %s370
        %s372 = smul.u32 128, %s20
        %s373 = ssub.s32 193, %s372
        %p374 = scmp.lt.s32.totalorder %s373, 128
        %s375 = scalar_select %p374, %s373, 128
        %s376 = smul.u32 128, %s375
        %s377 = smul.u32 128, %s20
        %s378 = ssub.s32 193, %s377
        %p379 = scmp.lt.s32.totalorder %s378, 128
        %s380 = scalar_select %p379, %s378, 128
        %s381 = smul.u32 128, %s380
        %p382 = scmp.lt.s32.totalorder %s377, 192
        %s383 = scalar_select %p382, %s377, 192
        %s384 = smul.addr %s383, 8
        %s385 = scalar_lea.vmem %s1, %s384
        %s386 = smul.u32 128, %s20
        %s387 = ssub.s32 193, %s386
        %p388 = scmp.lt.s32.totalorder %s387, 128
        %s389 = scalar_select %p388, %s387, 128
        %s390 = smul.u32 128, %s389
        %s391 = smul.u32 128, %s20
        %s392 = ssub.s32 193, %s391
        %p393 = scmp.lt.s32.totalorder %s392, 128
        %s394 = scalar_select %p393, %s392, 128
        %s395 = smul.u32 128, %s394
        %v396 = vld [vmem:[%s371] sm:$0xff]
        %v397 = vld [vmem:[%s371 + $0x8] sm:$0xff]
        %v398 = vld [vmem:[%s371 + $0x10] sm:$0xff]
        %v399 = vld [vmem:[%s371 + $0x18] sm:$0xff]
        %v400 = vld [vmem:[%s371 + $0x20] sm:$0xff]
        %v401 = vld [vmem:[%s371 + $0x28] sm:$0xff]
        %v402 = vld [vmem:[%s371 + $0x30] sm:$0xff]
        %v403 = vld [vmem:[%s371 + $0x38] sm:$0xff]
        %v404 = vld [vmem:[%s371 + $0x40] sm:$0xff]
        %v405 = vld [vmem:[%s371 + $0x48] sm:$0xff]
        %v406 = vld [vmem:[%s371 + $0x50] sm:$0xff]
        %v407 = vld [vmem:[%s371 + $0x58] sm:$0xff]
        %v408 = vld [vmem:[%s371 + $0x60] sm:$0xff]
        %v409 = vld [vmem:[%s371 + $0x68] sm:$0xff]
        %v410 = vld [vmem:[%s371 + $0x70] sm:$0xff]
        %v411 = vld [vmem:[%s371 + $0x78] sm:$0xff]
        %v412 = vld [vmem:[%s371 + $0x80] sm:$0xff]
        %v413 = vld [vmem:[%s371 + $0x88] sm:$0xff]
        %v414 = vld [vmem:[%s371 + $0x90] sm:$0xff]
        %v415 = vld [vmem:[%s371 + $0x98] sm:$0xff]
        %v416 = vld [vmem:[%s371 + $0xa0] sm:$0xff]
        %v417 = vld [vmem:[%s371 + $0xa8] sm:$0xff]
        %v418 = vld [vmem:[%s371 + $0xb0] sm:$0xff]
        %v419 = vld [vmem:[%s371 + $0xb8] sm:$0xff]
        %v420 = vld [vmem:[%s371 + $0xc0] sm:$0xff]
        %v421 = vld [vmem:[%s371 + $0xc8] sm:$0xff]
        %v422 = vld [vmem:[%s371 + $0xd0] sm:$0xff]
        %v423 = vld [vmem:[%s371 + $0xd8] sm:$0xff]
        %v424 = vld [vmem:[%s371 + $0xe0] sm:$0xff]
        %v425 = vld [vmem:[%s371 + $0xe8] sm:$0xff]
        %v426 = vld [vmem:[%s371 + $0xf0] sm:$0xff]
        %v427 = vld [vmem:[%s371 + $0xf8] sm:$0xff]
        %v428 = vld [vmem:[%s371 + $0x100] sm:$0xff]
        %v429 = vld [vmem:[%s371 + $0x108] sm:$0xff]
        %v430 = vld [vmem:[%s371 + $0x110] sm:$0xff]
        %v431 = vld [vmem:[%s371 + $0x118] sm:$0xff]
        %v432 = vld [vmem:[%s371 + $0x120] sm:$0xff]
        %v433 = vld [vmem:[%s371 + $0x128] sm:$0xff]
        %v434 = vld [vmem:[%s371 + $0x130] sm:$0xff]
        %v435 = vld [vmem:[%s371 + $0x138] sm:$0xff]
        %v436 = vld [vmem:[%s371 + $0x140] sm:$0xff]
        %v437 = vld [vmem:[%s371 + $0x148] sm:$0xff]
        %v438 = vld [vmem:[%s371 + $0x150] sm:$0xff]
        %v439 = vld [vmem:[%s371 + $0x158] sm:$0xff]
        %v440 = vld [vmem:[%s371 + $0x160] sm:$0xff]
        %v441 = vld [vmem:[%s371 + $0x168] sm:$0xff]
        %v442 = vld [vmem:[%s371 + $0x170] sm:$0xff]
        %v443 = vld [vmem:[%s371 + $0x178] sm:$0xff]
        %v444 = vld [vmem:[%s371 + $0x180] sm:$0xff]
        %v445 = vld [vmem:[%s371 + $0x188] sm:$0xff]
        %v446 = vld [vmem:[%s371 + $0x190] sm:$0xff]
        %v447 = vld [vmem:[%s371 + $0x198] sm:$0xff]
        %v448 = vld [vmem:[%s371 + $0x1a0] sm:$0xff]
        %v449 = vld [vmem:[%s371 + $0x1a8] sm:$0xff]
        %v450 = vld [vmem:[%s371 + $0x1b0] sm:$0xff]
        %v451 = vld [vmem:[%s371 + $0x1b8] sm:$0xff]
        %v452 = vld [vmem:[%s371 + $0x1c0] sm:$0xff]
        %v453 = vld [vmem:[%s371 + $0x1c8] sm:$0xff]
        %v454 = vld [vmem:[%s371 + $0x1d0] sm:$0xff]
        %v455 = vld [vmem:[%s371 + $0x1d8] sm:$0xff]
        %v456 = vld [vmem:[%s371 + $0x1e0] sm:$0xff]
        %v457 = vld [vmem:[%s371 + $0x1e8] sm:$0xff]
        %v458 = vld [vmem:[%s371 + $0x1f0] sm:$0xff]
        %v459 = vld [vmem:[%s371 + $0x1f8] sm:$0xff]
        %v460 = vld [vmem:[%s371 + $0x200] sm:$0xff]
        %v461 = vld [vmem:[%s371 + $0x208] sm:$0xff]
        %v462 = vld [vmem:[%s371 + $0x210] sm:$0xff]
        %v463 = vld [vmem:[%s371 + $0x218] sm:$0xff]
        %v464 = vld [vmem:[%s371 + $0x220] sm:$0xff]
        %v465 = vld [vmem:[%s371 + $0x228] sm:$0xff]
        %v466 = vld [vmem:[%s371 + $0x230] sm:$0xff]
        %v467 = vld [vmem:[%s371 + $0x238] sm:$0xff]
        %v468 = vld [vmem:[%s371 + $0x240] sm:$0xff]
        %v469 = vld [vmem:[%s371 + $0x248] sm:$0xff]
        %v470 = vld [vmem:[%s371 + $0x250] sm:$0xff]
        %v471 = vld [vmem:[%s371 + $0x258] sm:$0xff]
        %v472 = vld [vmem:[%s371 + $0x260] sm:$0xff]
        %v473 = vld [vmem:[%s371 + $0x268] sm:$0xff]
        %v474 = vld [vmem:[%s371 + $0x270] sm:$0xff]
        %v475 = vld [vmem:[%s371 + $0x278] sm:$0xff]
        %v476 = vld [vmem:[%s371 + $0x280] sm:$0xff]
        %v477 = vld [vmem:[%s371 + $0x288] sm:$0xff]
        %v478 = vld [vmem:[%s371 + $0x290] sm:$0xff]
        %v479 = vld [vmem:[%s371 + $0x298] sm:$0xff]
        %v480 = vld [vmem:[%s371 + $0x2a0] sm:$0xff]
        %v481 = vld [vmem:[%s371 + $0x2a8] sm:$0xff]
        %v482 = vld [vmem:[%s371 + $0x2b0] sm:$0xff]
        %v483 = vld [vmem:[%s371 + $0x2b8] sm:$0xff]
        %v484 = vld [vmem:[%s371 + $0x2c0] sm:$0xff]
        %v485 = vld [vmem:[%s371 + $0x2c8] sm:$0xff]
        %v486 = vld [vmem:[%s371 + $0x2d0] sm:$0xff]
        %v487 = vld [vmem:[%s371 + $0x2d8] sm:$0xff]
        %v488 = vld [vmem:[%s371 + $0x2e0] sm:$0xff]
        %v489 = vld [vmem:[%s371 + $0x2e8] sm:$0xff]
        %v490 = vld [vmem:[%s371 + $0x2f0] sm:$0xff]
        %v491 = vld [vmem:[%s371 + $0x2f8] sm:$0xff]
        %v492 = vld [vmem:[%s371 + $0x300] sm:$0xff]
        %v493 = vld [vmem:[%s371 + $0x308] sm:$0xff]
        %v494 = vld [vmem:[%s371 + $0x310] sm:$0xff]
        %v495 = vld [vmem:[%s371 + $0x318] sm:$0xff]
        %v496 = vld [vmem:[%s371 + $0x320] sm:$0xff]
        %v497 = vld [vmem:[%s371 + $0x328] sm:$0xff]
        %v498 = vld [vmem:[%s371 + $0x330] sm:$0xff]
        %v499 = vld [vmem:[%s371 + $0x338] sm:$0xff]
        %v500 = vld [vmem:[%s371 + $0x340] sm:$0xff]
        %v501 = vld [vmem:[%s371 + $0x348] sm:$0xff]
        %v502 = vld [vmem:[%s371 + $0x350] sm:$0xff]
        %v503 = vld [vmem:[%s371 + $0x358] sm:$0xff]
        %v504 = vld [vmem:[%s371 + $0x360] sm:$0xff]
        %v505 = vld [vmem:[%s371 + $0x368] sm:$0xff]
        %v506 = vld [vmem:[%s371 + $0x370] sm:$0xff]
        %v507 = vld [vmem:[%s371 + $0x378] sm:$0xff]
        %v508 = vld [vmem:[%s371 + $0x380] sm:$0xff]
        %v509 = vld [vmem:[%s371 + $0x388] sm:$0xff]
        %v510 = vld [vmem:[%s371 + $0x390] sm:$0xff]
        %v511 = vld [vmem:[%s371 + $0x398] sm:$0xff]
        %v512 = vld [vmem:[%s371 + $0x3a0] sm:$0xff]
        %v513 = vld [vmem:[%s371 + $0x3a8] sm:$0xff]
        %v514 = vld [vmem:[%s371 + $0x3b0] sm:$0xff]
        %v515 = vld [vmem:[%s371 + $0x3b8] sm:$0xff]
        %v516 = vld [vmem:[%s371 + $0x3c0] sm:$0xff]
        %v517 = vld [vmem:[%s371 + $0x3c8] sm:$0xff]
        %v518 = vld [vmem:[%s371 + $0x3d0] sm:$0xff]
        %v519 = vld [vmem:[%s371 + $0x3d8] sm:$0xff]
        %v520 = vld [vmem:[%s371 + $0x3e0] sm:$0xff]
        %v521 = vld [vmem:[%s371 + $0x3e8] sm:$0xff]
        %v522 = vld [vmem:[%s371 + $0x3f0] sm:$0xff]
        %v523 = vld [vmem:[%s371 + $0x3f8] sm:$0xff]
        %v524 = vld [vmem:[%s2] sm:$0x3f]
        %v525 = vld [vmem:[%s385] sm:$0xff]
        %v526 = vld [vmem:[%s385 + $0x8] sm:$0xff]
        %v527 = vld [vmem:[%s385 + $0x10] sm:$0xff]
        %v528 = vld [vmem:[%s385 + $0x18] sm:$0xff]
        %v529 = vld [vmem:[%s385 + $0x20] sm:$0xff]
        %v530 = vld [vmem:[%s385 + $0x28] sm:$0xff]
        %v531 = vld [vmem:[%s385 + $0x30] sm:$0xff]
        %v532 = vld [vmem:[%s385 + $0x38] sm:$0xff]
        %v533 = vld [vmem:[%s385 + $0x40] sm:$0xff]
        %v534 = vld [vmem:[%s385 + $0x48] sm:$0xff]
        %v535 = vld [vmem:[%s385 + $0x50] sm:$0xff]
        %v536 = vld [vmem:[%s385 + $0x58] sm:$0xff]
        %v537 = vld [vmem:[%s385 + $0x60] sm:$0xff]
        %v538 = vld [vmem:[%s385 + $0x68] sm:$0xff]
        %v539 = vld [vmem:[%s385 + $0x70] sm:$0xff]
        %v540 = vld [vmem:[%s385 + $0x78] sm:$0xff]
        %v541 = vld [vmem:[%s385 + $0x80] sm:$0xff]
        %v542 = vld [vmem:[%s385 + $0x88] sm:$0xff]
        %v543 = vld [vmem:[%s385 + $0x90] sm:$0xff]
        %v544 = vld [vmem:[%s385 + $0x98] sm:$0xff]
        %v545 = vld [vmem:[%s385 + $0xa0] sm:$0xff]
        %v546 = vld [vmem:[%s385 + $0xa8] sm:$0xff]
        %v547 = vld [vmem:[%s385 + $0xb0] sm:$0xff]
        %v548 = vld [vmem:[%s385 + $0xb8] sm:$0xff]
        %v549 = vld [vmem:[%s385 + $0xc0] sm:$0xff]
        %v550 = vld [vmem:[%s385 + $0xc8] sm:$0xff]
        %v551 = vld [vmem:[%s385 + $0xd0] sm:$0xff]
        %v552 = vld [vmem:[%s385 + $0xd8] sm:$0xff]
        %v553 = vld [vmem:[%s385 + $0xe0] sm:$0xff]
        %v554 = vld [vmem:[%s385 + $0xe8] sm:$0xff]
        %v555 = vld [vmem:[%s385 + $0xf0] sm:$0xff]
        %v556 = vld [vmem:[%s385 + $0xf8] sm:$0xff]
        %v557 = vld [vmem:[%s385 + $0x100] sm:$0xff]
        %v558 = vld [vmem:[%s385 + $0x108] sm:$0xff]
        %v559 = vld [vmem:[%s385 + $0x110] sm:$0xff]
        %v560 = vld [vmem:[%s385 + $0x118] sm:$0xff]
        %v561 = vld [vmem:[%s385 + $0x120] sm:$0xff]
        %v562 = vld [vmem:[%s385 + $0x128] sm:$0xff]
        %v563 = vld [vmem:[%s385 + $0x130] sm:$0xff]
        %v564 = vld [vmem:[%s385 + $0x138] sm:$0xff]
        %v565 = vld [vmem:[%s385 + $0x140] sm:$0xff]
        %v566 = vld [vmem:[%s385 + $0x148] sm:$0xff]
        %v567 = vld [vmem:[%s385 + $0x150] sm:$0xff]
        %v568 = vld [vmem:[%s385 + $0x158] sm:$0xff]
        %v569 = vld [vmem:[%s385 + $0x160] sm:$0xff]
        %v570 = vld [vmem:[%s385 + $0x168] sm:$0xff]
        %v571 = vld [vmem:[%s385 + $0x170] sm:$0xff]
        %v572 = vld [vmem:[%s385 + $0x178] sm:$0xff]
        %v573 = vld [vmem:[%s385 + $0x180] sm:$0xff]
        %v574 = vld [vmem:[%s385 + $0x188] sm:$0xff]
        %v575 = vld [vmem:[%s385 + $0x190] sm:$0xff]
        %v576 = vld [vmem:[%s385 + $0x198] sm:$0xff]
        %v577 = vld [vmem:[%s385 + $0x1a0] sm:$0xff]
        %v578 = vld [vmem:[%s385 + $0x1a8] sm:$0xff]
        %v579 = vld [vmem:[%s385 + $0x1b0] sm:$0xff]
        %v580 = vld [vmem:[%s385 + $0x1b8] sm:$0xff]
        %v581 = vld [vmem:[%s385 + $0x1c0] sm:$0xff]
        %v582 = vld [vmem:[%s385 + $0x1c8] sm:$0xff]
        %v583 = vld [vmem:[%s385 + $0x1d0] sm:$0xff]
        %v584 = vld [vmem:[%s385 + $0x1d8] sm:$0xff]
        %v585 = vld [vmem:[%s385 + $0x1e0] sm:$0xff]
        %v586 = vld [vmem:[%s385 + $0x1e8] sm:$0xff]
        %v587 = vld [vmem:[%s385 + $0x1f0] sm:$0xff]
        %v588 = vld [vmem:[%s385 + $0x1f8] sm:$0xff]
        %v589 = vld [vmem:[%s385 + $0x200] sm:$0xff]
        %v590 = vld [vmem:[%s385 + $0x208] sm:$0xff]
        %v591 = vld [vmem:[%s385 + $0x210] sm:$0xff]
        %v592 = vld [vmem:[%s385 + $0x218] sm:$0xff]
        %v593 = vld [vmem:[%s385 + $0x220] sm:$0xff]
        %v594 = vld [vmem:[%s385 + $0x228] sm:$0xff]
        %v595 = vld [vmem:[%s385 + $0x230] sm:$0xff]
        %v596 = vld [vmem:[%s385 + $0x238] sm:$0xff]
        %v597 = vld [vmem:[%s385 + $0x240] sm:$0xff]
        %v598 = vld [vmem:[%s385 + $0x248] sm:$0xff]
        %v599 = vld [vmem:[%s385 + $0x250] sm:$0xff]
        %v600 = vld [vmem:[%s385 + $0x258] sm:$0xff]
        %v601 = vld [vmem:[%s385 + $0x260] sm:$0xff]
        %v602 = vld [vmem:[%s385 + $0x268] sm:$0xff]
        %v603 = vld [vmem:[%s385 + $0x270] sm:$0xff]
        %v604 = vld [vmem:[%s385 + $0x278] sm:$0xff]
        %v605 = vld [vmem:[%s385 + $0x280] sm:$0xff]
        %v606 = vld [vmem:[%s385 + $0x288] sm:$0xff]
        %v607 = vld [vmem:[%s385 + $0x290] sm:$0xff]
        %v608 = vld [vmem:[%s385 + $0x298] sm:$0xff]
        %v609 = vld [vmem:[%s385 + $0x2a0] sm:$0xff]
        %v610 = vld [vmem:[%s385 + $0x2a8] sm:$0xff]
        %v611 = vld [vmem:[%s385 + $0x2b0] sm:$0xff]
        %v612 = vld [vmem:[%s385 + $0x2b8] sm:$0xff]
        %v613 = vld [vmem:[%s385 + $0x2c0] sm:$0xff]
        %v614 = vld [vmem:[%s385 + $0x2c8] sm:$0xff]
        %v615 = vld [vmem:[%s385 + $0x2d0] sm:$0xff]
        %v616 = vld [vmem:[%s385 + $0x2d8] sm:$0xff]
        %v617 = vld [vmem:[%s385 + $0x2e0] sm:$0xff]
        %v618 = vld [vmem:[%s385 + $0x2e8] sm:$0xff]
        %v619 = vld [vmem:[%s385 + $0x2f0] sm:$0xff]
        %v620 = vld [vmem:[%s385 + $0x2f8] sm:$0xff]
        %v621 = vld [vmem:[%s385 + $0x300] sm:$0xff]
        %v622 = vld [vmem:[%s385 + $0x308] sm:$0xff]
        %v623 = vld [vmem:[%s385 + $0x310] sm:$0xff]
        %v624 = vld [vmem:[%s385 + $0x318] sm:$0xff]
        %v625 = vld [vmem:[%s385 + $0x320] sm:$0xff]
        %v626 = vld [vmem:[%s385 + $0x328] sm:$0xff]
        %v627 = vld [vmem:[%s385 + $0x330] sm:$0xff]
        %v628 = vld [vmem:[%s385 + $0x338] sm:$0xff]
        %v629 = vld [vmem:[%s385 + $0x340] sm:$0xff]
        %v630 = vld [vmem:[%s385 + $0x348] sm:$0xff]
        %v631 = vld [vmem:[%s385 + $0x350] sm:$0xff]
        %v632 = vld [vmem:[%s385 + $0x358] sm:$0xff]
        %v633 = vld [vmem:[%s385 + $0x360] sm:$0xff]
        %v634 = vld [vmem:[%s385 + $0x368] sm:$0xff]
        %v635 = vld [vmem:[%s385 + $0x370] sm:$0xff]
        %v636 = vld [vmem:[%s385 + $0x378] sm:$0xff]
        %v637 = vld [vmem:[%s385 + $0x380] sm:$0xff]
        %v638 = vld [vmem:[%s385 + $0x388] sm:$0xff]
        %v639 = vld [vmem:[%s385 + $0x390] sm:$0xff]
        %v640 = vld [vmem:[%s385 + $0x398] sm:$0xff]
        %v641 = vld [vmem:[%s385 + $0x3a0] sm:$0xff]
        %v642 = vld [vmem:[%s385 + $0x3a8] sm:$0xff]
        %v643 = vld [vmem:[%s385 + $0x3b0] sm:$0xff]
        %v644 = vld [vmem:[%s385 + $0x3b8] sm:$0xff]
        %v645 = vld [vmem:[%s385 + $0x3c0] sm:$0xff]
        %v646 = vld [vmem:[%s385 + $0x3c8] sm:$0xff]
        %v647 = vld [vmem:[%s385 + $0x3d0] sm:$0xff]
        %v648 = vld [vmem:[%s385 + $0x3d8] sm:$0xff]
        %v649 = vld [vmem:[%s385 + $0x3e0] sm:$0xff]
        %v650 = vld [vmem:[%s385 + $0x3e8] sm:$0xff]
        %v651 = vld [vmem:[%s385 + $0x3f0] sm:$0xff]
        %v652 = vld [vmem:[%s385 + $0x3f8] sm:$0xff]
        %v653 = vld [vmem:[%s3] sm:$0x3]
        %vm654 = vcmask 15360
        %v656 = vsel %vm654, %v525, 0
        %v659 = vsel %vm654, %v526, 0
        %v662 = vsel %vm654, %v527, 0
        %v665 = vsel %vm654, %v528, 0
        %v668 = vsel %vm654, %v529, 0
        %v671 = vsel %vm654, %v530, 0
        %v674 = vsel %vm654, %v531, 0
        %v677 = vsel %vm654, %v532, 0
        %v680 = vsel %vm654, %v533, 0
        %v683 = vsel %vm654, %v534, 0
        %v686 = vsel %vm654, %v535, 0
        %v689 = vsel %vm654, %v536, 0
        %v692 = vsel %vm654, %v537, 0
        %v695 = vsel %vm654, %v538, 0
        %v698 = vsel %vm654, %v539, 0
        %v701 = vsel %vm654, %v540, 0
        %v704 = vsel %vm654, %v541, 0
        %v707 = vsel %vm654, %v542, 0
        %v710 = vsel %vm654, %v543, 0
        %v713 = vsel %vm654, %v544, 0
        %v716 = vsel %vm654, %v545, 0
        %v719 = vsel %vm654, %v546, 0
        %v722 = vsel %vm654, %v547, 0
        %v725 = vsel %vm654, %v548, 0
        %v728 = vsel %vm654, %v549, 0
        %v731 = vsel %vm654, %v550, 0
        %v734 = vsel %vm654, %v551, 0
        %v737 = vsel %vm654, %v552, 0
        %v740 = vsel %vm654, %v553, 0
        %v743 = vsel %vm654, %v554, 0
        %v746 = vsel %vm654, %v555, 0
        %v749 = vsel %vm654, %v556, 0
        %v752 = vsel %vm654, %v557, 0
        %v755 = vsel %vm654, %v558, 0
        %v758 = vsel %vm654, %v559, 0
        %v761 = vsel %vm654, %v560, 0
        %v764 = vsel %vm654, %v561, 0
        %v767 = vsel %vm654, %v562, 0
        %v770 = vsel %vm654, %v563, 0
        %v773 = vsel %vm654, %v564, 0
        %v776 = vsel %vm654, %v565, 0
        %v779 = vsel %vm654, %v566, 0
        %v782 = vsel %vm654, %v567, 0
        %v785 = vsel %vm654, %v568, 0
        %v788 = vsel %vm654, %v569, 0
        %v791 = vsel %vm654, %v570, 0
        %v794 = vsel %vm654, %v571, 0
        %v797 = vsel %vm654, %v572, 0
        %v800 = vsel %vm654, %v573, 0
        %v803 = vsel %vm654, %v574, 0
        %v806 = vsel %vm654, %v575, 0
        %v809 = vsel %vm654, %v576, 0
        %v812 = vsel %vm654, %v577, 0
        %v815 = vsel %vm654, %v578, 0
        %v818 = vsel %vm654, %v579, 0
        %v821 = vsel %vm654, %v580, 0
        %v824 = vsel %vm654, %v581, 0
        %v827 = vsel %vm654, %v582, 0
        %v830 = vsel %vm654, %v583, 0
        %v833 = vsel %vm654, %v584, 0
        %v836 = vsel %vm654, %v585, 0
        %v839 = vsel %vm654, %v586, 0
        %v842 = vsel %vm654, %v587, 0
        %v845 = vsel %vm654, %v588, 0
        %v848 = vsel %vm654, %v589, 0
        %v851 = vsel %vm654, %v590, 0
        %v854 = vsel %vm654, %v591, 0
        %v857 = vsel %vm654, %v592, 0
        %v860 = vsel %vm654, %v593, 0
        %v863 = vsel %vm654, %v594, 0
        %v866 = vsel %vm654, %v595, 0
        %v869 = vsel %vm654, %v596, 0
        %v872 = vsel %vm654, %v597, 0
        %v875 = vsel %vm654, %v598, 0
        %v878 = vsel %vm654, %v599, 0
        %v881 = vsel %vm654, %v600, 0
        %v884 = vsel %vm654, %v601, 0
        %v887 = vsel %vm654, %v602, 0
        %v890 = vsel %vm654, %v603, 0
        %v893 = vsel %vm654, %v604, 0
        %v896 = vsel %vm654, %v605, 0
        %v899 = vsel %vm654, %v606, 0
        %v902 = vsel %vm654, %v607, 0
        %v905 = vsel %vm654, %v608, 0
        %v908 = vsel %vm654, %v609, 0
        %v911 = vsel %vm654, %v610, 0
        %v914 = vsel %vm654, %v611, 0
        %v917 = vsel %vm654, %v612, 0
        %v920 = vsel %vm654, %v613, 0
        %v923 = vsel %vm654, %v614, 0
        %v926 = vsel %vm654, %v615, 0
        %v929 = vsel %vm654, %v616, 0
        %v932 = vsel %vm654, %v617, 0
        %v935 = vsel %vm654, %v618, 0
        %v938 = vsel %vm654, %v619, 0
        %v941 = vsel %vm654, %v620, 0
        %v944 = vsel %vm654, %v621, 0
        %v947 = vsel %vm654, %v622, 0
        %v950 = vsel %vm654, %v623, 0
        %v953 = vsel %vm654, %v624, 0
        %v956 = vsel %vm654, %v625, 0
        %v959 = vsel %vm654, %v626, 0
        %v962 = vsel %vm654, %v627, 0
        %v965 = vsel %vm654, %v628, 0
        %v968 = vsel %vm654, %v629, 0
        %v971 = vsel %vm654, %v630, 0
        %v974 = vsel %vm654, %v631, 0
        %v977 = vsel %vm654, %v632, 0
        %v980 = vsel %vm654, %v633, 0
        %v983 = vsel %vm654, %v634, 0
        %v986 = vsel %vm654, %v635, 0
        %v989 = vsel %vm654, %v636, 0
        %v992 = vsel %vm654, %v637, 0
        %v995 = vsel %vm654, %v638, 0
        %v998 = vsel %vm654, %v639, 0
        %v1001 = vsel %vm654, %v640, 0
        %v1004 = vsel %vm654, %v641, 0
        %v1007 = vsel %vm654, %v642, 0
        %v1010 = vsel %vm654, %v643, 0
        %v1013 = vsel %vm654, %v644, 0
        %v1016 = vsel %vm654, %v645, 0
        %v1019 = vsel %vm654, %v646, 0
        %v1022 = vsel %vm654, %v647, 0
        %v1025 = vsel %vm654, %v648, 0
        %v1028 = vsel %vm654, %v649, 0
        %v1031 = vsel %vm654, %v650, 0
        %v1034 = vsel %vm654, %v651, 0
        %v1037 = vsel %vm654, %v652, 0
        %vm1039 = vcmask 1041408
        %v1041 = vsel %vm1039, %v653, 0
        %1043 = vmatprep.subr.mxu0 0.0
        %1044 = vmatpush1.msra.mxu0 0.0
        %1045 = vmatprep.subr.mxu0 0.0
        %1046 = vmatpush1.msra.mxu0 0.0
        %1047 = vmatprep.subr.mxu0 0.0
        %1048 = vmatpush1.msra.mxu0 0.0
        %1049 = vmatprep.subr.mxu0 0.0
        %1050 = vmatpush1.msra.mxu0 0.0
        %1051 = vmatprep.subr.mxu0 0.0
        %1052 = vmatpush1.msra.mxu0 0.0
        %1053 = vmatprep.subr.mxu0 0.0
        %1054 = vmatpush1.msra.mxu0 0.0
        %1055 = vmatprep.subr.mxu0 0.0
        %1056 = vmatpush1.msra.mxu0 0.0
        %1057 = vmatprep.subr.mxu0 0.0
        %1058 = vmatpush1.msra.mxu0 0.0
        %1059 = vmatprep.subr.mxu0 0.0
        %1060 = vmatpush1.msra.mxu0 0.0
        %1061 = vmatprep.subr.mxu0 0.0
        %1062 = vmatpush1.msra.mxu0 0.0
        %1063 = vmatprep.subr.mxu0 0.0
        %1064 = vmatpush1.msra.mxu0 0.0
        %1065 = vmatprep.subr.mxu0 0.0
        %1066 = vmatpush1.msra.mxu0 0.0
        %1067 = vmatprep.subr.mxu0 0.0
        %1068 = vmatpush1.msra.mxu0 0.0
        %1069 = vmatprep.subr.mxu0 0.0
        %1070 = vmatpush1.msra.mxu0 0.0
        %1071 = vmatprep.subr.mxu0 0.0
        %1072 = vmatpush1.msra.mxu0 0.0
        %1073 = vmatprep.subr.mxu0 0.0
        %1074 = vmatpush1.msra.mxu0 %v1041
        %1075 = vmatprep.subr.mxu0 0.0
        %1076 = vmatpush2.msra.mxu0 0.0
        %1077 = vmatprep.subr.mxu0 0.0
        %1078 = vmatpush2.msra.mxu0 0.0
        %1079 = vmatprep.subr.mxu0 0.0
        %1080 = vmatpush2.msra.mxu0 0.0
        %1081 = vmatprep.subr.mxu0 0.0
        %1082 = vmatpush2.msra.mxu0 0.0
        %1083 = vmatprep.subr.mxu0 0.0
        %1084 = vmatpush2.msra.mxu0 0.0
        %1085 = vmatprep.subr.mxu0 0.0
        %1086 = vmatpush2.msra.mxu0 0.0
        %1087 = vmatprep.subr.mxu0 0.0
        %1088 = vmatpush2.msra.mxu0 0.0
        %1089 = vmatprep.subr.mxu0 0.0
        %1090 = vmatpush2.msra.mxu0 0.0
        %1091 = vmatprep.subr.mxu0 0.0
        %1092 = vmatpush2.msra.mxu0 0.0
        %1093 = vmatprep.subr.mxu0 0.0
        %1094 = vmatpush2.msra.mxu0 0.0
        %1095 = vmatprep.subr.mxu0 0.0
        %1096 = vmatpush2.msra.mxu0 0.0
        %1097 = vmatprep.subr.mxu0 0.0
        %1098 = vmatpush2.msra.mxu0 0.0
        %1099 = vmatprep.subr.mxu0 0.0
        %1100 = vmatpush2.msra.mxu0 0.0
        %1101 = vmatprep.subr.mxu0 0.0
        %1102 = vmatpush2.msra.mxu0 0.0
        %1103 = vmatprep.subr.mxu0 0.0
        %1104 = vmatpush2.msra.mxu0 0.0
        %1105 = vmatprep.subr.mxu0 0.0
        %1106 = vmatpush2.msra.mxu0 0.0
        %1107 = vmatprep.mubr.f32.mxu0 0.0
        %1108 = vmatmul.mubr.f32.gmra.mxu0 %v656
        %v1109 = vpop.f32.mrf.mxu0
        %v1110 = vadd.f32 0.0, %v1109
        %v1111 = vpop.f32.mrf.mxu0
        %1112 = vmatprep.mubr.f32.mxu0 0.0
        %1113 = vmatmul.mubr.f32.gmra.mxu0 %v659
        %v1114 = vpop.f32.mrf.mxu0
        %v1115 = vadd.f32 0.0, %v1114
        %v1116 = vpop.f32.mrf.mxu0
        %1117 = vmatprep.mubr.f32.mxu0 0.0
        %1118 = vmatmul.mubr.f32.gmra.mxu0 %v662
        %v1119 = vpop.f32.mrf.mxu0
        %v1120 = vadd.f32 0.0, %v1119
        %v1121 = vpop.f32.mrf.mxu0
        %1122 = vmatprep.mubr.f32.mxu0 0.0
        %1123 = vmatmul.mubr.f32.gmra.mxu0 %v665
        %v1124 = vpop.f32.mrf.mxu0
        %v1125 = vadd.f32 0.0, %v1124
        %v1126 = vpop.f32.mrf.mxu0
        %1127 = vmatprep.mubr.f32.mxu0 0.0
        %1128 = vmatmul.mubr.f32.gmra.mxu0 %v668
        %v1129 = vpop.f32.mrf.mxu0
        %v1130 = vadd.f32 0.0, %v1129
        %v1131 = vpop.f32.mrf.mxu0
        %1132 = vmatprep.mubr.f32.mxu0 0.0
        %1133 = vmatmul.mubr.f32.gmra.mxu0 %v671
        %v1134 = vpop.f32.mrf.mxu0
        %v1135 = vadd.f32 0.0, %v1134
        %v1136 = vpop.f32.mrf.mxu0
        %1137 = vmatprep.mubr.f32.mxu0 0.0
        %1138 = vmatmul.mubr.f32.gmra.mxu0 %v674
        %v1139 = vpop.f32.mrf.mxu0
        %v1140 = vadd.f32 0.0, %v1139
        %v1141 = vpop.f32.mrf.mxu0
        %1142 = vmatprep.mubr.f32.mxu0 0.0
        %1143 = vmatmul.mubr.f32.gmra.mxu0 %v677
        %v1144 = vpop.f32.mrf.mxu0
        %v1145 = vadd.f32 0.0, %v1144
        %v1146 = vpop.f32.mrf.mxu0
        %1147 = vmatprep.mubr.f32.mxu0 0.0
        %1148 = vmatmul.mubr.f32.gmra.mxu0 %v680
        %v1149 = vpop.f32.mrf.mxu0
        %v1150 = vadd.f32 0.0, %v1149
        %v1151 = vpop.f32.mrf.mxu0
        %1152 = vmatprep.mubr.f32.mxu0 0.0
        %1153 = vmatmul.mubr.f32.gmra.mxu0 %v683
        %v1154 = vpop.f32.mrf.mxu0
        %v1155 = vadd.f32 0.0, %v1154
        %v1156 = vpop.f32.mrf.mxu0
        %1157 = vmatprep.mubr.f32.mxu0 0.0
        %1158 = vmatmul.mubr.f32.gmra.mxu0 %v686
        %v1159 = vpop.f32.mrf.mxu0
        %v1160 = vadd.f32 0.0, %v1159
        %v1161 = vpop.f32.mrf.mxu0
        %1162 = vmatprep.mubr.f32.mxu0 0.0
        %1163 = vmatmul.mubr.f32.gmra.mxu0 %v689
        %v1164 = vpop.f32.mrf.mxu0
        %v1165 = vadd.f32 0.0, %v1164
        %v1166 = vpop.f32.mrf.mxu0
        %1167 = vmatprep.mubr.f32.mxu0 0.0
        %1168 = vmatmul.mubr.f32.gmra.mxu0 %v692
        %v1169 = vpop.f32.mrf.mxu0
        %v1170 = vadd.f32 0.0, %v1169
        %v1171 = vpop.f32.mrf.mxu0
        %1172 = vmatprep.mubr.f32.mxu0 0.0
        %1173 = vmatmul.mubr.f32.gmra.mxu0 %v695
        %v1174 = vpop.f32.mrf.mxu0
        %v1175 = vadd.f32 0.0, %v1174
        %v1176 = vpop.f32.mrf.mxu0
        %1177 = vmatprep.mubr.f32.mxu0 0.0
        %1178 = vmatmul.mubr.f32.gmra.mxu0 %v698
        %v1179 = vpop.f32.mrf.mxu0
        %v1180 = vadd.f32 0.0, %v1179
        %v1181 = vpop.f32.mrf.mxu0
        %1182 = vmatprep.mubr.f32.mxu0 0.0
        %1183 = vmatmul.mubr.f32.gmra.mxu0 %v701
        %v1184 = vpop.f32.mrf.mxu0
        %v1185 = vadd.f32 0.0, %v1184
        %v1186 = vpop.f32.mrf.mxu0
        %1187 = vmatprep.mubr.f32.mxu0 0.0
        %1188 = vmatmul.mubr.f32.gmra.mxu0 %v704
        %v1189 = vpop.f32.mrf.mxu0
        %v1190 = vadd.f32 0.0, %v1189
        %v1191 = vpop.f32.mrf.mxu0
        %1192 = vmatprep.mubr.f32.mxu0 0.0
        %1193 = vmatmul.mubr.f32.gmra.mxu0 %v707
        %v1194 = vpop.f32.mrf.mxu0
        %v1195 = vadd.f32 0.0, %v1194
        %v1196 = vpop.f32.mrf.mxu0
        %1197 = vmatprep.mubr.f32.mxu0 0.0
        %1198 = vmatmul.mubr.f32.gmra.mxu0 %v710
        %v1199 = vpop.f32.mrf.mxu0
        %v1200 = vadd.f32 0.0, %v1199
        %v1201 = vpop.f32.mrf.mxu0
        %1202 = vmatprep.mubr.f32.mxu0 0.0
        %1203 = vmatmul.mubr.f32.gmra.mxu0 %v713
        %v1204 = vpop.f32.mrf.mxu0
        %v1205 = vadd.f32 0.0, %v1204
        %v1206 = vpop.f32.mrf.mxu0
        %1207 = vmatprep.mubr.f32.mxu0 0.0
        %1208 = vmatmul.mubr.f32.gmra.mxu0 %v716
        %v1209 = vpop.f32.mrf.mxu0
        %v1210 = vadd.f32 0.0, %v1209
        %v1211 = vpop.f32.mrf.mxu0
        %1212 = vmatprep.mubr.f32.mxu0 0.0
        %1213 = vmatmul.mubr.f32.gmra.mxu0 %v719
        %v1214 = vpop.f32.mrf.mxu0
        %v1215 = vadd.f32 0.0, %v1214
        %v1216 = vpop.f32.mrf.mxu0
        %1217 = vmatprep.mubr.f32.mxu0 0.0
        %1218 = vmatmul.mubr.f32.gmra.mxu0 %v722
        %v1219 = vpop.f32.mrf.mxu0
        %v1220 = vadd.f32 0.0, %v1219
        %v1221 = vpop.f32.mrf.mxu0
        %1222 = vmatprep.mubr.f32.mxu0 0.0
        %1223 = vmatmul.mubr.f32.gmra.mxu0 %v725
        %v1224 = vpop.f32.mrf.mxu0
        %v1225 = vadd.f32 0.0, %v1224
        %v1226 = vpop.f32.mrf.mxu0
        %1227 = vmatprep.mubr.f32.mxu0 0.0
        %1228 = vmatmul.mubr.f32.gmra.mxu0 %v728
        %v1229 = vpop.f32.mrf.mxu0
        %v1230 = vadd.f32 0.0, %v1229
        %v1231 = vpop.f32.mrf.mxu0
        %1232 = vmatprep.mubr.f32.mxu0 0.0
        %1233 = vmatmul.mubr.f32.gmra.mxu0 %v731
        %v1234 = vpop.f32.mrf.mxu0
        %v1235 = vadd.f32 0.0, %v1234
        %v1236 = vpop.f32.mrf.mxu0
        %1237 = vmatprep.mubr.f32.mxu0 0.0
        %1238 = vmatmul.mubr.f32.gmra.mxu0 %v734
        %v1239 = vpop.f32.mrf.mxu0
        %v1240 = vadd.f32 0.0, %v1239
        %v1241 = vpop.f32.mrf.mxu0
        %1242 = vmatprep.mubr.f32.mxu0 0.0
        %1243 = vmatmul.mubr.f32.gmra.mxu0 %v737
        %v1244 = vpop.f32.mrf.mxu0
        %v1245 = vadd.f32 0.0, %v1244
        %v1246 = vpop.f32.mrf.mxu0
        %1247 = vmatprep.mubr.f32.mxu0 0.0
        %1248 = vmatmul.mubr.f32.gmra.mxu0 %v740
        %v1249 = vpop.f32.mrf.mxu0
        %v1250 = vadd.f32 0.0, %v1249
        %v1251 = vpop.f32.mrf.mxu0
        %1252 = vmatprep.mubr.f32.mxu0 0.0
        %1253 = vmatmul.mubr.f32.gmra.mxu0 %v743
        %v1254 = vpop.f32.mrf.mxu0
        %v1255 = vadd.f32 0.0, %v1254
        %v1256 = vpop.f32.mrf.mxu0
        %1257 = vmatprep.mubr.f32.mxu0 0.0
        %1258 = vmatmul.mubr.f32.gmra.mxu0 %v746
        %v1259 = vpop.f32.mrf.mxu0
        %v1260 = vadd.f32 0.0, %v1259
        %v1261 = vpop.f32.mrf.mxu0
        %1262 = vmatprep.mubr.f32.mxu0 0.0
        %1263 = vmatmul.mubr.f32.gmra.mxu0 %v749
        %v1264 = vpop.f32.mrf.mxu0
        %v1265 = vadd.f32 0.0, %v1264
        %v1266 = vpop.f32.mrf.mxu0
        %1267 = vmatprep.mubr.f32.mxu0 0.0
        %1268 = vmatmul.mubr.f32.gmra.mxu0 %v752
        %v1269 = vpop.f32.mrf.mxu0
        %v1270 = vadd.f32 0.0, %v1269
        %v1271 = vpop.f32.mrf.mxu0
        %1272 = vmatprep.mubr.f32.mxu0 0.0
        %1273 = vmatmul.mubr.f32.gmra.mxu0 %v755
        %v1274 = vpop.f32.mrf.mxu0
        %v1275 = vadd.f32 0.0, %v1274
        %v1276 = vpop.f32.mrf.mxu0
        %1277 = vmatprep.mubr.f32.mxu0 0.0
        %1278 = vmatmul.mubr.f32.gmra.mxu0 %v758
        %v1279 = vpop.f32.mrf.mxu0
        %v1280 = vadd.f32 0.0, %v1279
        %v1281 = vpop.f32.mrf.mxu0
        %1282 = vmatprep.mubr.f32.mxu0 0.0
        %1283 = vmatmul.mubr.f32.gmra.mxu0 %v761
        %v1284 = vpop.f32.mrf.mxu0
        %v1285 = vadd.f32 0.0, %v1284
        %v1286 = vpop.f32.mrf.mxu0
        %1287 = vmatprep.mubr.f32.mxu0 0.0
        %1288 = vmatmul.mubr.f32.gmra.mxu0 %v764
        %v1289 = vpop.f32.mrf.mxu0
        %v1290 = vadd.f32 0.0, %v1289
        %v1291 = vpop.f32.mrf.mxu0
        %1292 = vmatprep.mubr.f32.mxu0 0.0
        %1293 = vmatmul.mubr.f32.gmra.mxu0 %v767
        %v1294 = vpop.f32.mrf.mxu0
        %v1295 = vadd.f32 0.0, %v1294
        %v1296 = vpop.f32.mrf.mxu0
        %1297 = vmatprep.mubr.f32.mxu0 0.0
        %1298 = vmatmul.mubr.f32.gmra.mxu0 %v770
        %v1299 = vpop.f32.mrf.mxu0
        %v1300 = vadd.f32 0.0, %v1299
        %v1301 = vpop.f32.mrf.mxu0
        %1302 = vmatprep.mubr.f32.mxu0 0.0
        %1303 = vmatmul.mubr.f32.gmra.mxu0 %v773
        %v1304 = vpop.f32.mrf.mxu0
        %v1305 = vadd.f32 0.0, %v1304
        %v1306 = vpop.f32.mrf.mxu0
        %1307 = vmatprep.mubr.f32.mxu0 0.0
        %1308 = vmatmul.mubr.f32.gmra.mxu0 %v776
        %v1309 = vpop.f32.mrf.mxu0
        %v1310 = vadd.f32 0.0, %v1309
        %v1311 = vpop.f32.mrf.mxu0
        %1312 = vmatprep.mubr.f32.mxu0 0.0
        %1313 = vmatmul.mubr.f32.gmra.mxu0 %v779
        %v1314 = vpop.f32.mrf.mxu0
        %v1315 = vadd.f32 0.0, %v1314
        %v1316 = vpop.f32.mrf.mxu0
        %1317 = vmatprep.mubr.f32.mxu0 0.0
        %1318 = vmatmul.mubr.f32.gmra.mxu0 %v782
        %v1319 = vpop.f32.mrf.mxu0
        %v1320 = vadd.f32 0.0, %v1319
        %v1321 = vpop.f32.mrf.mxu0
        %1322 = vmatprep.mubr.f32.mxu0 0.0
        %1323 = vmatmul.mubr.f32.gmra.mxu0 %v785
        %v1324 = vpop.f32.mrf.mxu0
        %v1325 = vadd.f32 0.0, %v1324
        %v1326 = vpop.f32.mrf.mxu0
        %1327 = vmatprep.mubr.f32.mxu0 0.0
        %1328 = vmatmul.mubr.f32.gmra.mxu0 %v788
        %v1329 = vpop.f32.mrf.mxu0
        %v1330 = vadd.f32 0.0, %v1329
        %v1331 = vpop.f32.mrf.mxu0
        %1332 = vmatprep.mubr.f32.mxu0 0.0
        %1333 = vmatmul.mubr.f32.gmra.mxu0 %v791
        %v1334 = vpop.f32.mrf.mxu0
        %v1335 = vadd.f32 0.0, %v1334
        %v1336 = vpop.f32.mrf.mxu0
        %1337 = vmatprep.mubr.f32.mxu0 0.0
        %1338 = vmatmul.mubr.f32.gmra.mxu0 %v794
        %v1339 = vpop.f32.mrf.mxu0
        %v1340 = vadd.f32 0.0, %v1339
        %v1341 = vpop.f32.mrf.mxu0
        %1342 = vmatprep.mubr.f32.mxu0 0.0
        %1343 = vmatmul.mubr.f32.gmra.mxu0 %v797
        %v1344 = vpop.f32.mrf.mxu0
        %v1345 = vadd.f32 0.0, %v1344
        %v1346 = vpop.f32.mrf.mxu0
        %1347 = vmatprep.mubr.f32.mxu0 0.0
        %1348 = vmatmul.mubr.f32.gmra.mxu0 %v800
        %v1349 = vpop.f32.mrf.mxu0
        %v1350 = vadd.f32 0.0, %v1349
        %v1351 = vpop.f32.mrf.mxu0
        %1352 = vmatprep.mubr.f32.mxu0 0.0
        %1353 = vmatmul.mubr.f32.gmra.mxu0 %v803
        %v1354 = vpop.f32.mrf.mxu0
        %v1355 = vadd.f32 0.0, %v1354
        %v1356 = vpop.f32.mrf.mxu0
        %1357 = vmatprep.mubr.f32.mxu0 0.0
        %1358 = vmatmul.mubr.f32.gmra.mxu0 %v806
        %v1359 = vpop.f32.mrf.mxu0
        %v1360 = vadd.f32 0.0, %v1359
        %v1361 = vpop.f32.mrf.mxu0
        %1362 = vmatprep.mubr.f32.mxu0 0.0
        %1363 = vmatmul.mubr.f32.gmra.mxu0 %v809
        %v1364 = vpop.f32.mrf.mxu0
        %v1365 = vadd.f32 0.0, %v1364
        %v1366 = vpop.f32.mrf.mxu0
        %1367 = vmatprep.mubr.f32.mxu0 0.0
        %1368 = vmatmul.mubr.f32.gmra.mxu0 %v812
        %v1369 = vpop.f32.mrf.mxu0
        %v1370 = vadd.f32 0.0, %v1369
        %v1371 = vpop.f32.mrf.mxu0
        %1372 = vmatprep.mubr.f32.mxu0 0.0
        %1373 = vmatmul.mubr.f32.gmra.mxu0 %v815
        %v1374 = vpop.f32.mrf.mxu0
        %v1375 = vadd.f32 0.0, %v1374
        %v1376 = vpop.f32.mrf.mxu0
        %1377 = vmatprep.mubr.f32.mxu0 0.0
        %1378 = vmatmul.mubr.f32.gmra.mxu0 %v818
        %v1379 = vpop.f32.mrf.mxu0
        %v1380 = vadd.f32 0.0, %v1379
        %v1381 = vpop.f32.mrf.mxu0
        %1382 = vmatprep.mubr.f32.mxu0 0.0
        %1383 = vmatmul.mubr.f32.gmra.mxu0 %v821
        %v1384 = vpop.f32.mrf.mxu0
        %v1385 = vadd.f32 0.0, %v1384
        %v1386 = vpop.f32.mrf.mxu0
        %1387 = vmatprep.mubr.f32.mxu0 0.0
        %1388 = vmatmul.mubr.f32.gmra.mxu0 %v824
        %v1389 = vpop.f32.mrf.mxu0
        %v1390 = vadd.f32 0.0, %v1389
        %v1391 = vpop.f32.mrf.mxu0
        %1392 = vmatprep.mubr.f32.mxu0 0.0
        %1393 = vmatmul.mubr.f32.gmra.mxu0 %v827
        %v1394 = vpop.f32.mrf.mxu0
        %v1395 = vadd.f32 0.0, %v1394
        %v1396 = vpop.f32.mrf.mxu0
        %1397 = vmatprep.mubr.f32.mxu0 0.0
        %1398 = vmatmul.mubr.f32.gmra.mxu0 %v830
        %v1399 = vpop.f32.mrf.mxu0
        %v1400 = vadd.f32 0.0, %v1399
        %v1401 = vpop.f32.mrf.mxu0
        %1402 = vmatprep.mubr.f32.mxu0 0.0
        %1403 = vmatmul.mubr.f32.gmra.mxu0 %v833
        %v1404 = vpop.f32.mrf.mxu0
        %v1405 = vadd.f32 0.0, %v1404
        %v1406 = vpop.f32.mrf.mxu0
        %1407 = vmatprep.mubr.f32.mxu0 0.0
        %1408 = vmatmul.mubr.f32.gmra.mxu0 %v836
        %v1409 = vpop.f32.mrf.mxu0
        %v1410 = vadd.f32 0.0, %v1409
        %v1411 = vpop.f32.mrf.mxu0
        %1412 = vmatprep.mubr.f32.mxu0 0.0
        %1413 = vmatmul.mubr.f32.gmra.mxu0 %v839
        %v1414 = vpop.f32.mrf.mxu0
        %v1415 = vadd.f32 0.0, %v1414
        %v1416 = vpop.f32.mrf.mxu0
        %1417 = vmatprep.mubr.f32.mxu0 0.0
        %1418 = vmatmul.mubr.f32.gmra.mxu0 %v842
        %v1419 = vpop.f32.mrf.mxu0
        %v1420 = vadd.f32 0.0, %v1419
        %v1421 = vpop.f32.mrf.mxu0
        %1422 = vmatprep.mubr.f32.mxu0 0.0
        %1423 = vmatmul.mubr.f32.gmra.mxu0 %v845
        %v1424 = vpop.f32.mrf.mxu0
        %v1425 = vadd.f32 0.0, %v1424
        %v1426 = vpop.f32.mrf.mxu0
        %1427 = vmatprep.mubr.f32.mxu0 0.0
        %1428 = vmatmul.mubr.f32.gmra.mxu0 %v848
        %v1429 = vpop.f32.mrf.mxu0
        %v1430 = vadd.f32 0.0, %v1429
        %v1431 = vpop.f32.mrf.mxu0
        %1432 = vmatprep.mubr.f32.mxu0 0.0
        %1433 = vmatmul.mubr.f32.gmra.mxu0 %v851
        %v1434 = vpop.f32.mrf.mxu0
        %v1435 = vadd.f32 0.0, %v1434
        %v1436 = vpop.f32.mrf.mxu0
        %1437 = vmatprep.mubr.f32.mxu0 0.0
        %1438 = vmatmul.mubr.f32.gmra.mxu0 %v854
        %v1439 = vpop.f32.mrf.mxu0
        %v1440 = vadd.f32 0.0, %v1439
        %v1441 = vpop.f32.mrf.mxu0
        %1442 = vmatprep.mubr.f32.mxu0 0.0
        %1443 = vmatmul.mubr.f32.gmra.mxu0 %v857
        %v1444 = vpop.f32.mrf.mxu0
        %v1445 = vadd.f32 0.0, %v1444
        %v1446 = vpop.f32.mrf.mxu0
        %1447 = vmatprep.mubr.f32.mxu0 0.0
        %1448 = vmatmul.mubr.f32.gmra.mxu0 %v860
        %v1449 = vpop.f32.mrf.mxu0
        %v1450 = vadd.f32 0.0, %v1449
        %v1451 = vpop.f32.mrf.mxu0
        %1452 = vmatprep.mubr.f32.mxu0 0.0
        %1453 = vmatmul.mubr.f32.gmra.mxu0 %v863
        %v1454 = vpop.f32.mrf.mxu0
        %v1455 = vadd.f32 0.0, %v1454
        %v1456 = vpop.f32.mrf.mxu0
        %1457 = vmatprep.mubr.f32.mxu0 0.0
        %1458 = vmatmul.mubr.f32.gmra.mxu0 %v866
        %v1459 = vpop.f32.mrf.mxu0
        %v1460 = vadd.f32 0.0, %v1459
        %v1461 = vpop.f32.mrf.mxu0
        %1462 = vmatprep.mubr.f32.mxu0 0.0
        %1463 = vmatmul.mubr.f32.gmra.mxu0 %v869
        %v1464 = vpop.f32.mrf.mxu0
        %v1465 = vadd.f32 0.0, %v1464
        %v1466 = vpop.f32.mrf.mxu0
        %1467 = vmatprep.mubr.f32.mxu0 0.0
        %1468 = vmatmul.mubr.f32.gmra.mxu0 %v872
        %v1469 = vpop.f32.mrf.mxu0
        %v1470 = vadd.f32 0.0, %v1469
        %v1471 = vpop.f32.mrf.mxu0
        %1472 = vmatprep.mubr.f32.mxu0 0.0
        %1473 = vmatmul.mubr.f32.gmra.mxu0 %v875
        %v1474 = vpop.f32.mrf.mxu0
        %v1475 = vadd.f32 0.0, %v1474
        %v1476 = vpop.f32.mrf.mxu0
        %1477 = vmatprep.mubr.f32.mxu0 0.0
        %1478 = vmatmul.mubr.f32.gmra.mxu0 %v878
        %v1479 = vpop.f32.mrf.mxu0
        %v1480 = vadd.f32 0.0, %v1479
        %v1481 = vpop.f32.mrf.mxu0
        %1482 = vmatprep.mubr.f32.mxu0 0.0
        %1483 = vmatmul.mubr.f32.gmra.mxu0 %v881
        %v1484 = vpop.f32.mrf.mxu0
        %v1485 = vadd.f32 0.0, %v1484
        %v1486 = vpop.f32.mrf.mxu0
        %1487 = vmatprep.mubr.f32.mxu0 0.0
        %1488 = vmatmul.mubr.f32.gmra.mxu0 %v884
        %v1489 = vpop.f32.mrf.mxu0
        %v1490 = vadd.f32 0.0, %v1489
        %v1491 = vpop.f32.mrf.mxu0
        %1492 = vmatprep.mubr.f32.mxu0 0.0
        %1493 = vmatmul.mubr.f32.gmra.mxu0 %v887
        %v1494 = vpop.f32.mrf.mxu0
        %v1495 = vadd.f32 0.0, %v1494
        %v1496 = vpop.f32.mrf.mxu0
        %1497 = vmatprep.mubr.f32.mxu0 0.0
        %1498 = vmatmul.mubr.f32.gmra.mxu0 %v890
        %v1499 = vpop.f32.mrf.mxu0
        %v1500 = vadd.f32 0.0, %v1499
        %v1501 = vpop.f32.mrf.mxu0
        %1502 = vmatprep.mubr.f32.mxu0 0.0
        %1503 = vmatmul.mubr.f32.gmra.mxu0 %v893
        %v1504 = vpop.f32.mrf.mxu0
        %v1505 = vadd.f32 0.0, %v1504
        %v1506 = vpop.f32.mrf.mxu0
        %1507 = vmatprep.mubr.f32.mxu0 0.0
        %1508 = vmatmul.mubr.f32.gmra.mxu0 %v896
        %v1509 = vpop.f32.mrf.mxu0
        %v1510 = vadd.f32 0.0, %v1509
        %v1511 = vpop.f32.mrf.mxu0
        %1512 = vmatprep.mubr.f32.mxu0 0.0
        %1513 = vmatmul.mubr.f32.gmra.mxu0 %v899
        %v1514 = vpop.f32.mrf.mxu0
        %v1515 = vadd.f32 0.0, %v1514
        %v1516 = vpop.f32.mrf.mxu0
        %1517 = vmatprep.mubr.f32.mxu0 0.0
        %1518 = vmatmul.mubr.f32.gmra.mxu0 %v902
        %v1519 = vpop.f32.mrf.mxu0
        %v1520 = vadd.f32 0.0, %v1519
        %v1521 = vpop.f32.mrf.mxu0
        %1522 = vmatprep.mubr.f32.mxu0 0.0
        %1523 = vmatmul.mubr.f32.gmra.mxu0 %v905
        %v1524 = vpop.f32.mrf.mxu0
        %v1525 = vadd.f32 0.0, %v1524
        %v1526 = vpop.f32.mrf.mxu0
        %1527 = vmatprep.mubr.f32.mxu0 0.0
        %1528 = vmatmul.mubr.f32.gmra.mxu0 %v908
        %v1529 = vpop.f32.mrf.mxu0
        %v1530 = vadd.f32 0.0, %v1529
        %v1531 = vpop.f32.mrf.mxu0
        %1532 = vmatprep.mubr.f32.mxu0 0.0
        %1533 = vmatmul.mubr.f32.gmra.mxu0 %v911
        %v1534 = vpop.f32.mrf.mxu0
        %v1535 = vadd.f32 0.0, %v1534
        %v1536 = vpop.f32.mrf.mxu0
        %1537 = vmatprep.mubr.f32.mxu0 0.0
        %1538 = vmatmul.mubr.f32.gmra.mxu0 %v914
        %v1539 = vpop.f32.mrf.mxu0
        %v1540 = vadd.f32 0.0, %v1539
        %v1541 = vpop.f32.mrf.mxu0
        %1542 = vmatprep.mubr.f32.mxu0 0.0
        %1543 = vmatmul.mubr.f32.gmra.mxu0 %v917
        %v1544 = vpop.f32.mrf.mxu0
        %v1545 = vadd.f32 0.0, %v1544
        %v1546 = vpop.f32.mrf.mxu0
        %1547 = vmatprep.mubr.f32.mxu0 0.0
        %1548 = vmatmul.mubr.f32.gmra.mxu0 %v920
        %v1549 = vpop.f32.mrf.mxu0
        %v1550 = vadd.f32 0.0, %v1549
        %v1551 = vpop.f32.mrf.mxu0
        %1552 = vmatprep.mubr.f32.mxu0 0.0
        %1553 = vmatmul.mubr.f32.gmra.mxu0 %v923
        %v1554 = vpop.f32.mrf.mxu0
        %v1555 = vadd.f32 0.0, %v1554
        %v1556 = vpop.f32.mrf.mxu0
        %1557 = vmatprep.mubr.f32.mxu0 0.0
        %1558 = vmatmul.mubr.f32.gmra.mxu0 %v926
        %v1559 = vpop.f32.mrf.mxu0
        %v1560 = vadd.f32 0.0, %v1559
        %v1561 = vpop.f32.mrf.mxu0
        %1562 = vmatprep.mubr.f32.mxu0 0.0
        %1563 = vmatmul.mubr.f32.gmra.mxu0 %v929
        %v1564 = vpop.f32.mrf.mxu0
        %v1565 = vadd.f32 0.0, %v1564
        %v1566 = vpop.f32.mrf.mxu0
        %1567 = vmatprep.mubr.f32.mxu0 0.0
        %1568 = vmatmul.mubr.f32.gmra.mxu0 %v932
        %v1569 = vpop.f32.mrf.mxu0
        %v1570 = vadd.f32 0.0, %v1569
        %v1571 = vpop.f32.mrf.mxu0
        %1572 = vmatprep.mubr.f32.mxu0 0.0
        %1573 = vmatmul.mubr.f32.gmra.mxu0 %v935
        %v1574 = vpop.f32.mrf.mxu0
        %v1575 = vadd.f32 0.0, %v1574
        %v1576 = vpop.f32.mrf.mxu0
        %1577 = vmatprep.mubr.f32.mxu0 0.0
        %1578 = vmatmul.mubr.f32.gmra.mxu0 %v938
        %v1579 = vpop.f32.mrf.mxu0
        %v1580 = vadd.f32 0.0, %v1579
        %v1581 = vpop.f32.mrf.mxu0
        %1582 = vmatprep.mubr.f32.mxu0 0.0
        %1583 = vmatmul.mubr.f32.gmra.mxu0 %v941
        %v1584 = vpop.f32.mrf.mxu0
        %v1585 = vadd.f32 0.0, %v1584
        %v1586 = vpop.f32.mrf.mxu0
        %1587 = vmatprep.mubr.f32.mxu0 0.0
        %1588 = vmatmul.mubr.f32.gmra.mxu0 %v944
        %v1589 = vpop.f32.mrf.mxu0
        %v1590 = vadd.f32 0.0, %v1589
        %v1591 = vpop.f32.mrf.mxu0
        %1592 = vmatprep.mubr.f32.mxu0 0.0
        %1593 = vmatmul.mubr.f32.gmra.mxu0 %v947
        %v1594 = vpop.f32.mrf.mxu0
        %v1595 = vadd.f32 0.0, %v1594
        %v1596 = vpop.f32.mrf.mxu0
        %1597 = vmatprep.mubr.f32.mxu0 0.0
        %1598 = vmatmul.mubr.f32.gmra.mxu0 %v950
        %v1599 = vpop.f32.mrf.mxu0
        %v1600 = vadd.f32 0.0, %v1599
        %v1601 = vpop.f32.mrf.mxu0
        %1602 = vmatprep.mubr.f32.mxu0 0.0
        %1603 = vmatmul.mubr.f32.gmra.mxu0 %v953
        %v1604 = vpop.f32.mrf.mxu0
        %v1605 = vadd.f32 0.0, %v1604
        %v1606 = vpop.f32.mrf.mxu0
        %1607 = vmatprep.mubr.f32.mxu0 0.0
        %1608 = vmatmul.mubr.f32.gmra.mxu0 %v956
        %v1609 = vpop.f32.mrf.mxu0
        %v1610 = vadd.f32 0.0, %v1609
        %v1611 = vpop.f32.mrf.mxu0
        %1612 = vmatprep.mubr.f32.mxu0 0.0
        %1613 = vmatmul.mubr.f32.gmra.mxu0 %v959
        %v1614 = vpop.f32.mrf.mxu0
        %v1615 = vadd.f32 0.0, %v1614
        %v1616 = vpop.f32.mrf.mxu0
        %1617 = vmatprep.mubr.f32.mxu0 0.0
        %1618 = vmatmul.mubr.f32.gmra.mxu0 %v962
        %v1619 = vpop.f32.mrf.mxu0
        %v1620 = vadd.f32 0.0, %v1619
        %v1621 = vpop.f32.mrf.mxu0
        %1622 = vmatprep.mubr.f32.mxu0 0.0
        %1623 = vmatmul.mubr.f32.gmra.mxu0 %v965
        %v1624 = vpop.f32.mrf.mxu0
        %v1625 = vadd.f32 0.0, %v1624
        %v1626 = vpop.f32.mrf.mxu0
        %1627 = vmatprep.mubr.f32.mxu0 0.0
        %1628 = vmatmul.mubr.f32.gmra.mxu0 %v968
        %v1629 = vpop.f32.mrf.mxu0
        %v1630 = vadd.f32 0.0, %v1629
        %v1631 = vpop.f32.mrf.mxu0
        %1632 = vmatprep.mubr.f32.mxu0 0.0
        %1633 = vmatmul.mubr.f32.gmra.mxu0 %v971
        %v1634 = vpop.f32.mrf.mxu0
        %v1635 = vadd.f32 0.0, %v1634
        %v1636 = vpop.f32.mrf.mxu0
        %1637 = vmatprep.mubr.f32.mxu0 0.0
        %1638 = vmatmul.mubr.f32.gmra.mxu0 %v974
        %v1639 = vpop.f32.mrf.mxu0
        %v1640 = vadd.f32 0.0, %v1639
        %v1641 = vpop.f32.mrf.mxu0
        %1642 = vmatprep.mubr.f32.mxu0 0.0
        %1643 = vmatmul.mubr.f32.gmra.mxu0 %v977
        %v1644 = vpop.f32.mrf.mxu0
        %v1645 = vadd.f32 0.0, %v1644
        %v1646 = vpop.f32.mrf.mxu0
        %1647 = vmatprep.mubr.f32.mxu0 0.0
        %1648 = vmatmul.mubr.f32.gmra.mxu0 %v980
        %v1649 = vpop.f32.mrf.mxu0
        %v1650 = vadd.f32 0.0, %v1649
        %v1651 = vpop.f32.mrf.mxu0
        %1652 = vmatprep.mubr.f32.mxu0 0.0
        %1653 = vmatmul.mubr.f32.gmra.mxu0 %v983
        %v1654 = vpop.f32.mrf.mxu0
        %v1655 = vadd.f32 0.0, %v1654
        %v1656 = vpop.f32.mrf.mxu0
        %1657 = vmatprep.mubr.f32.mxu0 0.0
        %1658 = vmatmul.mubr.f32.gmra.mxu0 %v986
        %v1659 = vpop.f32.mrf.mxu0
        %v1660 = vadd.f32 0.0, %v1659
        %v1661 = vpop.f32.mrf.mxu0
        %1662 = vmatprep.mubr.f32.mxu0 0.0
        %1663 = vmatmul.mubr.f32.gmra.mxu0 %v989
        %v1664 = vpop.f32.mrf.mxu0
        %v1665 = vadd.f32 0.0, %v1664
        %v1666 = vpop.f32.mrf.mxu0
        %1667 = vmatprep.mubr.f32.mxu0 0.0
        %1668 = vmatmul.mubr.f32.gmra.mxu0 %v992
        %v1669 = vpop.f32.mrf.mxu0
        %v1670 = vadd.f32 0.0, %v1669
        %v1671 = vpop.f32.mrf.mxu0
        %1672 = vmatprep.mubr.f32.mxu0 0.0
        %1673 = vmatmul.mubr.f32.gmra.mxu0 %v995
        %v1674 = vpop.f32.mrf.mxu0
        %v1675 = vadd.f32 0.0, %v1674
        %v1676 = vpop.f32.mrf.mxu0
        %1677 = vmatprep.mubr.f32.mxu0 0.0
        %1678 = vmatmul.mubr.f32.gmra.mxu0 %v998
        %v1679 = vpop.f32.mrf.mxu0
        %v1680 = vadd.f32 0.0, %v1679
        %v1681 = vpop.f32.mrf.mxu0
        %1682 = vmatprep.mubr.f32.mxu0 0.0
        %1683 = vmatmul.mubr.f32.gmra.mxu0 %v1001
        %v1684 = vpop.f32.mrf.mxu0
        %v1685 = vadd.f32 0.0, %v1684
        %v1686 = vpop.f32.mrf.mxu0
        %1687 = vmatprep.mubr.f32.mxu0 0.0
        %1688 = vmatmul.mubr.f32.gmra.mxu0 %v1004
        %v1689 = vpop.f32.mrf.mxu0
        %v1690 = vadd.f32 0.0, %v1689
        %v1691 = vpop.f32.mrf.mxu0
        %1692 = vmatprep.mubr.f32.mxu0 0.0
        %1693 = vmatmul.mubr.f32.gmra.mxu0 %v1007
        %v1694 = vpop.f32.mrf.mxu0
        %v1695 = vadd.f32 0.0, %v1694
        %v1696 = vpop.f32.mrf.mxu0
        %1697 = vmatprep.mubr.f32.mxu0 0.0
        %1698 = vmatmul.mubr.f32.gmra.mxu0 %v1010
        %v1699 = vpop.f32.mrf.mxu0
        %v1700 = vadd.f32 0.0, %v1699
        %v1701 = vpop.f32.mrf.mxu0
        %1702 = vmatprep.mubr.f32.mxu0 0.0
        %1703 = vmatmul.mubr.f32.gmra.mxu0 %v1013
        %v1704 = vpop.f32.mrf.mxu0
        %v1705 = vadd.f32 0.0, %v1704
        %v1706 = vpop.f32.mrf.mxu0
        %1707 = vmatprep.mubr.f32.mxu0 0.0
        %1708 = vmatmul.mubr.f32.gmra.mxu0 %v1016
        %v1709 = vpop.f32.mrf.mxu0
        %v1710 = vadd.f32 0.0, %v1709
        %v1711 = vpop.f32.mrf.mxu0
        %1712 = vmatprep.mubr.f32.mxu0 0.0
        %1713 = vmatmul.mubr.f32.gmra.mxu0 %v1019
        %v1714 = vpop.f32.mrf.mxu0
        %v1715 = vadd.f32 0.0, %v1714
        %v1716 = vpop.f32.mrf.mxu0
        %1717 = vmatprep.mubr.f32.mxu0 0.0
        %1718 = vmatmul.mubr.f32.gmra.mxu0 %v1022
        %v1719 = vpop.f32.mrf.mxu0
        %v1720 = vadd.f32 0.0, %v1719
        %v1721 = vpop.f32.mrf.mxu0
        %1722 = vmatprep.mubr.f32.mxu0 0.0
        %1723 = vmatmul.mubr.f32.gmra.mxu0 %v1025
        %v1724 = vpop.f32.mrf.mxu0
        %v1725 = vadd.f32 0.0, %v1724
        %v1726 = vpop.f32.mrf.mxu0
        %1727 = vmatprep.mubr.f32.mxu0 0.0
        %1728 = vmatmul.mubr.f32.gmra.mxu0 %v1028
        %v1729 = vpop.f32.mrf.mxu0
        %v1730 = vadd.f32 0.0, %v1729
        %v1731 = vpop.f32.mrf.mxu0
        %1732 = vmatprep.mubr.f32.mxu0 0.0
        %1733 = vmatmul.mubr.f32.gmra.mxu0 %v1031
        %v1734 = vpop.f32.mrf.mxu0
        %v1735 = vadd.f32 0.0, %v1734
        %v1736 = vpop.f32.mrf.mxu0
        %1737 = vmatprep.mubr.f32.mxu0 0.0
        %1738 = vmatmul.mubr.f32.gmra.mxu0 %v1034
        %v1739 = vpop.f32.mrf.mxu0
        %v1740 = vadd.f32 0.0, %v1739
        %v1741 = vpop.f32.mrf.mxu0
        %1742 = vmatprep.mubr.f32.mxu0 0.0
        %1743 = vmatmul.mubr.f32.gmra.mxu0 %v1037
        %v1744 = vpop.f32.mrf.mxu0
        %v1745 = vadd.f32 0.0, %v1744
        %v1746 = vpop.f32.mrf.mxu0
        %1747 = vdwg.mxu0
        %vm1748 = vcmask 48128
        %v1750 = vsel %vm1748, %v396, 0
        %v1753 = vsel %vm1748, %v397, 0
        %v1756 = vsel %vm1748, %v398, 0
        %v1759 = vsel %vm1748, %v399, 0
        %v1762 = vsel %vm1748, %v400, 0
        %v1765 = vsel %vm1748, %v401, 0
        %v1768 = vsel %vm1748, %v402, 0
        %v1771 = vsel %vm1748, %v403, 0
        %v1774 = vsel %vm1748, %v404, 0
        %v1777 = vsel %vm1748, %v405, 0
        %v1780 = vsel %vm1748, %v406, 0
        %v1783 = vsel %vm1748, %v407, 0
        %v1786 = vsel %vm1748, %v408, 0
        %v1789 = vsel %vm1748, %v409, 0
        %v1792 = vsel %vm1748, %v410, 0
        %v1795 = vsel %vm1748, %v411, 0
        %v1798 = vsel %vm1748, %v412, 0
        %v1801 = vsel %vm1748, %v413, 0
        %v1804 = vsel %vm1748, %v414, 0
        %v1807 = vsel %vm1748, %v415, 0
        %v1810 = vsel %vm1748, %v416, 0
        %v1813 = vsel %vm1748, %v417, 0
        %v1816 = vsel %vm1748, %v418, 0
        %v1819 = vsel %vm1748, %v419, 0
        %v1822 = vsel %vm1748, %v420, 0
        %v1825 = vsel %vm1748, %v421, 0
        %v1828 = vsel %vm1748, %v422, 0
        %v1831 = vsel %vm1748, %v423, 0
        %v1834 = vsel %vm1748, %v424, 0
        %v1837 = vsel %vm1748, %v425, 0
        %v1840 = vsel %vm1748, %v426, 0
        %v1843 = vsel %vm1748, %v427, 0
        %v1846 = vsel %vm1748, %v428, 0
        %v1849 = vsel %vm1748, %v429, 0
        %v1852 = vsel %vm1748, %v430, 0
        %v1855 = vsel %vm1748, %v431, 0
        %v1858 = vsel %vm1748, %v432, 0
        %v1861 = vsel %vm1748, %v433, 0
        %v1864 = vsel %vm1748, %v434, 0
        %v1867 = vsel %vm1748, %v435, 0
        %v1870 = vsel %vm1748, %v436, 0
        %v1873 = vsel %vm1748, %v437, 0
        %v1876 = vsel %vm1748, %v438, 0
        %v1879 = vsel %vm1748, %v439, 0
        %v1882 = vsel %vm1748, %v440, 0
        %v1885 = vsel %vm1748, %v441, 0
        %v1888 = vsel %vm1748, %v442, 0
        %v1891 = vsel %vm1748, %v443, 0
        %v1894 = vsel %vm1748, %v444, 0
        %v1897 = vsel %vm1748, %v445, 0
        %v1900 = vsel %vm1748, %v446, 0
        %v1903 = vsel %vm1748, %v447, 0
        %v1906 = vsel %vm1748, %v448, 0
        %v1909 = vsel %vm1748, %v449, 0
        %v1912 = vsel %vm1748, %v450, 0
        %v1915 = vsel %vm1748, %v451, 0
        %v1918 = vsel %vm1748, %v452, 0
        %v1921 = vsel %vm1748, %v453, 0
        %v1924 = vsel %vm1748, %v454, 0
        %v1927 = vsel %vm1748, %v455, 0
        %v1930 = vsel %vm1748, %v456, 0
        %v1933 = vsel %vm1748, %v457, 0
        %v1936 = vsel %vm1748, %v458, 0
        %v1939 = vsel %vm1748, %v459, 0
        %v1942 = vsel %vm1748, %v460, 0
        %v1945 = vsel %vm1748, %v461, 0
        %v1948 = vsel %vm1748, %v462, 0
        %v1951 = vsel %vm1748, %v463, 0
        %v1954 = vsel %vm1748, %v464, 0
        %v1957 = vsel %vm1748, %v465, 0
        %v1960 = vsel %vm1748, %v466, 0
        %v1963 = vsel %vm1748, %v467, 0
        %v1966 = vsel %vm1748, %v468, 0
        %v1969 = vsel %vm1748, %v469, 0
        %v1972 = vsel %vm1748, %v470, 0
        %v1975 = vsel %vm1748, %v471, 0
        %v1978 = vsel %vm1748, %v472, 0
        %v1981 = vsel %vm1748, %v473, 0
        %v1984 = vsel %vm1748, %v474, 0
        %v1987 = vsel %vm1748, %v475, 0
        %v1990 = vsel %vm1748, %v476, 0
        %v1993 = vsel %vm1748, %v477, 0
        %v1996 = vsel %vm1748, %v478, 0
        %v1999 = vsel %vm1748, %v479, 0
        %v2002 = vsel %vm1748, %v480, 0
        %v2005 = vsel %vm1748, %v481, 0
        %v2008 = vsel %vm1748, %v482, 0
        %v2011 = vsel %vm1748, %v483, 0
        %v2014 = vsel %vm1748, %v484, 0
        %v2017 = vsel %vm1748, %v485, 0
        %v2020 = vsel %vm1748, %v486, 0
        %v2023 = vsel %vm1748, %v487, 0
        %v2026 = vsel %vm1748, %v488, 0
        %v2029 = vsel %vm1748, %v489, 0
        %v2032 = vsel %vm1748, %v490, 0
        %v2035 = vsel %vm1748, %v491, 0
        %v2038 = vsel %vm1748, %v492, 0
        %v2041 = vsel %vm1748, %v493, 0
        %v2044 = vsel %vm1748, %v494, 0
        %v2047 = vsel %vm1748, %v495, 0
        %v2050 = vsel %vm1748, %v496, 0
        %v2053 = vsel %vm1748, %v497, 0
        %v2056 = vsel %vm1748, %v498, 0
        %v2059 = vsel %vm1748, %v499, 0
        %v2062 = vsel %vm1748, %v500, 0
        %v2065 = vsel %vm1748, %v501, 0
        %v2068 = vsel %vm1748, %v502, 0
        %v2071 = vsel %vm1748, %v503, 0
        %v2074 = vsel %vm1748, %v504, 0
        %v2077 = vsel %vm1748, %v505, 0
        %v2080 = vsel %vm1748, %v506, 0
        %v2083 = vsel %vm1748, %v507, 0
        %v2086 = vsel %vm1748, %v508, 0
        %v2089 = vsel %vm1748, %v509, 0
        %v2092 = vsel %vm1748, %v510, 0
        %v2095 = vsel %vm1748, %v511, 0
        %v2098 = vsel %vm1748, %v512, 0
        %v2101 = vsel %vm1748, %v513, 0
        %v2104 = vsel %vm1748, %v514, 0
        %v2107 = vsel %vm1748, %v515, 0
        %v2110 = vsel %vm1748, %v516, 0
        %v2113 = vsel %vm1748, %v517, 0
        %v2116 = vsel %vm1748, %v518, 0
        %v2119 = vsel %vm1748, %v519, 0
        %v2122 = vsel %vm1748, %v520, 0
        %v2125 = vsel %vm1748, %v521, 0
        %v2128 = vsel %vm1748, %v522, 0
        %v2131 = vsel %vm1748, %v523, 0
        %vm2133 = vcmask 1045504
        %v2135 = vsel %vm2133, %v524, 0
        %2137 = vmatprep.subr.mxu0 0.0
        %2138 = vmatpush1.msra.mxu0 0.0
        %2139 = vmatprep.subr.mxu0 0.0
        %2140 = vmatpush1.msra.mxu0 0.0
        %2141 = vmatprep.subr.mxu0 0.0
        %2142 = vmatpush1.msra.mxu0 0.0
        %2143 = vmatprep.subr.mxu0 0.0
        %2144 = vmatpush1.msra.mxu0 0.0
        %2145 = vmatprep.subr.mxu0 0.0
        %2146 = vmatpush1.msra.mxu0 0.0
        %2147 = vmatprep.subr.mxu0 0.0
        %2148 = vmatpush1.msra.mxu0 0.0
        %2149 = vmatprep.subr.mxu0 0.0
        %2150 = vmatpush1.msra.mxu0 0.0
        %2151 = vmatprep.subr.mxu0 0.0
        %2152 = vmatpush1.msra.mxu0 0.0
        %2153 = vmatprep.subr.mxu0 0.0
        %2154 = vmatpush1.msra.mxu0 0.0
        %2155 = vmatprep.subr.mxu0 0.0
        %2156 = vmatpush1.msra.mxu0 0.0
        %2157 = vmatprep.subr.mxu0 0.0
        %2158 = vmatpush1.msra.mxu0 0.0
        %2159 = vmatprep.subr.mxu0 0.0
        %2160 = vmatpush1.msra.mxu0 0.0
        %2161 = vmatprep.subr.mxu0 0.0
        %2162 = vmatpush1.msra.mxu0 0.0
        %2163 = vmatprep.subr.mxu0 0.0
        %2164 = vmatpush1.msra.mxu0 0.0
        %2165 = vmatprep.subr.mxu0 0.0
        %2166 = vmatpush1.msra.mxu0 0.0
        %2167 = vmatprep.subr.mxu0 0.0
        %2168 = vmatpush1.msra.mxu0 %v2135
        %2169 = vmatprep.subr.mxu0 0.0
        %2170 = vmatpush2.msra.mxu0 0.0
        %2171 = vmatprep.subr.mxu0 0.0
        %2172 = vmatpush2.msra.mxu0 0.0
        %2173 = vmatprep.subr.mxu0 0.0
        %2174 = vmatpush2.msra.mxu0 0.0
        %2175 = vmatprep.subr.mxu0 0.0
        %2176 = vmatpush2.msra.mxu0 0.0
        %2177 = vmatprep.subr.mxu0 0.0
        %2178 = vmatpush2.msra.mxu0 0.0
        %2179 = vmatprep.subr.mxu0 0.0
        %2180 = vmatpush2.msra.mxu0 0.0
        %2181 = vmatprep.subr.mxu0 0.0
        %2182 = vmatpush2.msra.mxu0 0.0
        %2183 = vmatprep.subr.mxu0 0.0
        %2184 = vmatpush2.msra.mxu0 0.0
        %2185 = vmatprep.subr.mxu0 0.0
        %2186 = vmatpush2.msra.mxu0 0.0
        %2187 = vmatprep.subr.mxu0 0.0
        %2188 = vmatpush2.msra.mxu0 0.0
        %2189 = vmatprep.subr.mxu0 0.0
        %2190 = vmatpush2.msra.mxu0 0.0
        %2191 = vmatprep.subr.mxu0 0.0
        %2192 = vmatpush2.msra.mxu0 0.0
        %2193 = vmatprep.subr.mxu0 0.0
        %2194 = vmatpush2.msra.mxu0 0.0
        %2195 = vmatprep.subr.mxu0 0.0
        %2196 = vmatpush2.msra.mxu0 0.0
        %2197 = vmatprep.subr.mxu0 0.0
        %2198 = vmatpush2.msra.mxu0 0.0
        %2199 = vmatprep.subr.mxu0 0.0
        %2200 = vmatpush2.msra.mxu0 0.0
        %2201 = vmatprep.mubr.f32.mxu0 0.0
        %2202 = vmatmul.mubr.f32.gmra.mxu0 %v1750
        %v2203 = vpop.f32.mrf.mxu0
        %v2204 = vadd.f32 %v1110, %v2203
        %v2205 = vpop.f32.mrf.mxu0
        %2206 = vmatprep.mubr.f32.mxu0 0.0
        %2207 = vmatmul.mubr.f32.gmra.mxu0 %v1753
        %v2208 = vpop.f32.mrf.mxu0
        %v2209 = vadd.f32 %v1115, %v2208
        %v2210 = vpop.f32.mrf.mxu0
        %2211 = vmatprep.mubr.f32.mxu0 0.0
        %2212 = vmatmul.mubr.f32.gmra.mxu0 %v1756
        %v2213 = vpop.f32.mrf.mxu0
        %v2214 = vadd.f32 %v1120, %v2213
        %v2215 = vpop.f32.mrf.mxu0
        %2216 = vmatprep.mubr.f32.mxu0 0.0
        %2217 = vmatmul.mubr.f32.gmra.mxu0 %v1759
        %v2218 = vpop.f32.mrf.mxu0
        %v2219 = vadd.f32 %v1125, %v2218
        %v2220 = vpop.f32.mrf.mxu0
        %2221 = vmatprep.mubr.f32.mxu0 0.0
        %2222 = vmatmul.mubr.f32.gmra.mxu0 %v1762
        %v2223 = vpop.f32.mrf.mxu0
        %v2224 = vadd.f32 %v1130, %v2223
        %v2225 = vpop.f32.mrf.mxu0
        %2226 = vmatprep.mubr.f32.mxu0 0.0
        %2227 = vmatmul.mubr.f32.gmra.mxu0 %v1765
        %v2228 = vpop.f32.mrf.mxu0
        %v2229 = vadd.f32 %v1135, %v2228
        %v2230 = vpop.f32.mrf.mxu0
        %2231 = vmatprep.mubr.f32.mxu0 0.0
        %2232 = vmatmul.mubr.f32.gmra.mxu0 %v1768
        %v2233 = vpop.f32.mrf.mxu0
        %v2234 = vadd.f32 %v1140, %v2233
        %v2235 = vpop.f32.mrf.mxu0
        %2236 = vmatprep.mubr.f32.mxu0 0.0
        %2237 = vmatmul.mubr.f32.gmra.mxu0 %v1771
        %v2238 = vpop.f32.mrf.mxu0
        %v2239 = vadd.f32 %v1145, %v2238
        %v2240 = vpop.f32.mrf.mxu0
        %2241 = vmatprep.mubr.f32.mxu0 0.0
        %2242 = vmatmul.mubr.f32.gmra.mxu0 %v1774
        %v2243 = vpop.f32.mrf.mxu0
        %v2244 = vadd.f32 %v1150, %v2243
        %v2245 = vpop.f32.mrf.mxu0
        %2246 = vmatprep.mubr.f32.mxu0 0.0
        %2247 = vmatmul.mubr.f32.gmra.mxu0 %v1777
        %v2248 = vpop.f32.mrf.mxu0
        %v2249 = vadd.f32 %v1155, %v2248
        %v2250 = vpop.f32.mrf.mxu0
        %2251 = vmatprep.mubr.f32.mxu0 0.0
        %2252 = vmatmul.mubr.f32.gmra.mxu0 %v1780
        %v2253 = vpop.f32.mrf.mxu0
        %v2254 = vadd.f32 %v1160, %v2253
        %v2255 = vpop.f32.mrf.mxu0
        %2256 = vmatprep.mubr.f32.mxu0 0.0
        %2257 = vmatmul.mubr.f32.gmra.mxu0 %v1783
        %v2258 = vpop.f32.mrf.mxu0
        %v2259 = vadd.f32 %v1165, %v2258
        %v2260 = vpop.f32.mrf.mxu0
        %2261 = vmatprep.mubr.f32.mxu0 0.0
        %2262 = vmatmul.mubr.f32.gmra.mxu0 %v1786
        %v2263 = vpop.f32.mrf.mxu0
        %v2264 = vadd.f32 %v1170, %v2263
        %v2265 = vpop.f32.mrf.mxu0
        %2266 = vmatprep.mubr.f32.mxu0 0.0
        %2267 = vmatmul.mubr.f32.gmra.mxu0 %v1789
        %v2268 = vpop.f32.mrf.mxu0
        %v2269 = vadd.f32 %v1175, %v2268
        %v2270 = vpop.f32.mrf.mxu0
        %2271 = vmatprep.mubr.f32.mxu0 0.0
        %2272 = vmatmul.mubr.f32.gmra.mxu0 %v1792
        %v2273 = vpop.f32.mrf.mxu0
        %v2274 = vadd.f32 %v1180, %v2273
        %v2275 = vpop.f32.mrf.mxu0
        %2276 = vmatprep.mubr.f32.mxu0 0.0
        %2277 = vmatmul.mubr.f32.gmra.mxu0 %v1795
        %v2278 = vpop.f32.mrf.mxu0
        %v2279 = vadd.f32 %v1185, %v2278
        %v2280 = vpop.f32.mrf.mxu0
        %2281 = vmatprep.mubr.f32.mxu0 0.0
        %2282 = vmatmul.mubr.f32.gmra.mxu0 %v1798
        %v2283 = vpop.f32.mrf.mxu0
        %v2284 = vadd.f32 %v1190, %v2283
        %v2285 = vpop.f32.mrf.mxu0
        %2286 = vmatprep.mubr.f32.mxu0 0.0
        %2287 = vmatmul.mubr.f32.gmra.mxu0 %v1801
        %v2288 = vpop.f32.mrf.mxu0
        %v2289 = vadd.f32 %v1195, %v2288
        %v2290 = vpop.f32.mrf.mxu0
        %2291 = vmatprep.mubr.f32.mxu0 0.0
        %2292 = vmatmul.mubr.f32.gmra.mxu0 %v1804
        %v2293 = vpop.f32.mrf.mxu0
        %v2294 = vadd.f32 %v1200, %v2293
        %v2295 = vpop.f32.mrf.mxu0
        %2296 = vmatprep.mubr.f32.mxu0 0.0
        %2297 = vmatmul.mubr.f32.gmra.mxu0 %v1807
        %v2298 = vpop.f32.mrf.mxu0
        %v2299 = vadd.f32 %v1205, %v2298
        %v2300 = vpop.f32.mrf.mxu0
        %2301 = vmatprep.mubr.f32.mxu0 0.0
        %2302 = vmatmul.mubr.f32.gmra.mxu0 %v1810
        %v2303 = vpop.f32.mrf.mxu0
        %v2304 = vadd.f32 %v1210, %v2303
        %v2305 = vpop.f32.mrf.mxu0
        %2306 = vmatprep.mubr.f32.mxu0 0.0
        %2307 = vmatmul.mubr.f32.gmra.mxu0 %v1813
        %v2308 = vpop.f32.mrf.mxu0
        %v2309 = vadd.f32 %v1215, %v2308
        %v2310 = vpop.f32.mrf.mxu0
        %2311 = vmatprep.mubr.f32.mxu0 0.0
        %2312 = vmatmul.mubr.f32.gmra.mxu0 %v1816
        %v2313 = vpop.f32.mrf.mxu0
        %v2314 = vadd.f32 %v1220, %v2313
        %v2315 = vpop.f32.mrf.mxu0
        %2316 = vmatprep.mubr.f32.mxu0 0.0
        %2317 = vmatmul.mubr.f32.gmra.mxu0 %v1819
        %v2318 = vpop.f32.mrf.mxu0
        %v2319 = vadd.f32 %v1225, %v2318
        %v2320 = vpop.f32.mrf.mxu0
        %2321 = vmatprep.mubr.f32.mxu0 0.0
        %2322 = vmatmul.mubr.f32.gmra.mxu0 %v1822
        %v2323 = vpop.f32.mrf.mxu0
        %v2324 = vadd.f32 %v1230, %v2323
        %v2325 = vpop.f32.mrf.mxu0
        %2326 = vmatprep.mubr.f32.mxu0 0.0
        %2327 = vmatmul.mubr.f32.gmra.mxu0 %v1825
        %v2328 = vpop.f32.mrf.mxu0
        %v2329 = vadd.f32 %v1235, %v2328
        %v2330 = vpop.f32.mrf.mxu0
        %2331 = vmatprep.mubr.f32.mxu0 0.0
        %2332 = vmatmul.mubr.f32.gmra.mxu0 %v1828
        %v2333 = vpop.f32.mrf.mxu0
        %v2334 = vadd.f32 %v1240, %v2333
        %v2335 = vpop.f32.mrf.mxu0
        %2336 = vmatprep.mubr.f32.mxu0 0.0
        %2337 = vmatmul.mubr.f32.gmra.mxu0 %v1831
        %v2338 = vpop.f32.mrf.mxu0
        %v2339 = vadd.f32 %v1245, %v2338
        %v2340 = vpop.f32.mrf.mxu0
        %2341 = vmatprep.mubr.f32.mxu0 0.0
        %2342 = vmatmul.mubr.f32.gmra.mxu0 %v1834
        %v2343 = vpop.f32.mrf.mxu0
        %v2344 = vadd.f32 %v1250, %v2343
        %v2345 = vpop.f32.mrf.mxu0
        %2346 = vmatprep.mubr.f32.mxu0 0.0
        %2347 = vmatmul.mubr.f32.gmra.mxu0 %v1837
        %v2348 = vpop.f32.mrf.mxu0
        %v2349 = vadd.f32 %v1255, %v2348
        %v2350 = vpop.f32.mrf.mxu0
        %2351 = vmatprep.mubr.f32.mxu0 0.0
        %2352 = vmatmul.mubr.f32.gmra.mxu0 %v1840
        %v2353 = vpop.f32.mrf.mxu0
        %v2354 = vadd.f32 %v1260, %v2353
        %v2355 = vpop.f32.mrf.mxu0
        %2356 = vmatprep.mubr.f32.mxu0 0.0
        %2357 = vmatmul.mubr.f32.gmra.mxu0 %v1843
        %v2358 = vpop.f32.mrf.mxu0
        %v2359 = vadd.f32 %v1265, %v2358
        %v2360 = vpop.f32.mrf.mxu0
        %2361 = vmatprep.mubr.f32.mxu0 0.0
        %2362 = vmatmul.mubr.f32.gmra.mxu0 %v1846
        %v2363 = vpop.f32.mrf.mxu0
        %v2364 = vadd.f32 %v1270, %v2363
        %v2365 = vpop.f32.mrf.mxu0
        %2366 = vmatprep.mubr.f32.mxu0 0.0
        %2367 = vmatmul.mubr.f32.gmra.mxu0 %v1849
        %v2368 = vpop.f32.mrf.mxu0
        %v2369 = vadd.f32 %v1275, %v2368
        %v2370 = vpop.f32.mrf.mxu0
        %2371 = vmatprep.mubr.f32.mxu0 0.0
        %2372 = vmatmul.mubr.f32.gmra.mxu0 %v1852
        %v2373 = vpop.f32.mrf.mxu0
        %v2374 = vadd.f32 %v1280, %v2373
        %v2375 = vpop.f32.mrf.mxu0
        %2376 = vmatprep.mubr.f32.mxu0 0.0
        %2377 = vmatmul.mubr.f32.gmra.mxu0 %v1855
        %v2378 = vpop.f32.mrf.mxu0
        %v2379 = vadd.f32 %v1285, %v2378
        %v2380 = vpop.f32.mrf.mxu0
        %2381 = vmatprep.mubr.f32.mxu0 0.0
        %2382 = vmatmul.mubr.f32.gmra.mxu0 %v1858
        %v2383 = vpop.f32.mrf.mxu0
        %v2384 = vadd.f32 %v1290, %v2383
        %v2385 = vpop.f32.mrf.mxu0
        %2386 = vmatprep.mubr.f32.mxu0 0.0
        %2387 = vmatmul.mubr.f32.gmra.mxu0 %v1861
        %v2388 = vpop.f32.mrf.mxu0
        %v2389 = vadd.f32 %v1295, %v2388
        %v2390 = vpop.f32.mrf.mxu0
        %2391 = vmatprep.mubr.f32.mxu0 0.0
        %2392 = vmatmul.mubr.f32.gmra.mxu0 %v1864
        %v2393 = vpop.f32.mrf.mxu0
        %v2394 = vadd.f32 %v1300, %v2393
        %v2395 = vpop.f32.mrf.mxu0
        %2396 = vmatprep.mubr.f32.mxu0 0.0
        %2397 = vmatmul.mubr.f32.gmra.mxu0 %v1867
        %v2398 = vpop.f32.mrf.mxu0
        %v2399 = vadd.f32 %v1305, %v2398
        %v2400 = vpop.f32.mrf.mxu0
        %2401 = vmatprep.mubr.f32.mxu0 0.0
        %2402 = vmatmul.mubr.f32.gmra.mxu0 %v1870
        %v2403 = vpop.f32.mrf.mxu0
        %v2404 = vadd.f32 %v1310, %v2403
        %v2405 = vpop.f32.mrf.mxu0
        %2406 = vmatprep.mubr.f32.mxu0 0.0
        %2407 = vmatmul.mubr.f32.gmra.mxu0 %v1873
        %v2408 = vpop.f32.mrf.mxu0
        %v2409 = vadd.f32 %v1315, %v2408
        %v2410 = vpop.f32.mrf.mxu0
        %2411 = vmatprep.mubr.f32.mxu0 0.0
        %2412 = vmatmul.mubr.f32.gmra.mxu0 %v1876
        %v2413 = vpop.f32.mrf.mxu0
        %v2414 = vadd.f32 %v1320, %v2413
        %v2415 = vpop.f32.mrf.mxu0
        %2416 = vmatprep.mubr.f32.mxu0 0.0
        %2417 = vmatmul.mubr.f32.gmra.mxu0 %v1879
        %v2418 = vpop.f32.mrf.mxu0
        %v2419 = vadd.f32 %v1325, %v2418
        %v2420 = vpop.f32.mrf.mxu0
        %2421 = vmatprep.mubr.f32.mxu0 0.0
        %2422 = vmatmul.mubr.f32.gmra.mxu0 %v1882
        %v2423 = vpop.f32.mrf.mxu0
        %v2424 = vadd.f32 %v1330, %v2423
        %v2425 = vpop.f32.mrf.mxu0
        %2426 = vmatprep.mubr.f32.mxu0 0.0
        %2427 = vmatmul.mubr.f32.gmra.mxu0 %v1885
        %v2428 = vpop.f32.mrf.mxu0
        %v2429 = vadd.f32 %v1335, %v2428
        %v2430 = vpop.f32.mrf.mxu0
        %2431 = vmatprep.mubr.f32.mxu0 0.0
        %2432 = vmatmul.mubr.f32.gmra.mxu0 %v1888
        %v2433 = vpop.f32.mrf.mxu0
        %v2434 = vadd.f32 %v1340, %v2433
        %v2435 = vpop.f32.mrf.mxu0
        %2436 = vmatprep.mubr.f32.mxu0 0.0
        %2437 = vmatmul.mubr.f32.gmra.mxu0 %v1891
        %v2438 = vpop.f32.mrf.mxu0
        %v2439 = vadd.f32 %v1345, %v2438
        %v2440 = vpop.f32.mrf.mxu0
        %2441 = vmatprep.mubr.f32.mxu0 0.0
        %2442 = vmatmul.mubr.f32.gmra.mxu0 %v1894
        %v2443 = vpop.f32.mrf.mxu0
        %v2444 = vadd.f32 %v1350, %v2443
        %v2445 = vpop.f32.mrf.mxu0
        %2446 = vmatprep.mubr.f32.mxu0 0.0
        %2447 = vmatmul.mubr.f32.gmra.mxu0 %v1897
        %v2448 = vpop.f32.mrf.mxu0
        %v2449 = vadd.f32 %v1355, %v2448
        %v2450 = vpop.f32.mrf.mxu0
        %2451 = vmatprep.mubr.f32.mxu0 0.0
        %2452 = vmatmul.mubr.f32.gmra.mxu0 %v1900
        %v2453 = vpop.f32.mrf.mxu0
        %v2454 = vadd.f32 %v1360, %v2453
        %v2455 = vpop.f32.mrf.mxu0
        %2456 = vmatprep.mubr.f32.mxu0 0.0
        %2457 = vmatmul.mubr.f32.gmra.mxu0 %v1903
        %v2458 = vpop.f32.mrf.mxu0
        %v2459 = vadd.f32 %v1365, %v2458
        %v2460 = vpop.f32.mrf.mxu0
        %2461 = vmatprep.mubr.f32.mxu0 0.0
        %2462 = vmatmul.mubr.f32.gmra.mxu0 %v1906
        %v2463 = vpop.f32.mrf.mxu0
        %v2464 = vadd.f32 %v1370, %v2463
        %v2465 = vpop.f32.mrf.mxu0
        %2466 = vmatprep.mubr.f32.mxu0 0.0
        %2467 = vmatmul.mubr.f32.gmra.mxu0 %v1909
        %v2468 = vpop.f32.mrf.mxu0
        %v2469 = vadd.f32 %v1375, %v2468
        %v2470 = vpop.f32.mrf.mxu0
        %2471 = vmatprep.mubr.f32.mxu0 0.0
        %2472 = vmatmul.mubr.f32.gmra.mxu0 %v1912
        %v2473 = vpop.f32.mrf.mxu0
        %v2474 = vadd.f32 %v1380, %v2473
        %v2475 = vpop.f32.mrf.mxu0
        %2476 = vmatprep.mubr.f32.mxu0 0.0
        %2477 = vmatmul.mubr.f32.gmra.mxu0 %v1915
        %v2478 = vpop.f32.mrf.mxu0
        %v2479 = vadd.f32 %v1385, %v2478
        %v2480 = vpop.f32.mrf.mxu0
        %2481 = vmatprep.mubr.f32.mxu0 0.0
        %2482 = vmatmul.mubr.f32.gmra.mxu0 %v1918
        %v2483 = vpop.f32.mrf.mxu0
        %v2484 = vadd.f32 %v1390, %v2483
        %v2485 = vpop.f32.mrf.mxu0
        %2486 = vmatprep.mubr.f32.mxu0 0.0
        %2487 = vmatmul.mubr.f32.gmra.mxu0 %v1921
        %v2488 = vpop.f32.mrf.mxu0
        %v2489 = vadd.f32 %v1395, %v2488
        %v2490 = vpop.f32.mrf.mxu0
        %2491 = vmatprep.mubr.f32.mxu0 0.0
        %2492 = vmatmul.mubr.f32.gmra.mxu0 %v1924
        %v2493 = vpop.f32.mrf.mxu0
        %v2494 = vadd.f32 %v1400, %v2493
        %v2495 = vpop.f32.mrf.mxu0
        %2496 = vmatprep.mubr.f32.mxu0 0.0
        %2497 = vmatmul.mubr.f32.gmra.mxu0 %v1927
        %v2498 = vpop.f32.mrf.mxu0
        %v2499 = vadd.f32 %v1405, %v2498
        %v2500 = vpop.f32.mrf.mxu0
        %2501 = vmatprep.mubr.f32.mxu0 0.0
        %2502 = vmatmul.mubr.f32.gmra.mxu0 %v1930
        %v2503 = vpop.f32.mrf.mxu0
        %v2504 = vadd.f32 %v1410, %v2503
        %v2505 = vpop.f32.mrf.mxu0
        %2506 = vmatprep.mubr.f32.mxu0 0.0
        %2507 = vmatmul.mubr.f32.gmra.mxu0 %v1933
        %v2508 = vpop.f32.mrf.mxu0
        %v2509 = vadd.f32 %v1415, %v2508
        %v2510 = vpop.f32.mrf.mxu0
        %2511 = vmatprep.mubr.f32.mxu0 0.0
        %2512 = vmatmul.mubr.f32.gmra.mxu0 %v1936
        %v2513 = vpop.f32.mrf.mxu0
        %v2514 = vadd.f32 %v1420, %v2513
        %v2515 = vpop.f32.mrf.mxu0
        %2516 = vmatprep.mubr.f32.mxu0 0.0
        %2517 = vmatmul.mubr.f32.gmra.mxu0 %v1939
        %v2518 = vpop.f32.mrf.mxu0
        %v2519 = vadd.f32 %v1425, %v2518
        %v2520 = vpop.f32.mrf.mxu0
        %2521 = vmatprep.mubr.f32.mxu0 0.0
        %2522 = vmatmul.mubr.f32.gmra.mxu0 %v1942
        %v2523 = vpop.f32.mrf.mxu0
        %v2524 = vadd.f32 %v1430, %v2523
        %v2525 = vpop.f32.mrf.mxu0
        %2526 = vmatprep.mubr.f32.mxu0 0.0
        %2527 = vmatmul.mubr.f32.gmra.mxu0 %v1945
        %v2528 = vpop.f32.mrf.mxu0
        %v2529 = vadd.f32 %v1435, %v2528
        %v2530 = vpop.f32.mrf.mxu0
        %2531 = vmatprep.mubr.f32.mxu0 0.0
        %2532 = vmatmul.mubr.f32.gmra.mxu0 %v1948
        %v2533 = vpop.f32.mrf.mxu0
        %v2534 = vadd.f32 %v1440, %v2533
        %v2535 = vpop.f32.mrf.mxu0
        %2536 = vmatprep.mubr.f32.mxu0 0.0
        %2537 = vmatmul.mubr.f32.gmra.mxu0 %v1951
        %v2538 = vpop.f32.mrf.mxu0
        %v2539 = vadd.f32 %v1445, %v2538
        %v2540 = vpop.f32.mrf.mxu0
        %2541 = vmatprep.mubr.f32.mxu0 0.0
        %2542 = vmatmul.mubr.f32.gmra.mxu0 %v1954
        %v2543 = vpop.f32.mrf.mxu0
        %v2544 = vadd.f32 %v1450, %v2543
        %v2545 = vpop.f32.mrf.mxu0
        %2546 = vmatprep.mubr.f32.mxu0 0.0
        %2547 = vmatmul.mubr.f32.gmra.mxu0 %v1957
        %v2548 = vpop.f32.mrf.mxu0
        %v2549 = vadd.f32 %v1455, %v2548
        %v2550 = vpop.f32.mrf.mxu0
        %2551 = vmatprep.mubr.f32.mxu0 0.0
        %2552 = vmatmul.mubr.f32.gmra.mxu0 %v1960
        %v2553 = vpop.f32.mrf.mxu0
        %v2554 = vadd.f32 %v1460, %v2553
        %v2555 = vpop.f32.mrf.mxu0
        %2556 = vmatprep.mubr.f32.mxu0 0.0
        %2557 = vmatmul.mubr.f32.gmra.mxu0 %v1963
        %v2558 = vpop.f32.mrf.mxu0
        %v2559 = vadd.f32 %v1465, %v2558
        %v2560 = vpop.f32.mrf.mxu0
        %2561 = vmatprep.mubr.f32.mxu0 0.0
        %2562 = vmatmul.mubr.f32.gmra.mxu0 %v1966
        %v2563 = vpop.f32.mrf.mxu0
        %v2564 = vadd.f32 %v1470, %v2563
        %v2565 = vpop.f32.mrf.mxu0
        %2566 = vmatprep.mubr.f32.mxu0 0.0
        %2567 = vmatmul.mubr.f32.gmra.mxu0 %v1969
        %v2568 = vpop.f32.mrf.mxu0
        %v2569 = vadd.f32 %v1475, %v2568
        %v2570 = vpop.f32.mrf.mxu0
        %2571 = vmatprep.mubr.f32.mxu0 0.0
        %2572 = vmatmul.mubr.f32.gmra.mxu0 %v1972
        %v2573 = vpop.f32.mrf.mxu0
        %v2574 = vadd.f32 %v1480, %v2573
        %v2575 = vpop.f32.mrf.mxu0
        %2576 = vmatprep.mubr.f32.mxu0 0.0
        %2577 = vmatmul.mubr.f32.gmra.mxu0 %v1975
        %v2578 = vpop.f32.mrf.mxu0
        %v2579 = vadd.f32 %v1485, %v2578
        %v2580 = vpop.f32.mrf.mxu0
        %2581 = vmatprep.mubr.f32.mxu0 0.0
        %2582 = vmatmul.mubr.f32.gmra.mxu0 %v1978
        %v2583 = vpop.f32.mrf.mxu0
        %v2584 = vadd.f32 %v1490, %v2583
        %v2585 = vpop.f32.mrf.mxu0
        %2586 = vmatprep.mubr.f32.mxu0 0.0
        %2587 = vmatmul.mubr.f32.gmra.mxu0 %v1981
        %v2588 = vpop.f32.mrf.mxu0
        %v2589 = vadd.f32 %v1495, %v2588
        %v2590 = vpop.f32.mrf.mxu0
        %2591 = vmatprep.mubr.f32.mxu0 0.0
        %2592 = vmatmul.mubr.f32.gmra.mxu0 %v1984
        %v2593 = vpop.f32.mrf.mxu0
        %v2594 = vadd.f32 %v1500, %v2593
        %v2595 = vpop.f32.mrf.mxu0
        %2596 = vmatprep.mubr.f32.mxu0 0.0
        %2597 = vmatmul.mubr.f32.gmra.mxu0 %v1987
        %v2598 = vpop.f32.mrf.mxu0
        %v2599 = vadd.f32 %v1505, %v2598
        %v2600 = vpop.f32.mrf.mxu0
        %2601 = vmatprep.mubr.f32.mxu0 0.0
        %2602 = vmatmul.mubr.f32.gmra.mxu0 %v1990
        %v2603 = vpop.f32.mrf.mxu0
        %v2604 = vadd.f32 %v1510, %v2603
        %v2605 = vpop.f32.mrf.mxu0
        %2606 = vmatprep.mubr.f32.mxu0 0.0
        %2607 = vmatmul.mubr.f32.gmra.mxu0 %v1993
        %v2608 = vpop.f32.mrf.mxu0
        %v2609 = vadd.f32 %v1515, %v2608
        %v2610 = vpop.f32.mrf.mxu0
        %2611 = vmatprep.mubr.f32.mxu0 0.0
        %2612 = vmatmul.mubr.f32.gmra.mxu0 %v1996
        %v2613 = vpop.f32.mrf.mxu0
        %v2614 = vadd.f32 %v1520, %v2613
        %v2615 = vpop.f32.mrf.mxu0
        %2616 = vmatprep.mubr.f32.mxu0 0.0
        %2617 = vmatmul.mubr.f32.gmra.mxu0 %v1999
        %v2618 = vpop.f32.mrf.mxu0
        %v2619 = vadd.f32 %v1525, %v2618
        %v2620 = vpop.f32.mrf.mxu0
        %2621 = vmatprep.mubr.f32.mxu0 0.0
        %2622 = vmatmul.mubr.f32.gmra.mxu0 %v2002
        %v2623 = vpop.f32.mrf.mxu0
        %v2624 = vadd.f32 %v1530, %v2623
        %v2625 = vpop.f32.mrf.mxu0
        %2626 = vmatprep.mubr.f32.mxu0 0.0
        %2627 = vmatmul.mubr.f32.gmra.mxu0 %v2005
        %v2628 = vpop.f32.mrf.mxu0
        %v2629 = vadd.f32 %v1535, %v2628
        %v2630 = vpop.f32.mrf.mxu0
        %2631 = vmatprep.mubr.f32.mxu0 0.0
        %2632 = vmatmul.mubr.f32.gmra.mxu0 %v2008
        %v2633 = vpop.f32.mrf.mxu0
        %v2634 = vadd.f32 %v1540, %v2633
        %v2635 = vpop.f32.mrf.mxu0
        %2636 = vmatprep.mubr.f32.mxu0 0.0
        %2637 = vmatmul.mubr.f32.gmra.mxu0 %v2011
        %v2638 = vpop.f32.mrf.mxu0
        %v2639 = vadd.f32 %v1545, %v2638
        %v2640 = vpop.f32.mrf.mxu0
        %2641 = vmatprep.mubr.f32.mxu0 0.0
        %2642 = vmatmul.mubr.f32.gmra.mxu0 %v2014
        %v2643 = vpop.f32.mrf.mxu0
        %v2644 = vadd.f32 %v1550, %v2643
        %v2645 = vpop.f32.mrf.mxu0
        %2646 = vmatprep.mubr.f32.mxu0 0.0
        %2647 = vmatmul.mubr.f32.gmra.mxu0 %v2017
        %v2648 = vpop.f32.mrf.mxu0
        %v2649 = vadd.f32 %v1555, %v2648
        %v2650 = vpop.f32.mrf.mxu0
        %2651 = vmatprep.mubr.f32.mxu0 0.0
        %2652 = vmatmul.mubr.f32.gmra.mxu0 %v2020
        %v2653 = vpop.f32.mrf.mxu0
        %v2654 = vadd.f32 %v1560, %v2653
        %v2655 = vpop.f32.mrf.mxu0
        %2656 = vmatprep.mubr.f32.mxu0 0.0
        %2657 = vmatmul.mubr.f32.gmra.mxu0 %v2023
        %v2658 = vpop.f32.mrf.mxu0
        %v2659 = vadd.f32 %v1565, %v2658
        %v2660 = vpop.f32.mrf.mxu0
        %2661 = vmatprep.mubr.f32.mxu0 0.0
        %2662 = vmatmul.mubr.f32.gmra.mxu0 %v2026
        %v2663 = vpop.f32.mrf.mxu0
        %v2664 = vadd.f32 %v1570, %v2663
        %v2665 = vpop.f32.mrf.mxu0
        %2666 = vmatprep.mubr.f32.mxu0 0.0
        %2667 = vmatmul.mubr.f32.gmra.mxu0 %v2029
        %v2668 = vpop.f32.mrf.mxu0
        %v2669 = vadd.f32 %v1575, %v2668
        %v2670 = vpop.f32.mrf.mxu0
        %2671 = vmatprep.mubr.f32.mxu0 0.0
        %2672 = vmatmul.mubr.f32.gmra.mxu0 %v2032
        %v2673 = vpop.f32.mrf.mxu0
        %v2674 = vadd.f32 %v1580, %v2673
        %v2675 = vpop.f32.mrf.mxu0
        %2676 = vmatprep.mubr.f32.mxu0 0.0
        %2677 = vmatmul.mubr.f32.gmra.mxu0 %v2035
        %v2678 = vpop.f32.mrf.mxu0
        %v2679 = vadd.f32 %v1585, %v2678
        %v2680 = vpop.f32.mrf.mxu0
        %2681 = vmatprep.mubr.f32.mxu0 0.0
        %2682 = vmatmul.mubr.f32.gmra.mxu0 %v2038
        %v2683 = vpop.f32.mrf.mxu0
        %v2684 = vadd.f32 %v1590, %v2683
        %v2685 = vpop.f32.mrf.mxu0
        %2686 = vmatprep.mubr.f32.mxu0 0.0
        %2687 = vmatmul.mubr.f32.gmra.mxu0 %v2041
        %v2688 = vpop.f32.mrf.mxu0
        %v2689 = vadd.f32 %v1595, %v2688
        %v2690 = vpop.f32.mrf.mxu0
        %2691 = vmatprep.mubr.f32.mxu0 0.0
        %2692 = vmatmul.mubr.f32.gmra.mxu0 %v2044
        %v2693 = vpop.f32.mrf.mxu0
        %v2694 = vadd.f32 %v1600, %v2693
        %v2695 = vpop.f32.mrf.mxu0
        %2696 = vmatprep.mubr.f32.mxu0 0.0
        %2697 = vmatmul.mubr.f32.gmra.mxu0 %v2047
        %v2698 = vpop.f32.mrf.mxu0
        %v2699 = vadd.f32 %v1605, %v2698
        %v2700 = vpop.f32.mrf.mxu0
        %2701 = vmatprep.mubr.f32.mxu0 0.0
        %2702 = vmatmul.mubr.f32.gmra.mxu0 %v2050
        %v2703 = vpop.f32.mrf.mxu0
        %v2704 = vadd.f32 %v1610, %v2703
        %v2705 = vpop.f32.mrf.mxu0
        %2706 = vmatprep.mubr.f32.mxu0 0.0
        %2707 = vmatmul.mubr.f32.gmra.mxu0 %v2053
        %v2708 = vpop.f32.mrf.mxu0
        %v2709 = vadd.f32 %v1615, %v2708
        %v2710 = vpop.f32.mrf.mxu0
        %2711 = vmatprep.mubr.f32.mxu0 0.0
        %2712 = vmatmul.mubr.f32.gmra.mxu0 %v2056
        %v2713 = vpop.f32.mrf.mxu0
        %v2714 = vadd.f32 %v1620, %v2713
        %v2715 = vpop.f32.mrf.mxu0
        %2716 = vmatprep.mubr.f32.mxu0 0.0
        %2717 = vmatmul.mubr.f32.gmra.mxu0 %v2059
        %v2718 = vpop.f32.mrf.mxu0
        %v2719 = vadd.f32 %v1625, %v2718
        %v2720 = vpop.f32.mrf.mxu0
        %2721 = vmatprep.mubr.f32.mxu0 0.0
        %2722 = vmatmul.mubr.f32.gmra.mxu0 %v2062
        %v2723 = vpop.f32.mrf.mxu0
        %v2724 = vadd.f32 %v1630, %v2723
        %v2725 = vpop.f32.mrf.mxu0
        %2726 = vmatprep.mubr.f32.mxu0 0.0
        %2727 = vmatmul.mubr.f32.gmra.mxu0 %v2065
        %v2728 = vpop.f32.mrf.mxu0
        %v2729 = vadd.f32 %v1635, %v2728
        %v2730 = vpop.f32.mrf.mxu0
        %2731 = vmatprep.mubr.f32.mxu0 0.0
        %2732 = vmatmul.mubr.f32.gmra.mxu0 %v2068
        %v2733 = vpop.f32.mrf.mxu0
        %v2734 = vadd.f32 %v1640, %v2733
        %v2735 = vpop.f32.mrf.mxu0
        %2736 = vmatprep.mubr.f32.mxu0 0.0
        %2737 = vmatmul.mubr.f32.gmra.mxu0 %v2071
        %v2738 = vpop.f32.mrf.mxu0
        %v2739 = vadd.f32 %v1645, %v2738
        %v2740 = vpop.f32.mrf.mxu0
        %2741 = vmatprep.mubr.f32.mxu0 0.0
        %2742 = vmatmul.mubr.f32.gmra.mxu0 %v2074
        %v2743 = vpop.f32.mrf.mxu0
        %v2744 = vadd.f32 %v1650, %v2743
        %v2745 = vpop.f32.mrf.mxu0
        %2746 = vmatprep.mubr.f32.mxu0 0.0
        %2747 = vmatmul.mubr.f32.gmra.mxu0 %v2077
        %v2748 = vpop.f32.mrf.mxu0
        %v2749 = vadd.f32 %v1655, %v2748
        %v2750 = vpop.f32.mrf.mxu0
        %2751 = vmatprep.mubr.f32.mxu0 0.0
        %2752 = vmatmul.mubr.f32.gmra.mxu0 %v2080
        %v2753 = vpop.f32.mrf.mxu0
        %v2754 = vadd.f32 %v1660, %v2753
        %v2755 = vpop.f32.mrf.mxu0
        %2756 = vmatprep.mubr.f32.mxu0 0.0
        %2757 = vmatmul.mubr.f32.gmra.mxu0 %v2083
        %v2758 = vpop.f32.mrf.mxu0
        %v2759 = vadd.f32 %v1665, %v2758
        %v2760 = vpop.f32.mrf.mxu0
        %2761 = vmatprep.mubr.f32.mxu0 0.0
        %2762 = vmatmul.mubr.f32.gmra.mxu0 %v2086
        %v2763 = vpop.f32.mrf.mxu0
        %v2764 = vadd.f32 %v1670, %v2763
        %v2765 = vpop.f32.mrf.mxu0
        %2766 = vmatprep.mubr.f32.mxu0 0.0
        %2767 = vmatmul.mubr.f32.gmra.mxu0 %v2089
        %v2768 = vpop.f32.mrf.mxu0
        %v2769 = vadd.f32 %v1675, %v2768
        %v2770 = vpop.f32.mrf.mxu0
        %2771 = vmatprep.mubr.f32.mxu0 0.0
        %2772 = vmatmul.mubr.f32.gmra.mxu0 %v2092
        %v2773 = vpop.f32.mrf.mxu0
        %v2774 = vadd.f32 %v1680, %v2773
        %v2775 = vpop.f32.mrf.mxu0
        %2776 = vmatprep.mubr.f32.mxu0 0.0
        %2777 = vmatmul.mubr.f32.gmra.mxu0 %v2095
        %v2778 = vpop.f32.mrf.mxu0
        %v2779 = vadd.f32 %v1685, %v2778
        %v2780 = vpop.f32.mrf.mxu0
        %2781 = vmatprep.mubr.f32.mxu0 0.0
        %2782 = vmatmul.mubr.f32.gmra.mxu0 %v2098
        %v2783 = vpop.f32.mrf.mxu0
        %v2784 = vadd.f32 %v1690, %v2783
        %v2785 = vpop.f32.mrf.mxu0
        %2786 = vmatprep.mubr.f32.mxu0 0.0
        %2787 = vmatmul.mubr.f32.gmra.mxu0 %v2101
        %v2788 = vpop.f32.mrf.mxu0
        %v2789 = vadd.f32 %v1695, %v2788
        %v2790 = vpop.f32.mrf.mxu0
        %2791 = vmatprep.mubr.f32.mxu0 0.0
        %2792 = vmatmul.mubr.f32.gmra.mxu0 %v2104
        %v2793 = vpop.f32.mrf.mxu0
        %v2794 = vadd.f32 %v1700, %v2793
        %v2795 = vpop.f32.mrf.mxu0
        %2796 = vmatprep.mubr.f32.mxu0 0.0
        %2797 = vmatmul.mubr.f32.gmra.mxu0 %v2107
        %v2798 = vpop.f32.mrf.mxu0
        %v2799 = vadd.f32 %v1705, %v2798
        %v2800 = vpop.f32.mrf.mxu0
        %2801 = vmatprep.mubr.f32.mxu0 0.0
        %2802 = vmatmul.mubr.f32.gmra.mxu0 %v2110
        %v2803 = vpop.f32.mrf.mxu0
        %v2804 = vadd.f32 %v1710, %v2803
        %v2805 = vpop.f32.mrf.mxu0
        %2806 = vmatprep.mubr.f32.mxu0 0.0
        %2807 = vmatmul.mubr.f32.gmra.mxu0 %v2113
        %v2808 = vpop.f32.mrf.mxu0
        %v2809 = vadd.f32 %v1715, %v2808
        %v2810 = vpop.f32.mrf.mxu0
        %2811 = vmatprep.mubr.f32.mxu0 0.0
        %2812 = vmatmul.mubr.f32.gmra.mxu0 %v2116
        %v2813 = vpop.f32.mrf.mxu0
        %v2814 = vadd.f32 %v1720, %v2813
        %v2815 = vpop.f32.mrf.mxu0
        %2816 = vmatprep.mubr.f32.mxu0 0.0
        %2817 = vmatmul.mubr.f32.gmra.mxu0 %v2119
        %v2818 = vpop.f32.mrf.mxu0
        %v2819 = vadd.f32 %v1725, %v2818
        %v2820 = vpop.f32.mrf.mxu0
        %2821 = vmatprep.mubr.f32.mxu0 0.0
        %2822 = vmatmul.mubr.f32.gmra.mxu0 %v2122
        %v2823 = vpop.f32.mrf.mxu0
        %v2824 = vadd.f32 %v1730, %v2823
        %v2825 = vpop.f32.mrf.mxu0
        %2826 = vmatprep.mubr.f32.mxu0 0.0
        %2827 = vmatmul.mubr.f32.gmra.mxu0 %v2125
        %v2828 = vpop.f32.mrf.mxu0
        %v2829 = vadd.f32 %v1735, %v2828
        %v2830 = vpop.f32.mrf.mxu0
        %2831 = vmatprep.mubr.f32.mxu0 0.0
        %2832 = vmatmul.mubr.f32.gmra.mxu0 %v2128
        %v2833 = vpop.f32.mrf.mxu0
        %v2834 = vadd.f32 %v1740, %v2833
        %v2835 = vpop.f32.mrf.mxu0
        %2836 = vmatprep.mubr.f32.mxu0 0.0
        %2837 = vmatmul.mubr.f32.gmra.mxu0 %v2131
        %v2838 = vpop.f32.mrf.mxu0
        %v2839 = vadd.f32 %v1745, %v2838
        %v2840 = vpop.f32.mrf.mxu0
        %2841 = vdwg.mxu0
        %v2842 = vld [vmem:[%s4] sm:$0x1]
        %v2844 = vlaneseq
        %v2845 = vshrl.u32 %v2844, 7
        %v2846 = vsub.s32 0, %v2845
        %v2847 = vrot.slane %v2842, %v2846
        %v2849 = vadd.f32 %v2204, %v2847
        %v2850 = vadd.f32 %v2209, %v2847
        %v2851 = vadd.f32 %v2214, %v2847
        %v2852 = vadd.f32 %v2219, %v2847
        %v2853 = vadd.f32 %v2224, %v2847
        %v2854 = vadd.f32 %v2229, %v2847
        %v2855 = vadd.f32 %v2234, %v2847
        %v2856 = vadd.f32 %v2239, %v2847
        %v2857 = vadd.f32 %v2244, %v2847
        %v2858 = vadd.f32 %v2249, %v2847
        %v2859 = vadd.f32 %v2254, %v2847
        %v2860 = vadd.f32 %v2259, %v2847
        %v2861 = vadd.f32 %v2264, %v2847
        %v2862 = vadd.f32 %v2269, %v2847
        %v2863 = vadd.f32 %v2274, %v2847
        %v2864 = vadd.f32 %v2279, %v2847
        %v2865 = vadd.f32 %v2284, %v2847
        %v2866 = vadd.f32 %v2289, %v2847
        %v2867 = vadd.f32 %v2294, %v2847
        %v2868 = vadd.f32 %v2299, %v2847
        %v2869 = vadd.f32 %v2304, %v2847
        %v2870 = vadd.f32 %v2309, %v2847
        %v2871 = vadd.f32 %v2314, %v2847
        %v2872 = vadd.f32 %v2319, %v2847
        %v2873 = vadd.f32 %v2324, %v2847
        %v2874 = vadd.f32 %v2329, %v2847
        %v2875 = vadd.f32 %v2334, %v2847
        %v2876 = vadd.f32 %v2339, %v2847
        %v2877 = vadd.f32 %v2344, %v2847
        %v2878 = vadd.f32 %v2349, %v2847
        %v2879 = vadd.f32 %v2354, %v2847
        %v2880 = vadd.f32 %v2359, %v2847
        %v2881 = vadd.f32 %v2364, %v2847
        %v2882 = vadd.f32 %v2369, %v2847
        %v2883 = vadd.f32 %v2374, %v2847
        %v2884 = vadd.f32 %v2379, %v2847
        %v2885 = vadd.f32 %v2384, %v2847
        %v2886 = vadd.f32 %v2389, %v2847
        %v2887 = vadd.f32 %v2394, %v2847
        %v2888 = vadd.f32 %v2399, %v2847
        %v2889 = vadd.f32 %v2404, %v2847
        %v2890 = vadd.f32 %v2409, %v2847
        %v2891 = vadd.f32 %v2414, %v2847
        %v2892 = vadd.f32 %v2419, %v2847
        %v2893 = vadd.f32 %v2424, %v2847
        %v2894 = vadd.f32 %v2429, %v2847
        %v2895 = vadd.f32 %v2434, %v2847
        %v2896 = vadd.f32 %v2439, %v2847
        %v2897 = vadd.f32 %v2444, %v2847
        %v2898 = vadd.f32 %v2449, %v2847
        %v2899 = vadd.f32 %v2454, %v2847
        %v2900 = vadd.f32 %v2459, %v2847
        %v2901 = vadd.f32 %v2464, %v2847
        %v2902 = vadd.f32 %v2469, %v2847
        %v2903 = vadd.f32 %v2474, %v2847
        %v2904 = vadd.f32 %v2479, %v2847
        %v2905 = vadd.f32 %v2484, %v2847
        %v2906 = vadd.f32 %v2489, %v2847
        %v2907 = vadd.f32 %v2494, %v2847
        %v2908 = vadd.f32 %v2499, %v2847
        %v2909 = vadd.f32 %v2504, %v2847
        %v2910 = vadd.f32 %v2509, %v2847
        %v2911 = vadd.f32 %v2514, %v2847
        %v2912 = vadd.f32 %v2519, %v2847
        %v2913 = vadd.f32 %v2524, %v2847
        %v2914 = vadd.f32 %v2529, %v2847
        %v2915 = vadd.f32 %v2534, %v2847
        %v2916 = vadd.f32 %v2539, %v2847
        %v2917 = vadd.f32 %v2544, %v2847
        %v2918 = vadd.f32 %v2549, %v2847
        %v2919 = vadd.f32 %v2554, %v2847
        %v2920 = vadd.f32 %v2559, %v2847
        %v2921 = vadd.f32 %v2564, %v2847
        %v2922 = vadd.f32 %v2569, %v2847
        %v2923 = vadd.f32 %v2574, %v2847
        %v2924 = vadd.f32 %v2579, %v2847
        %v2925 = vadd.f32 %v2584, %v2847
        %v2926 = vadd.f32 %v2589, %v2847
        %v2927 = vadd.f32 %v2594, %v2847
        %v2928 = vadd.f32 %v2599, %v2847
        %v2929 = vadd.f32 %v2604, %v2847
        %v2930 = vadd.f32 %v2609, %v2847
        %v2931 = vadd.f32 %v2614, %v2847
        %v2932 = vadd.f32 %v2619, %v2847
        %v2933 = vadd.f32 %v2624, %v2847
        %v2934 = vadd.f32 %v2629, %v2847
        %v2935 = vadd.f32 %v2634, %v2847
        %v2936 = vadd.f32 %v2639, %v2847
        %v2937 = vadd.f32 %v2644, %v2847
        %v2938 = vadd.f32 %v2649, %v2847
        %v2939 = vadd.f32 %v2654, %v2847
        %v2940 = vadd.f32 %v2659, %v2847
        %v2941 = vadd.f32 %v2664, %v2847
        %v2942 = vadd.f32 %v2669, %v2847
        %v2943 = vadd.f32 %v2674, %v2847
        %v2944 = vadd.f32 %v2679, %v2847
        %v2945 = vadd.f32 %v2684, %v2847
        %v2946 = vadd.f32 %v2689, %v2847
        %v2947 = vadd.f32 %v2694, %v2847
        %v2948 = vadd.f32 %v2699, %v2847
        %v2949 = vadd.f32 %v2704, %v2847
        %v2950 = vadd.f32 %v2709, %v2847
        %v2951 = vadd.f32 %v2714, %v2847
        %v2952 = vadd.f32 %v2719, %v2847
        %v2953 = vadd.f32 %v2724, %v2847
        %v2954 = vadd.f32 %v2729, %v2847
        %v2955 = vadd.f32 %v2734, %v2847
        %v2956 = vadd.f32 %v2739, %v2847
        %v2957 = vadd.f32 %v2744, %v2847
        %v2958 = vadd.f32 %v2749, %v2847
        %v2959 = vadd.f32 %v2754, %v2847
        %v2960 = vadd.f32 %v2759, %v2847
        %v2961 = vadd.f32 %v2764, %v2847
        %v2962 = vadd.f32 %v2769, %v2847
        %v2963 = vadd.f32 %v2774, %v2847
        %v2964 = vadd.f32 %v2779, %v2847
        %v2965 = vadd.f32 %v2784, %v2847
        %v2966 = vadd.f32 %v2789, %v2847
        %v2967 = vadd.f32 %v2794, %v2847
        %v2968 = vadd.f32 %v2799, %v2847
        %v2969 = vadd.f32 %v2804, %v2847
        %v2970 = vadd.f32 %v2809, %v2847
        %v2971 = vadd.f32 %v2814, %v2847
        %v2972 = vadd.f32 %v2819, %v2847
        %v2973 = vadd.f32 %v2824, %v2847
        %v2974 = vadd.f32 %v2829, %v2847
        %v2975 = vadd.f32 %v2834, %v2847
        %v2976 = vadd.f32 %v2839, %v2847
        %v2977 = vmax.f32 %v2849, 0.0
        %v2978 = vmax.f32 %v2850, 0.0
        %v2979 = vmax.f32 %v2851, 0.0
        %v2980 = vmax.f32 %v2852, 0.0
        %v2981 = vmax.f32 %v2853, 0.0
        %v2982 = vmax.f32 %v2854, 0.0
        %v2983 = vmax.f32 %v2855, 0.0
        %v2984 = vmax.f32 %v2856, 0.0
        %v2985 = vmax.f32 %v2857, 0.0
        %v2986 = vmax.f32 %v2858, 0.0
        %v2987 = vmax.f32 %v2859, 0.0
        %v2988 = vmax.f32 %v2860, 0.0
        %v2989 = vmax.f32 %v2861, 0.0
        %v2990 = vmax.f32 %v2862, 0.0
        %v2991 = vmax.f32 %v2863, 0.0
        %v2992 = vmax.f32 %v2864, 0.0
        %v2993 = vmax.f32 %v2865, 0.0
        %v2994 = vmax.f32 %v2866, 0.0
        %v2995 = vmax.f32 %v2867, 0.0
        %v2996 = vmax.f32 %v2868, 0.0
        %v2997 = vmax.f32 %v2869, 0.0
        %v2998 = vmax.f32 %v2870, 0.0
        %v2999 = vmax.f32 %v2871, 0.0
        %v3000 = vmax.f32 %v2872, 0.0
        %v3001 = vmax.f32 %v2873, 0.0
        %v3002 = vmax.f32 %v2874, 0.0
        %v3003 = vmax.f32 %v2875, 0.0
        %v3004 = vmax.f32 %v2876, 0.0
        %v3005 = vmax.f32 %v2877, 0.0
        %v3006 = vmax.f32 %v2878, 0.0
        %v3007 = vmax.f32 %v2879, 0.0
        %v3008 = vmax.f32 %v2880, 0.0
        %v3009 = vmax.f32 %v2881, 0.0
        %v3010 = vmax.f32 %v2882, 0.0
        %v3011 = vmax.f32 %v2883, 0.0
        %v3012 = vmax.f32 %v2884, 0.0
        %v3013 = vmax.f32 %v2885, 0.0
        %v3014 = vmax.f32 %v2886, 0.0
        %v3015 = vmax.f32 %v2887, 0.0
        %v3016 = vmax.f32 %v2888, 0.0
        %v3017 = vmax.f32 %v2889, 0.0
        %v3018 = vmax.f32 %v2890, 0.0
        %v3019 = vmax.f32 %v2891, 0.0
        %v3020 = vmax.f32 %v2892, 0.0
        %v3021 = vmax.f32 %v2893, 0.0
        %v3022 = vmax.f32 %v2894, 0.0
        %v3023 = vmax.f32 %v2895, 0.0
        %v3024 = vmax.f32 %v2896, 0.0
        %v3025 = vmax.f32 %v2897, 0.0
        %v3026 = vmax.f32 %v2898, 0.0
        %v3027 = vmax.f32 %v2899, 0.0
        %v3028 = vmax.f32 %v2900, 0.0
        %v3029 = vmax.f32 %v2901, 0.0
        %v3030 = vmax.f32 %v2902, 0.0
        %v3031 = vmax.f32 %v2903, 0.0
        %v3032 = vmax.f32 %v2904, 0.0
        %v3033 = vmax.f32 %v2905, 0.0
        %v3034 = vmax.f32 %v2906, 0.0
        %v3035 = vmax.f32 %v2907, 0.0
        %v3036 = vmax.f32 %v2908, 0.0
        %v3037 = vmax.f32 %v2909, 0.0
        %v3038 = vmax.f32 %v2910, 0.0
        %v3039 = vmax.f32 %v2911, 0.0
        %v3040 = vmax.f32 %v2912, 0.0
        %v3041 = vmax.f32 %v2913, 0.0
        %v3042 = vmax.f32 %v2914, 0.0
        %v3043 = vmax.f32 %v2915, 0.0
        %v3044 = vmax.f32 %v2916, 0.0
        %v3045 = vmax.f32 %v2917, 0.0
        %v3046 = vmax.f32 %v2918, 0.0
        %v3047 = vmax.f32 %v2919, 0.0
        %v3048 = vmax.f32 %v2920, 0.0
        %v3049 = vmax.f32 %v2921, 0.0
        %v3050 = vmax.f32 %v2922, 0.0
        %v3051 = vmax.f32 %v2923, 0.0
        %v3052 = vmax.f32 %v2924, 0.0
        %v3053 = vmax.f32 %v2925, 0.0
        %v3054 = vmax.f32 %v2926, 0.0
        %v3055 = vmax.f32 %v2927, 0.0
        %v3056 = vmax.f32 %v2928, 0.0
        %v3057 = vmax.f32 %v2929, 0.0
        %v3058 = vmax.f32 %v2930, 0.0
        %v3059 = vmax.f32 %v2931, 0.0
        %v3060 = vmax.f32 %v2932, 0.0
        %v3061 = vmax.f32 %v2933, 0.0
        %v3062 = vmax.f32 %v2934, 0.0
        %v3063 = vmax.f32 %v2935, 0.0
        %v3064 = vmax.f32 %v2936, 0.0
        %v3065 = vmax.f32 %v2937, 0.0
        %v3066 = vmax.f32 %v2938, 0.0
        %v3067 = vmax.f32 %v2939, 0.0
        %v3068 = vmax.f32 %v2940, 0.0
        %v3069 = vmax.f32 %v2941, 0.0
        %v3070 = vmax.f32 %v2942, 0.0
        %v3071 = vmax.f32 %v2943, 0.0
        %v3072 = vmax.f32 %v2944, 0.0
        %v3073 = vmax.f32 %v2945, 0.0
        %v3074 = vmax.f32 %v2946, 0.0
        %v3075 = vmax.f32 %v2947, 0.0
        %v3076 = vmax.f32 %v2948, 0.0
        %v3077 = vmax.f32 %v2949, 0.0
        %v3078 = vmax.f32 %v2950, 0.0
        %v3079 = vmax.f32 %v2951, 0.0
        %v3080 = vmax.f32 %v2952, 0.0
        %v3081 = vmax.f32 %v2953, 0.0
        %v3082 = vmax.f32 %v2954, 0.0
        %v3083 = vmax.f32 %v2955, 0.0
        %v3084 = vmax.f32 %v2956, 0.0
        %v3085 = vmax.f32 %v2957, 0.0
        %v3086 = vmax.f32 %v2958, 0.0
        %v3087 = vmax.f32 %v2959, 0.0
        %v3088 = vmax.f32 %v2960, 0.0
        %v3089 = vmax.f32 %v2961, 0.0
        %v3090 = vmax.f32 %v2962, 0.0
        %v3091 = vmax.f32 %v2963, 0.0
        %v3092 = vmax.f32 %v2964, 0.0
        %v3093 = vmax.f32 %v2965, 0.0
        %v3094 = vmax.f32 %v2966, 0.0
        %v3095 = vmax.f32 %v2967, 0.0
        %v3096 = vmax.f32 %v2968, 0.0
        %v3097 = vmax.f32 %v2969, 0.0
        %v3098 = vmax.f32 %v2970, 0.0
        %v3099 = vmax.f32 %v2971, 0.0
        %v3100 = vmax.f32 %v2972, 0.0
        %v3101 = vmax.f32 %v2973, 0.0
        %v3102 = vmax.f32 %v2974, 0.0
        %v3103 = vmax.f32 %v2975, 0.0
        %v3104 = vmax.f32 %v2976, 0.0
        %v3105 = vld [vmem:[%s5] sm:$0xff]
        %v3106 = vld [vmem:[%s5 + $0x8] sm:$0xff]
        %v3107 = vld [vmem:[%s5 + $0x10] sm:$0xff]
        %v3108 = vld [vmem:[%s5 + $0x18] sm:$0xff]
        %v3109 = vld [vmem:[%s5 + $0x20] sm:$0xff]
        %v3110 = vld [vmem:[%s5 + $0x28] sm:$0xff]
        %v3111 = vld [vmem:[%s5 + $0x30] sm:$0xff]
        %v3112 = vld [vmem:[%s5 + $0x38] sm:$0xff]
        %v3113 = vld [vmem:[%s5 + $0x40] sm:$0xff]
        %v3114 = vld [vmem:[%s5 + $0x48] sm:$0xff]
        %v3115 = vld [vmem:[%s5 + $0x50] sm:$0xff]
        %v3116 = vld [vmem:[%s5 + $0x58] sm:$0xff]
        %v3117 = vld [vmem:[%s5 + $0x60] sm:$0xff]
        %v3118 = vld [vmem:[%s5 + $0x68] sm:$0xff]
        %v3119 = vld [vmem:[%s5 + $0x70] sm:$0xff]
        %v3120 = vld [vmem:[%s5 + $0x78] sm:$0xff]
        %v3121 = vld [vmem:[%s6] sm:$0x1]
        %v3123 = vlaneseq
        %v3124 = vshrl.u32 %v3123, 7
        %v3125 = vsub.s32 0, %v3124
        %v3126 = vrot.slane %v3121, %v3125
        %3128 = vmatprep.subr.mxu0 0.0
        %3129 = vmatpush1.msra.mxu0 %v3120
        %3130 = vmatprep.subr.mxu0 0.0
        %3131 = vmatpush1.msra.mxu0 %v3119
        %3132 = vmatprep.subr.mxu0 0.0
        %3133 = vmatpush1.msra.mxu0 %v3118
        %3134 = vmatprep.subr.mxu0 0.0
        %3135 = vmatpush1.msra.mxu0 %v3117
        %3136 = vmatprep.subr.mxu0 0.0
        %3137 = vmatpush1.msra.mxu0 %v3116
        %3138 = vmatprep.subr.mxu0 0.0
        %3139 = vmatpush1.msra.mxu0 %v3115
        %3140 = vmatprep.subr.mxu0 0.0
        %3141 = vmatpush1.msra.mxu0 %v3114
        %3142 = vmatprep.subr.mxu0 0.0
        %3143 = vmatpush1.msra.mxu0 %v3113
        %3144 = vmatprep.subr.mxu0 0.0
        %3145 = vmatpush1.msra.mxu0 %v3112
        %3146 = vmatprep.subr.mxu0 0.0
        %3147 = vmatpush1.msra.mxu0 %v3111
        %3148 = vmatprep.subr.mxu0 0.0
        %3149 = vmatpush1.msra.mxu0 %v3110
        %3150 = vmatprep.subr.mxu0 0.0
        %3151 = vmatpush1.msra.mxu0 %v3109
        %3152 = vmatprep.subr.mxu0 0.0
        %3153 = vmatpush1.msra.mxu0 %v3108
        %3154 = vmatprep.subr.mxu0 0.0
        %3155 = vmatpush1.msra.mxu0 %v3107
        %3156 = vmatprep.subr.mxu0 0.0
        %3157 = vmatpush1.msra.mxu0 %v3106
        %3158 = vmatprep.subr.mxu0 0.0
        %3159 = vmatpush1.msra.mxu0 %v3105
        %3160 = vmatprep.subr.mxu0 0.0
        %3161 = vmatpush2.msra.mxu0 0.0
        %3162 = vmatprep.subr.mxu0 0.0
        %3163 = vmatpush2.msra.mxu0 0.0
        %3164 = vmatprep.subr.mxu0 0.0
        %3165 = vmatpush2.msra.mxu0 0.0
        %3166 = vmatprep.subr.mxu0 0.0
        %3167 = vmatpush2.msra.mxu0 0.0
        %3168 = vmatprep.subr.mxu0 0.0
        %3169 = vmatpush2.msra.mxu0 0.0
        %3170 = vmatprep.subr.mxu0 0.0
        %3171 = vmatpush2.msra.mxu0 0.0
        %3172 = vmatprep.subr.mxu0 0.0
        %3173 = vmatpush2.msra.mxu0 0.0
        %3174 = vmatprep.subr.mxu0 0.0
        %3175 = vmatpush2.msra.mxu0 0.0
        %3176 = vmatprep.subr.mxu0 0.0
        %3177 = vmatpush2.msra.mxu0 0.0
        %3178 = vmatprep.subr.mxu0 0.0
        %3179 = vmatpush2.msra.mxu0 0.0
        %3180 = vmatprep.subr.mxu0 0.0
        %3181 = vmatpush2.msra.mxu0 0.0
        %3182 = vmatprep.subr.mxu0 0.0
        %3183 = vmatpush2.msra.mxu0 0.0
        %3184 = vmatprep.subr.mxu0 0.0
        %3185 = vmatpush2.msra.mxu0 0.0
        %3186 = vmatprep.subr.mxu0 0.0
        %3187 = vmatpush2.msra.mxu0 0.0
        %3188 = vmatprep.subr.mxu0 0.0
        %3189 = vmatpush2.msra.mxu0 0.0
        %3190 = vmatprep.subr.mxu0 0.0
        %3191 = vmatpush2.msra.mxu0 0.0
        %3192 = vmatprep.mubr.f32.mxu0 0.0
        %3193 = vmatmul.mubr.f32.gmra.mxu0 %v2977
        %v3194 = vpop.f32.mrf.mxu0
        %v3195 = vadd.f32 %v3126, %v3194
        %v3196 = vpop.f32.mrf.mxu0
        %3197 = vmatprep.mubr.f32.mxu0 0.0
        %3198 = vmatmul.mubr.f32.gmra.mxu0 %v2978
        %v3199 = vpop.f32.mrf.mxu0
        %v3200 = vadd.f32 %v3126, %v3199
        %v3201 = vpop.f32.mrf.mxu0
        %3202 = vmatprep.mubr.f32.mxu0 0.0
        %3203 = vmatmul.mubr.f32.gmra.mxu0 %v2979
        %v3204 = vpop.f32.mrf.mxu0
        %v3205 = vadd.f32 %v3126, %v3204
        %v3206 = vpop.f32.mrf.mxu0
        %3207 = vmatprep.mubr.f32.mxu0 0.0
        %3208 = vmatmul.mubr.f32.gmra.mxu0 %v2980
        %v3209 = vpop.f32.mrf.mxu0
        %v3210 = vadd.f32 %v3126, %v3209
        %v3211 = vpop.f32.mrf.mxu0
        %3212 = vmatprep.mubr.f32.mxu0 0.0
        %3213 = vmatmul.mubr.f32.gmra.mxu0 %v2981
        %v3214 = vpop.f32.mrf.mxu0
        %v3215 = vadd.f32 %v3126, %v3214
        %v3216 = vpop.f32.mrf.mxu0
        %3217 = vmatprep.mubr.f32.mxu0 0.0
        %3218 = vmatmul.mubr.f32.gmra.mxu0 %v2982
        %v3219 = vpop.f32.mrf.mxu0
        %v3220 = vadd.f32 %v3126, %v3219
        %v3221 = vpop.f32.mrf.mxu0
        %3222 = vmatprep.mubr.f32.mxu0 0.0
        %3223 = vmatmul.mubr.f32.gmra.mxu0 %v2983
        %v3224 = vpop.f32.mrf.mxu0
        %v3225 = vadd.f32 %v3126, %v3224
        %v3226 = vpop.f32.mrf.mxu0
        %3227 = vmatprep.mubr.f32.mxu0 0.0
        %3228 = vmatmul.mubr.f32.gmra.mxu0 %v2984
        %v3229 = vpop.f32.mrf.mxu0
        %v3230 = vadd.f32 %v3126, %v3229
        %v3231 = vpop.f32.mrf.mxu0
        %3232 = vmatprep.mubr.f32.mxu0 0.0
        %3233 = vmatmul.mubr.f32.gmra.mxu0 %v2985
        %v3234 = vpop.f32.mrf.mxu0
        %v3235 = vadd.f32 %v3126, %v3234
        %v3236 = vpop.f32.mrf.mxu0
        %3237 = vmatprep.mubr.f32.mxu0 0.0
        %3238 = vmatmul.mubr.f32.gmra.mxu0 %v2986
        %v3239 = vpop.f32.mrf.mxu0
        %v3240 = vadd.f32 %v3126, %v3239
        %v3241 = vpop.f32.mrf.mxu0
        %3242 = vmatprep.mubr.f32.mxu0 0.0
        %3243 = vmatmul.mubr.f32.gmra.mxu0 %v2987
        %v3244 = vpop.f32.mrf.mxu0
        %v3245 = vadd.f32 %v3126, %v3244
        %v3246 = vpop.f32.mrf.mxu0
        %3247 = vmatprep.mubr.f32.mxu0 0.0
        %3248 = vmatmul.mubr.f32.gmra.mxu0 %v2988
        %v3249 = vpop.f32.mrf.mxu0
        %v3250 = vadd.f32 %v3126, %v3249
        %v3251 = vpop.f32.mrf.mxu0
        %3252 = vmatprep.mubr.f32.mxu0 0.0
        %3253 = vmatmul.mubr.f32.gmra.mxu0 %v2989
        %v3254 = vpop.f32.mrf.mxu0
        %v3255 = vadd.f32 %v3126, %v3254
        %v3256 = vpop.f32.mrf.mxu0
        %3257 = vmatprep.mubr.f32.mxu0 0.0
        %3258 = vmatmul.mubr.f32.gmra.mxu0 %v2990
        %v3259 = vpop.f32.mrf.mxu0
        %v3260 = vadd.f32 %v3126, %v3259
        %v3261 = vpop.f32.mrf.mxu0
        %3262 = vmatprep.mubr.f32.mxu0 0.0
        %3263 = vmatmul.mubr.f32.gmra.mxu0 %v2991
        %v3264 = vpop.f32.mrf.mxu0
        %v3265 = vadd.f32 %v3126, %v3264
        %v3266 = vpop.f32.mrf.mxu0
        %3267 = vmatprep.mubr.f32.mxu0 0.0
        %3268 = vmatmul.mubr.f32.gmra.mxu0 %v2992
        %v3269 = vpop.f32.mrf.mxu0
        %v3270 = vadd.f32 %v3126, %v3269
        %v3271 = vpop.f32.mrf.mxu0
        %3272 = vmatprep.mubr.f32.mxu0 0.0
        %3273 = vmatmul.mubr.f32.gmra.mxu0 %v2993
        %v3274 = vpop.f32.mrf.mxu0
        %v3275 = vadd.f32 %v3126, %v3274
        %v3276 = vpop.f32.mrf.mxu0
        %3277 = vmatprep.mubr.f32.mxu0 0.0
        %3278 = vmatmul.mubr.f32.gmra.mxu0 %v2994
        %v3279 = vpop.f32.mrf.mxu0
        %v3280 = vadd.f32 %v3126, %v3279
        %v3281 = vpop.f32.mrf.mxu0
        %3282 = vmatprep.mubr.f32.mxu0 0.0
        %3283 = vmatmul.mubr.f32.gmra.mxu0 %v2995
        %v3284 = vpop.f32.mrf.mxu0
        %v3285 = vadd.f32 %v3126, %v3284
        %v3286 = vpop.f32.mrf.mxu0
        %3287 = vmatprep.mubr.f32.mxu0 0.0
        %3288 = vmatmul.mubr.f32.gmra.mxu0 %v2996
        %v3289 = vpop.f32.mrf.mxu0
        %v3290 = vadd.f32 %v3126, %v3289
        %v3291 = vpop.f32.mrf.mxu0
        %3292 = vmatprep.mubr.f32.mxu0 0.0
        %3293 = vmatmul.mubr.f32.gmra.mxu0 %v2997
        %v3294 = vpop.f32.mrf.mxu0
        %v3295 = vadd.f32 %v3126, %v3294
        %v3296 = vpop.f32.mrf.mxu0
        %3297 = vmatprep.mubr.f32.mxu0 0.0
        %3298 = vmatmul.mubr.f32.gmra.mxu0 %v2998
        %v3299 = vpop.f32.mrf.mxu0
        %v3300 = vadd.f32 %v3126, %v3299
        %v3301 = vpop.f32.mrf.mxu0
        %3302 = vmatprep.mubr.f32.mxu0 0.0
        %3303 = vmatmul.mubr.f32.gmra.mxu0 %v2999
        %v3304 = vpop.f32.mrf.mxu0
        %v3305 = vadd.f32 %v3126, %v3304
        %v3306 = vpop.f32.mrf.mxu0
        %3307 = vmatprep.mubr.f32.mxu0 0.0
        %3308 = vmatmul.mubr.f32.gmra.mxu0 %v3000
        %v3309 = vpop.f32.mrf.mxu0
        %v3310 = vadd.f32 %v3126, %v3309
        %v3311 = vpop.f32.mrf.mxu0
        %3312 = vmatprep.mubr.f32.mxu0 0.0
        %3313 = vmatmul.mubr.f32.gmra.mxu0 %v3001
        %v3314 = vpop.f32.mrf.mxu0
        %v3315 = vadd.f32 %v3126, %v3314
        %v3316 = vpop.f32.mrf.mxu0
        %3317 = vmatprep.mubr.f32.mxu0 0.0
        %3318 = vmatmul.mubr.f32.gmra.mxu0 %v3002
        %v3319 = vpop.f32.mrf.mxu0
        %v3320 = vadd.f32 %v3126, %v3319
        %v3321 = vpop.f32.mrf.mxu0
        %3322 = vmatprep.mubr.f32.mxu0 0.0
        %3323 = vmatmul.mubr.f32.gmra.mxu0 %v3003
        %v3324 = vpop.f32.mrf.mxu0
        %v3325 = vadd.f32 %v3126, %v3324
        %v3326 = vpop.f32.mrf.mxu0
        %3327 = vmatprep.mubr.f32.mxu0 0.0
        %3328 = vmatmul.mubr.f32.gmra.mxu0 %v3004
        %v3329 = vpop.f32.mrf.mxu0
        %v3330 = vadd.f32 %v3126, %v3329
        %v3331 = vpop.f32.mrf.mxu0
        %3332 = vmatprep.mubr.f32.mxu0 0.0
        %3333 = vmatmul.mubr.f32.gmra.mxu0 %v3005
        %v3334 = vpop.f32.mrf.mxu0
        %v3335 = vadd.f32 %v3126, %v3334
        %v3336 = vpop.f32.mrf.mxu0
        %3337 = vmatprep.mubr.f32.mxu0 0.0
        %3338 = vmatmul.mubr.f32.gmra.mxu0 %v3006
        %v3339 = vpop.f32.mrf.mxu0
        %v3340 = vadd.f32 %v3126, %v3339
        %v3341 = vpop.f32.mrf.mxu0
        %3342 = vmatprep.mubr.f32.mxu0 0.0
        %3343 = vmatmul.mubr.f32.gmra.mxu0 %v3007
        %v3344 = vpop.f32.mrf.mxu0
        %v3345 = vadd.f32 %v3126, %v3344
        %v3346 = vpop.f32.mrf.mxu0
        %3347 = vmatprep.mubr.f32.mxu0 0.0
        %3348 = vmatmul.mubr.f32.gmra.mxu0 %v3008
        %v3349 = vpop.f32.mrf.mxu0
        %v3350 = vadd.f32 %v3126, %v3349
        %v3351 = vpop.f32.mrf.mxu0
        %3352 = vmatprep.mubr.f32.mxu0 0.0
        %3353 = vmatmul.mubr.f32.gmra.mxu0 %v3009
        %v3354 = vpop.f32.mrf.mxu0
        %v3355 = vadd.f32 %v3126, %v3354
        %v3356 = vpop.f32.mrf.mxu0
        %3357 = vmatprep.mubr.f32.mxu0 0.0
        %3358 = vmatmul.mubr.f32.gmra.mxu0 %v3010
        %v3359 = vpop.f32.mrf.mxu0
        %v3360 = vadd.f32 %v3126, %v3359
        %v3361 = vpop.f32.mrf.mxu0
        %3362 = vmatprep.mubr.f32.mxu0 0.0
        %3363 = vmatmul.mubr.f32.gmra.mxu0 %v3011
        %v3364 = vpop.f32.mrf.mxu0
        %v3365 = vadd.f32 %v3126, %v3364
        %v3366 = vpop.f32.mrf.mxu0
        %3367 = vmatprep.mubr.f32.mxu0 0.0
        %3368 = vmatmul.mubr.f32.gmra.mxu0 %v3012
        %v3369 = vpop.f32.mrf.mxu0
        %v3370 = vadd.f32 %v3126, %v3369
        %v3371 = vpop.f32.mrf.mxu0
        %3372 = vmatprep.mubr.f32.mxu0 0.0
        %3373 = vmatmul.mubr.f32.gmra.mxu0 %v3013
        %v3374 = vpop.f32.mrf.mxu0
        %v3375 = vadd.f32 %v3126, %v3374
        %v3376 = vpop.f32.mrf.mxu0
        %3377 = vmatprep.mubr.f32.mxu0 0.0
        %3378 = vmatmul.mubr.f32.gmra.mxu0 %v3014
        %v3379 = vpop.f32.mrf.mxu0
        %v3380 = vadd.f32 %v3126, %v3379
        %v3381 = vpop.f32.mrf.mxu0
        %3382 = vmatprep.mubr.f32.mxu0 0.0
        %3383 = vmatmul.mubr.f32.gmra.mxu0 %v3015
        %v3384 = vpop.f32.mrf.mxu0
        %v3385 = vadd.f32 %v3126, %v3384
        %v3386 = vpop.f32.mrf.mxu0
        %3387 = vmatprep.mubr.f32.mxu0 0.0
        %3388 = vmatmul.mubr.f32.gmra.mxu0 %v3016
        %v3389 = vpop.f32.mrf.mxu0
        %v3390 = vadd.f32 %v3126, %v3389
        %v3391 = vpop.f32.mrf.mxu0
        %3392 = vmatprep.mubr.f32.mxu0 0.0
        %3393 = vmatmul.mubr.f32.gmra.mxu0 %v3017
        %v3394 = vpop.f32.mrf.mxu0
        %v3395 = vadd.f32 %v3126, %v3394
        %v3396 = vpop.f32.mrf.mxu0
        %3397 = vmatprep.mubr.f32.mxu0 0.0
        %3398 = vmatmul.mubr.f32.gmra.mxu0 %v3018
        %v3399 = vpop.f32.mrf.mxu0
        %v3400 = vadd.f32 %v3126, %v3399
        %v3401 = vpop.f32.mrf.mxu0
        %3402 = vmatprep.mubr.f32.mxu0 0.0
        %3403 = vmatmul.mubr.f32.gmra.mxu0 %v3019
        %v3404 = vpop.f32.mrf.mxu0
        %v3405 = vadd.f32 %v3126, %v3404
        %v3406 = vpop.f32.mrf.mxu0
        %3407 = vmatprep.mubr.f32.mxu0 0.0
        %3408 = vmatmul.mubr.f32.gmra.mxu0 %v3020
        %v3409 = vpop.f32.mrf.mxu0
        %v3410 = vadd.f32 %v3126, %v3409
        %v3411 = vpop.f32.mrf.mxu0
        %3412 = vmatprep.mubr.f32.mxu0 0.0
        %3413 = vmatmul.mubr.f32.gmra.mxu0 %v3021
        %v3414 = vpop.f32.mrf.mxu0
        %v3415 = vadd.f32 %v3126, %v3414
        %v3416 = vpop.f32.mrf.mxu0
        %3417 = vmatprep.mubr.f32.mxu0 0.0
        %3418 = vmatmul.mubr.f32.gmra.mxu0 %v3022
        %v3419 = vpop.f32.mrf.mxu0
        %v3420 = vadd.f32 %v3126, %v3419
        %v3421 = vpop.f32.mrf.mxu0
        %3422 = vmatprep.mubr.f32.mxu0 0.0
        %3423 = vmatmul.mubr.f32.gmra.mxu0 %v3023
        %v3424 = vpop.f32.mrf.mxu0
        %v3425 = vadd.f32 %v3126, %v3424
        %v3426 = vpop.f32.mrf.mxu0
        %3427 = vmatprep.mubr.f32.mxu0 0.0
        %3428 = vmatmul.mubr.f32.gmra.mxu0 %v3024
        %v3429 = vpop.f32.mrf.mxu0
        %v3430 = vadd.f32 %v3126, %v3429
        %v3431 = vpop.f32.mrf.mxu0
        %3432 = vmatprep.mubr.f32.mxu0 0.0
        %3433 = vmatmul.mubr.f32.gmra.mxu0 %v3025
        %v3434 = vpop.f32.mrf.mxu0
        %v3435 = vadd.f32 %v3126, %v3434
        %v3436 = vpop.f32.mrf.mxu0
        %3437 = vmatprep.mubr.f32.mxu0 0.0
        %3438 = vmatmul.mubr.f32.gmra.mxu0 %v3026
        %v3439 = vpop.f32.mrf.mxu0
        %v3440 = vadd.f32 %v3126, %v3439
        %v3441 = vpop.f32.mrf.mxu0
        %3442 = vmatprep.mubr.f32.mxu0 0.0
        %3443 = vmatmul.mubr.f32.gmra.mxu0 %v3027
        %v3444 = vpop.f32.mrf.mxu0
        %v3445 = vadd.f32 %v3126, %v3444
        %v3446 = vpop.f32.mrf.mxu0
        %3447 = vmatprep.mubr.f32.mxu0 0.0
        %3448 = vmatmul.mubr.f32.gmra.mxu0 %v3028
        %v3449 = vpop.f32.mrf.mxu0
        %v3450 = vadd.f32 %v3126, %v3449
        %v3451 = vpop.f32.mrf.mxu0
        %3452 = vmatprep.mubr.f32.mxu0 0.0
        %3453 = vmatmul.mubr.f32.gmra.mxu0 %v3029
        %v3454 = vpop.f32.mrf.mxu0
        %v3455 = vadd.f32 %v3126, %v3454
        %v3456 = vpop.f32.mrf.mxu0
        %3457 = vmatprep.mubr.f32.mxu0 0.0
        %3458 = vmatmul.mubr.f32.gmra.mxu0 %v3030
        %v3459 = vpop.f32.mrf.mxu0
        %v3460 = vadd.f32 %v3126, %v3459
        %v3461 = vpop.f32.mrf.mxu0
        %3462 = vmatprep.mubr.f32.mxu0 0.0
        %3463 = vmatmul.mubr.f32.gmra.mxu0 %v3031
        %v3464 = vpop.f32.mrf.mxu0
        %v3465 = vadd.f32 %v3126, %v3464
        %v3466 = vpop.f32.mrf.mxu0
        %3467 = vmatprep.mubr.f32.mxu0 0.0
        %3468 = vmatmul.mubr.f32.gmra.mxu0 %v3032
        %v3469 = vpop.f32.mrf.mxu0
        %v3470 = vadd.f32 %v3126, %v3469
        %v3471 = vpop.f32.mrf.mxu0
        %3472 = vmatprep.mubr.f32.mxu0 0.0
        %3473 = vmatmul.mubr.f32.gmra.mxu0 %v3033
        %v3474 = vpop.f32.mrf.mxu0
        %v3475 = vadd.f32 %v3126, %v3474
        %v3476 = vpop.f32.mrf.mxu0
        %3477 = vmatprep.mubr.f32.mxu0 0.0
        %3478 = vmatmul.mubr.f32.gmra.mxu0 %v3034
        %v3479 = vpop.f32.mrf.mxu0
        %v3480 = vadd.f32 %v3126, %v3479
        %v3481 = vpop.f32.mrf.mxu0
        %3482 = vmatprep.mubr.f32.mxu0 0.0
        %3483 = vmatmul.mubr.f32.gmra.mxu0 %v3035
        %v3484 = vpop.f32.mrf.mxu0
        %v3485 = vadd.f32 %v3126, %v3484
        %v3486 = vpop.f32.mrf.mxu0
        %3487 = vmatprep.mubr.f32.mxu0 0.0
        %3488 = vmatmul.mubr.f32.gmra.mxu0 %v3036
        %v3489 = vpop.f32.mrf.mxu0
        %v3490 = vadd.f32 %v3126, %v3489
        %v3491 = vpop.f32.mrf.mxu0
        %3492 = vmatprep.mubr.f32.mxu0 0.0
        %3493 = vmatmul.mubr.f32.gmra.mxu0 %v3037
        %v3494 = vpop.f32.mrf.mxu0
        %v3495 = vadd.f32 %v3126, %v3494
        %v3496 = vpop.f32.mrf.mxu0
        %3497 = vmatprep.mubr.f32.mxu0 0.0
        %3498 = vmatmul.mubr.f32.gmra.mxu0 %v3038
        %v3499 = vpop.f32.mrf.mxu0
        %v3500 = vadd.f32 %v3126, %v3499
        %v3501 = vpop.f32.mrf.mxu0
        %3502 = vmatprep.mubr.f32.mxu0 0.0
        %3503 = vmatmul.mubr.f32.gmra.mxu0 %v3039
        %v3504 = vpop.f32.mrf.mxu0
        %v3505 = vadd.f32 %v3126, %v3504
        %v3506 = vpop.f32.mrf.mxu0
        %3507 = vmatprep.mubr.f32.mxu0 0.0
        %3508 = vmatmul.mubr.f32.gmra.mxu0 %v3040
        %v3509 = vpop.f32.mrf.mxu0
        %v3510 = vadd.f32 %v3126, %v3509
        %v3511 = vpop.f32.mrf.mxu0
        %3512 = vmatprep.mubr.f32.mxu0 0.0
        %3513 = vmatmul.mubr.f32.gmra.mxu0 %v3041
        %v3514 = vpop.f32.mrf.mxu0
        %v3515 = vadd.f32 %v3126, %v3514
        %v3516 = vpop.f32.mrf.mxu0
        %3517 = vmatprep.mubr.f32.mxu0 0.0
        %3518 = vmatmul.mubr.f32.gmra.mxu0 %v3042
        %v3519 = vpop.f32.mrf.mxu0
        %v3520 = vadd.f32 %v3126, %v3519
        %v3521 = vpop.f32.mrf.mxu0
        %3522 = vmatprep.mubr.f32.mxu0 0.0
        %3523 = vmatmul.mubr.f32.gmra.mxu0 %v3043
        %v3524 = vpop.f32.mrf.mxu0
        %v3525 = vadd.f32 %v3126, %v3524
        %v3526 = vpop.f32.mrf.mxu0
        %3527 = vmatprep.mubr.f32.mxu0 0.0
        %3528 = vmatmul.mubr.f32.gmra.mxu0 %v3044
        %v3529 = vpop.f32.mrf.mxu0
        %v3530 = vadd.f32 %v3126, %v3529
        %v3531 = vpop.f32.mrf.mxu0
        %3532 = vmatprep.mubr.f32.mxu0 0.0
        %3533 = vmatmul.mubr.f32.gmra.mxu0 %v3045
        %v3534 = vpop.f32.mrf.mxu0
        %v3535 = vadd.f32 %v3126, %v3534
        %v3536 = vpop.f32.mrf.mxu0
        %3537 = vmatprep.mubr.f32.mxu0 0.0
        %3538 = vmatmul.mubr.f32.gmra.mxu0 %v3046
        %v3539 = vpop.f32.mrf.mxu0
        %v3540 = vadd.f32 %v3126, %v3539
        %v3541 = vpop.f32.mrf.mxu0
        %3542 = vmatprep.mubr.f32.mxu0 0.0
        %3543 = vmatmul.mubr.f32.gmra.mxu0 %v3047
        %v3544 = vpop.f32.mrf.mxu0
        %v3545 = vadd.f32 %v3126, %v3544
        %v3546 = vpop.f32.mrf.mxu0
        %3547 = vmatprep.mubr.f32.mxu0 0.0
        %3548 = vmatmul.mubr.f32.gmra.mxu0 %v3048
        %v3549 = vpop.f32.mrf.mxu0
        %v3550 = vadd.f32 %v3126, %v3549
        %v3551 = vpop.f32.mrf.mxu0
        %3552 = vmatprep.mubr.f32.mxu0 0.0
        %3553 = vmatmul.mubr.f32.gmra.mxu0 %v3049
        %v3554 = vpop.f32.mrf.mxu0
        %v3555 = vadd.f32 %v3126, %v3554
        %v3556 = vpop.f32.mrf.mxu0
        %3557 = vmatprep.mubr.f32.mxu0 0.0
        %3558 = vmatmul.mubr.f32.gmra.mxu0 %v3050
        %v3559 = vpop.f32.mrf.mxu0
        %v3560 = vadd.f32 %v3126, %v3559
        %v3561 = vpop.f32.mrf.mxu0
        %3562 = vmatprep.mubr.f32.mxu0 0.0
        %3563 = vmatmul.mubr.f32.gmra.mxu0 %v3051
        %v3564 = vpop.f32.mrf.mxu0
        %v3565 = vadd.f32 %v3126, %v3564
        %v3566 = vpop.f32.mrf.mxu0
        %3567 = vmatprep.mubr.f32.mxu0 0.0
        %3568 = vmatmul.mubr.f32.gmra.mxu0 %v3052
        %v3569 = vpop.f32.mrf.mxu0
        %v3570 = vadd.f32 %v3126, %v3569
        %v3571 = vpop.f32.mrf.mxu0
        %3572 = vmatprep.mubr.f32.mxu0 0.0
        %3573 = vmatmul.mubr.f32.gmra.mxu0 %v3053
        %v3574 = vpop.f32.mrf.mxu0
        %v3575 = vadd.f32 %v3126, %v3574
        %v3576 = vpop.f32.mrf.mxu0
        %3577 = vmatprep.mubr.f32.mxu0 0.0
        %3578 = vmatmul.mubr.f32.gmra.mxu0 %v3054
        %v3579 = vpop.f32.mrf.mxu0
        %v3580 = vadd.f32 %v3126, %v3579
        %v3581 = vpop.f32.mrf.mxu0
        %3582 = vmatprep.mubr.f32.mxu0 0.0
        %3583 = vmatmul.mubr.f32.gmra.mxu0 %v3055
        %v3584 = vpop.f32.mrf.mxu0
        %v3585 = vadd.f32 %v3126, %v3584
        %v3586 = vpop.f32.mrf.mxu0
        %3587 = vmatprep.mubr.f32.mxu0 0.0
        %3588 = vmatmul.mubr.f32.gmra.mxu0 %v3056
        %v3589 = vpop.f32.mrf.mxu0
        %v3590 = vadd.f32 %v3126, %v3589
        %v3591 = vpop.f32.mrf.mxu0
        %3592 = vmatprep.mubr.f32.mxu0 0.0
        %3593 = vmatmul.mubr.f32.gmra.mxu0 %v3057
        %v3594 = vpop.f32.mrf.mxu0
        %v3595 = vadd.f32 %v3126, %v3594
        %v3596 = vpop.f32.mrf.mxu0
        %3597 = vmatprep.mubr.f32.mxu0 0.0
        %3598 = vmatmul.mubr.f32.gmra.mxu0 %v3058
        %v3599 = vpop.f32.mrf.mxu0
        %v3600 = vadd.f32 %v3126, %v3599
        %v3601 = vpop.f32.mrf.mxu0
        %3602 = vmatprep.mubr.f32.mxu0 0.0
        %3603 = vmatmul.mubr.f32.gmra.mxu0 %v3059
        %v3604 = vpop.f32.mrf.mxu0
        %v3605 = vadd.f32 %v3126, %v3604
        %v3606 = vpop.f32.mrf.mxu0
        %3607 = vmatprep.mubr.f32.mxu0 0.0
        %3608 = vmatmul.mubr.f32.gmra.mxu0 %v3060
        %v3609 = vpop.f32.mrf.mxu0
        %v3610 = vadd.f32 %v3126, %v3609
        %v3611 = vpop.f32.mrf.mxu0
        %3612 = vmatprep.mubr.f32.mxu0 0.0
        %3613 = vmatmul.mubr.f32.gmra.mxu0 %v3061
        %v3614 = vpop.f32.mrf.mxu0
        %v3615 = vadd.f32 %v3126, %v3614
        %v3616 = vpop.f32.mrf.mxu0
        %3617 = vmatprep.mubr.f32.mxu0 0.0
        %3618 = vmatmul.mubr.f32.gmra.mxu0 %v3062
        %v3619 = vpop.f32.mrf.mxu0
        %v3620 = vadd.f32 %v3126, %v3619
        %v3621 = vpop.f32.mrf.mxu0
        %3622 = vmatprep.mubr.f32.mxu0 0.0
        %3623 = vmatmul.mubr.f32.gmra.mxu0 %v3063
        %v3624 = vpop.f32.mrf.mxu0
        %v3625 = vadd.f32 %v3126, %v3624
        %v3626 = vpop.f32.mrf.mxu0
        %3627 = vmatprep.mubr.f32.mxu0 0.0
        %3628 = vmatmul.mubr.f32.gmra.mxu0 %v3064
        %v3629 = vpop.f32.mrf.mxu0
        %v3630 = vadd.f32 %v3126, %v3629
        %v3631 = vpop.f32.mrf.mxu0
        %3632 = vmatprep.mubr.f32.mxu0 0.0
        %3633 = vmatmul.mubr.f32.gmra.mxu0 %v3065
        %v3634 = vpop.f32.mrf.mxu0
        %v3635 = vadd.f32 %v3126, %v3634
        %v3636 = vpop.f32.mrf.mxu0
        %3637 = vmatprep.mubr.f32.mxu0 0.0
        %3638 = vmatmul.mubr.f32.gmra.mxu0 %v3066
        %v3639 = vpop.f32.mrf.mxu0
        %v3640 = vadd.f32 %v3126, %v3639
        %v3641 = vpop.f32.mrf.mxu0
        %3642 = vmatprep.mubr.f32.mxu0 0.0
        %3643 = vmatmul.mubr.f32.gmra.mxu0 %v3067
        %v3644 = vpop.f32.mrf.mxu0
        %v3645 = vadd.f32 %v3126, %v3644
        %v3646 = vpop.f32.mrf.mxu0
        %3647 = vmatprep.mubr.f32.mxu0 0.0
        %3648 = vmatmul.mubr.f32.gmra.mxu0 %v3068
        %v3649 = vpop.f32.mrf.mxu0
        %v3650 = vadd.f32 %v3126, %v3649
        %v3651 = vpop.f32.mrf.mxu0
        %3652 = vmatprep.mubr.f32.mxu0 0.0
        %3653 = vmatmul.mubr.f32.gmra.mxu0 %v3069
        %v3654 = vpop.f32.mrf.mxu0
        %v3655 = vadd.f32 %v3126, %v3654
        %v3656 = vpop.f32.mrf.mxu0
        %3657 = vmatprep.mubr.f32.mxu0 0.0
        %3658 = vmatmul.mubr.f32.gmra.mxu0 %v3070
        %v3659 = vpop.f32.mrf.mxu0
        %v3660 = vadd.f32 %v3126, %v3659
        %v3661 = vpop.f32.mrf.mxu0
        %3662 = vmatprep.mubr.f32.mxu0 0.0
        %3663 = vmatmul.mubr.f32.gmra.mxu0 %v3071
        %v3664 = vpop.f32.mrf.mxu0
        %v3665 = vadd.f32 %v3126, %v3664
        %v3666 = vpop.f32.mrf.mxu0
        %3667 = vmatprep.mubr.f32.mxu0 0.0
        %3668 = vmatmul.mubr.f32.gmra.mxu0 %v3072
        %v3669 = vpop.f32.mrf.mxu0
        %v3670 = vadd.f32 %v3126, %v3669
        %v3671 = vpop.f32.mrf.mxu0
        %3672 = vmatprep.mubr.f32.mxu0 0.0
        %3673 = vmatmul.mubr.f32.gmra.mxu0 %v3073
        %v3674 = vpop.f32.mrf.mxu0
        %v3675 = vadd.f32 %v3126, %v3674
        %v3676 = vpop.f32.mrf.mxu0
        %3677 = vmatprep.mubr.f32.mxu0 0.0
        %3678 = vmatmul.mubr.f32.gmra.mxu0 %v3074
        %v3679 = vpop.f32.mrf.mxu0
        %v3680 = vadd.f32 %v3126, %v3679
        %v3681 = vpop.f32.mrf.mxu0
        %3682 = vmatprep.mubr.f32.mxu0 0.0
        %3683 = vmatmul.mubr.f32.gmra.mxu0 %v3075
        %v3684 = vpop.f32.mrf.mxu0
        %v3685 = vadd.f32 %v3126, %v3684
        %v3686 = vpop.f32.mrf.mxu0
        %3687 = vmatprep.mubr.f32.mxu0 0.0
        %3688 = vmatmul.mubr.f32.gmra.mxu0 %v3076
        %v3689 = vpop.f32.mrf.mxu0
        %v3690 = vadd.f32 %v3126, %v3689
        %v3691 = vpop.f32.mrf.mxu0
        %3692 = vmatprep.mubr.f32.mxu0 0.0
        %3693 = vmatmul.mubr.f32.gmra.mxu0 %v3077
        %v3694 = vpop.f32.mrf.mxu0
        %v3695 = vadd.f32 %v3126, %v3694
        %v3696 = vpop.f32.mrf.mxu0
        %3697 = vmatprep.mubr.f32.mxu0 0.0
        %3698 = vmatmul.mubr.f32.gmra.mxu0 %v3078
        %v3699 = vpop.f32.mrf.mxu0
        %v3700 = vadd.f32 %v3126, %v3699
        %v3701 = vpop.f32.mrf.mxu0
        %3702 = vmatprep.mubr.f32.mxu0 0.0
        %3703 = vmatmul.mubr.f32.gmra.mxu0 %v3079
        %v3704 = vpop.f32.mrf.mxu0
        %v3705 = vadd.f32 %v3126, %v3704
        %v3706 = vpop.f32.mrf.mxu0
        %3707 = vmatprep.mubr.f32.mxu0 0.0
        %3708 = vmatmul.mubr.f32.gmra.mxu0 %v3080
        %v3709 = vpop.f32.mrf.mxu0
        %v3710 = vadd.f32 %v3126, %v3709
        %v3711 = vpop.f32.mrf.mxu0
        %3712 = vmatprep.mubr.f32.mxu0 0.0
        %3713 = vmatmul.mubr.f32.gmra.mxu0 %v3081
        %v3714 = vpop.f32.mrf.mxu0
        %v3715 = vadd.f32 %v3126, %v3714
        %v3716 = vpop.f32.mrf.mxu0
        %3717 = vmatprep.mubr.f32.mxu0 0.0
        %3718 = vmatmul.mubr.f32.gmra.mxu0 %v3082
        %v3719 = vpop.f32.mrf.mxu0
        %v3720 = vadd.f32 %v3126, %v3719
        %v3721 = vpop.f32.mrf.mxu0
        %3722 = vmatprep.mubr.f32.mxu0 0.0
        %3723 = vmatmul.mubr.f32.gmra.mxu0 %v3083
        %v3724 = vpop.f32.mrf.mxu0
        %v3725 = vadd.f32 %v3126, %v3724
        %v3726 = vpop.f32.mrf.mxu0
        %3727 = vmatprep.mubr.f32.mxu0 0.0
        %3728 = vmatmul.mubr.f32.gmra.mxu0 %v3084
        %v3729 = vpop.f32.mrf.mxu0
        %v3730 = vadd.f32 %v3126, %v3729
        %v3731 = vpop.f32.mrf.mxu0
        %3732 = vmatprep.mubr.f32.mxu0 0.0
        %3733 = vmatmul.mubr.f32.gmra.mxu0 %v3085
        %v3734 = vpop.f32.mrf.mxu0
        %v3735 = vadd.f32 %v3126, %v3734
        %v3736 = vpop.f32.mrf.mxu0
        %3737 = vmatprep.mubr.f32.mxu0 0.0
        %3738 = vmatmul.mubr.f32.gmra.mxu0 %v3086
        %v3739 = vpop.f32.mrf.mxu0
        %v3740 = vadd.f32 %v3126, %v3739
        %v3741 = vpop.f32.mrf.mxu0
        %3742 = vmatprep.mubr.f32.mxu0 0.0
        %3743 = vmatmul.mubr.f32.gmra.mxu0 %v3087
        %v3744 = vpop.f32.mrf.mxu0
        %v3745 = vadd.f32 %v3126, %v3744
        %v3746 = vpop.f32.mrf.mxu0
        %3747 = vmatprep.mubr.f32.mxu0 0.0
        %3748 = vmatmul.mubr.f32.gmra.mxu0 %v3088
        %v3749 = vpop.f32.mrf.mxu0
        %v3750 = vadd.f32 %v3126, %v3749
        %v3751 = vpop.f32.mrf.mxu0
        %3752 = vmatprep.mubr.f32.mxu0 0.0
        %3753 = vmatmul.mubr.f32.gmra.mxu0 %v3089
        %v3754 = vpop.f32.mrf.mxu0
        %v3755 = vadd.f32 %v3126, %v3754
        %v3756 = vpop.f32.mrf.mxu0
        %3757 = vmatprep.mubr.f32.mxu0 0.0
        %3758 = vmatmul.mubr.f32.gmra.mxu0 %v3090
        %v3759 = vpop.f32.mrf.mxu0
        %v3760 = vadd.f32 %v3126, %v3759
        %v3761 = vpop.f32.mrf.mxu0
        %3762 = vmatprep.mubr.f32.mxu0 0.0
        %3763 = vmatmul.mubr.f32.gmra.mxu0 %v3091
        %v3764 = vpop.f32.mrf.mxu0
        %v3765 = vadd.f32 %v3126, %v3764
        %v3766 = vpop.f32.mrf.mxu0
        %3767 = vmatprep.mubr.f32.mxu0 0.0
        %3768 = vmatmul.mubr.f32.gmra.mxu0 %v3092
        %v3769 = vpop.f32.mrf.mxu0
        %v3770 = vadd.f32 %v3126, %v3769
        %v3771 = vpop.f32.mrf.mxu0
        %3772 = vmatprep.mubr.f32.mxu0 0.0
        %3773 = vmatmul.mubr.f32.gmra.mxu0 %v3093
        %v3774 = vpop.f32.mrf.mxu0
        %v3775 = vadd.f32 %v3126, %v3774
        %v3776 = vpop.f32.mrf.mxu0
        %3777 = vmatprep.mubr.f32.mxu0 0.0
        %3778 = vmatmul.mubr.f32.gmra.mxu0 %v3094
        %v3779 = vpop.f32.mrf.mxu0
        %v3780 = vadd.f32 %v3126, %v3779
        %v3781 = vpop.f32.mrf.mxu0
        %3782 = vmatprep.mubr.f32.mxu0 0.0
        %3783 = vmatmul.mubr.f32.gmra.mxu0 %v3095
        %v3784 = vpop.f32.mrf.mxu0
        %v3785 = vadd.f32 %v3126, %v3784
        %v3786 = vpop.f32.mrf.mxu0
        %3787 = vmatprep.mubr.f32.mxu0 0.0
        %3788 = vmatmul.mubr.f32.gmra.mxu0 %v3096
        %v3789 = vpop.f32.mrf.mxu0
        %v3790 = vadd.f32 %v3126, %v3789
        %v3791 = vpop.f32.mrf.mxu0
        %3792 = vmatprep.mubr.f32.mxu0 0.0
        %3793 = vmatmul.mubr.f32.gmra.mxu0 %v3097
        %v3794 = vpop.f32.mrf.mxu0
        %v3795 = vadd.f32 %v3126, %v3794
        %v3796 = vpop.f32.mrf.mxu0
        %3797 = vmatprep.mubr.f32.mxu0 0.0
        %3798 = vmatmul.mubr.f32.gmra.mxu0 %v3098
        %v3799 = vpop.f32.mrf.mxu0
        %v3800 = vadd.f32 %v3126, %v3799
        %v3801 = vpop.f32.mrf.mxu0
        %3802 = vmatprep.mubr.f32.mxu0 0.0
        %3803 = vmatmul.mubr.f32.gmra.mxu0 %v3099
        %v3804 = vpop.f32.mrf.mxu0
        %v3805 = vadd.f32 %v3126, %v3804
        %v3806 = vpop.f32.mrf.mxu0
        %3807 = vmatprep.mubr.f32.mxu0 0.0
        %3808 = vmatmul.mubr.f32.gmra.mxu0 %v3100
        %v3809 = vpop.f32.mrf.mxu0
        %v3810 = vadd.f32 %v3126, %v3809
        %v3811 = vpop.f32.mrf.mxu0
        %3812 = vmatprep.mubr.f32.mxu0 0.0
        %3813 = vmatmul.mubr.f32.gmra.mxu0 %v3101
        %v3814 = vpop.f32.mrf.mxu0
        %v3815 = vadd.f32 %v3126, %v3814
        %v3816 = vpop.f32.mrf.mxu0
        %3817 = vmatprep.mubr.f32.mxu0 0.0
        %3818 = vmatmul.mubr.f32.gmra.mxu0 %v3102
        %v3819 = vpop.f32.mrf.mxu0
        %v3820 = vadd.f32 %v3126, %v3819
        %v3821 = vpop.f32.mrf.mxu0
        %3822 = vmatprep.mubr.f32.mxu0 0.0
        %3823 = vmatmul.mubr.f32.gmra.mxu0 %v3103
        %v3824 = vpop.f32.mrf.mxu0
        %v3825 = vadd.f32 %v3126, %v3824
        %v3826 = vpop.f32.mrf.mxu0
        %3827 = vmatprep.mubr.f32.mxu0 0.0
        %3828 = vmatmul.mubr.f32.gmra.mxu0 %v3104
        %v3829 = vpop.f32.mrf.mxu0
        %v3830 = vadd.f32 %v3126, %v3829
        %v3831 = vpop.f32.mrf.mxu0
        %3832 = vdwg.mxu0
        %v3833 = vmax.f32 %v3195, 0.0
        %v3834 = vmax.f32 %v3200, 0.0
        %v3835 = vmax.f32 %v3205, 0.0
        %v3836 = vmax.f32 %v3210, 0.0
        %v3837 = vmax.f32 %v3215, 0.0
        %v3838 = vmax.f32 %v3220, 0.0
        %v3839 = vmax.f32 %v3225, 0.0
        %v3840 = vmax.f32 %v3230, 0.0
        %v3841 = vmax.f32 %v3235, 0.0
        %v3842 = vmax.f32 %v3240, 0.0
        %v3843 = vmax.f32 %v3245, 0.0
        %v3844 = vmax.f32 %v3250, 0.0
        %v3845 = vmax.f32 %v3255, 0.0
        %v3846 = vmax.f32 %v3260, 0.0
        %v3847 = vmax.f32 %v3265, 0.0
        %v3848 = vmax.f32 %v3270, 0.0
        %v3849 = vmax.f32 %v3275, 0.0
        %v3850 = vmax.f32 %v3280, 0.0
        %v3851 = vmax.f32 %v3285, 0.0
        %v3852 = vmax.f32 %v3290, 0.0
        %v3853 = vmax.f32 %v3295, 0.0
        %v3854 = vmax.f32 %v3300, 0.0
        %v3855 = vmax.f32 %v3305, 0.0
        %v3856 = vmax.f32 %v3310, 0.0
        %v3857 = vmax.f32 %v3315, 0.0
        %v3858 = vmax.f32 %v3320, 0.0
        %v3859 = vmax.f32 %v3325, 0.0
        %v3860 = vmax.f32 %v3330, 0.0
        %v3861 = vmax.f32 %v3335, 0.0
        %v3862 = vmax.f32 %v3340, 0.0
        %v3863 = vmax.f32 %v3345, 0.0
        %v3864 = vmax.f32 %v3350, 0.0
        %v3865 = vmax.f32 %v3355, 0.0
        %v3866 = vmax.f32 %v3360, 0.0
        %v3867 = vmax.f32 %v3365, 0.0
        %v3868 = vmax.f32 %v3370, 0.0
        %v3869 = vmax.f32 %v3375, 0.0
        %v3870 = vmax.f32 %v3380, 0.0
        %v3871 = vmax.f32 %v3385, 0.0
        %v3872 = vmax.f32 %v3390, 0.0
        %v3873 = vmax.f32 %v3395, 0.0
        %v3874 = vmax.f32 %v3400, 0.0
        %v3875 = vmax.f32 %v3405, 0.0
        %v3876 = vmax.f32 %v3410, 0.0
        %v3877 = vmax.f32 %v3415, 0.0
        %v3878 = vmax.f32 %v3420, 0.0
        %v3879 = vmax.f32 %v3425, 0.0
        %v3880 = vmax.f32 %v3430, 0.0
        %v3881 = vmax.f32 %v3435, 0.0
        %v3882 = vmax.f32 %v3440, 0.0
        %v3883 = vmax.f32 %v3445, 0.0
        %v3884 = vmax.f32 %v3450, 0.0
        %v3885 = vmax.f32 %v3455, 0.0
        %v3886 = vmax.f32 %v3460, 0.0
        %v3887 = vmax.f32 %v3465, 0.0
        %v3888 = vmax.f32 %v3470, 0.0
        %v3889 = vmax.f32 %v3475, 0.0
        %v3890 = vmax.f32 %v3480, 0.0
        %v3891 = vmax.f32 %v3485, 0.0
        %v3892 = vmax.f32 %v3490, 0.0
        %v3893 = vmax.f32 %v3495, 0.0
        %v3894 = vmax.f32 %v3500, 0.0
        %v3895 = vmax.f32 %v3505, 0.0
        %v3896 = vmax.f32 %v3510, 0.0
        %v3897 = vmax.f32 %v3515, 0.0
        %v3898 = vmax.f32 %v3520, 0.0
        %v3899 = vmax.f32 %v3525, 0.0
        %v3900 = vmax.f32 %v3530, 0.0
        %v3901 = vmax.f32 %v3535, 0.0
        %v3902 = vmax.f32 %v3540, 0.0
        %v3903 = vmax.f32 %v3545, 0.0
        %v3904 = vmax.f32 %v3550, 0.0
        %v3905 = vmax.f32 %v3555, 0.0
        %v3906 = vmax.f32 %v3560, 0.0
        %v3907 = vmax.f32 %v3565, 0.0
        %v3908 = vmax.f32 %v3570, 0.0
        %v3909 = vmax.f32 %v3575, 0.0
        %v3910 = vmax.f32 %v3580, 0.0
        %v3911 = vmax.f32 %v3585, 0.0
        %v3912 = vmax.f32 %v3590, 0.0
        %v3913 = vmax.f32 %v3595, 0.0
        %v3914 = vmax.f32 %v3600, 0.0
        %v3915 = vmax.f32 %v3605, 0.0
        %v3916 = vmax.f32 %v3610, 0.0
        %v3917 = vmax.f32 %v3615, 0.0
        %v3918 = vmax.f32 %v3620, 0.0
        %v3919 = vmax.f32 %v3625, 0.0
        %v3920 = vmax.f32 %v3630, 0.0
        %v3921 = vmax.f32 %v3635, 0.0
        %v3922 = vmax.f32 %v3640, 0.0
        %v3923 = vmax.f32 %v3645, 0.0
        %v3924 = vmax.f32 %v3650, 0.0
        %v3925 = vmax.f32 %v3655, 0.0
        %v3926 = vmax.f32 %v3660, 0.0
        %v3927 = vmax.f32 %v3665, 0.0
        %v3928 = vmax.f32 %v3670, 0.0
        %v3929 = vmax.f32 %v3675, 0.0
        %v3930 = vmax.f32 %v3680, 0.0
        %v3931 = vmax.f32 %v3685, 0.0
        %v3932 = vmax.f32 %v3690, 0.0
        %v3933 = vmax.f32 %v3695, 0.0
        %v3934 = vmax.f32 %v3700, 0.0
        %v3935 = vmax.f32 %v3705, 0.0
        %v3936 = vmax.f32 %v3710, 0.0
        %v3937 = vmax.f32 %v3715, 0.0
        %v3938 = vmax.f32 %v3720, 0.0
        %v3939 = vmax.f32 %v3725, 0.0
        %v3940 = vmax.f32 %v3730, 0.0
        %v3941 = vmax.f32 %v3735, 0.0
        %v3942 = vmax.f32 %v3740, 0.0
        %v3943 = vmax.f32 %v3745, 0.0
        %v3944 = vmax.f32 %v3750, 0.0
        %v3945 = vmax.f32 %v3755, 0.0
        %v3946 = vmax.f32 %v3760, 0.0
        %v3947 = vmax.f32 %v3765, 0.0
        %v3948 = vmax.f32 %v3770, 0.0
        %v3949 = vmax.f32 %v3775, 0.0
        %v3950 = vmax.f32 %v3780, 0.0
        %v3951 = vmax.f32 %v3785, 0.0
        %v3952 = vmax.f32 %v3790, 0.0
        %v3953 = vmax.f32 %v3795, 0.0
        %v3954 = vmax.f32 %v3800, 0.0
        %v3955 = vmax.f32 %v3805, 0.0
        %v3956 = vmax.f32 %v3810, 0.0
        %v3957 = vmax.f32 %v3815, 0.0
        %v3958 = vmax.f32 %v3820, 0.0
        %v3959 = vmax.f32 %v3825, 0.0
        %v3960 = vmax.f32 %v3830, 0.0
        %v3961 = vld [vmem:[%s7] sm:$0xff]
        %v3962 = vld [vmem:[%s7 + $0x8] sm:$0xff]
        %v3963 = vld [vmem:[%s7 + $0x10] sm:$0xff]
        %v3964 = vld [vmem:[%s7 + $0x18] sm:$0xff]
        %v3965 = vld [vmem:[%s7 + $0x20] sm:$0xff]
        %v3966 = vld [vmem:[%s7 + $0x28] sm:$0xff]
        %v3967 = vld [vmem:[%s7 + $0x30] sm:$0xff]
        %v3968 = vld [vmem:[%s7 + $0x38] sm:$0xff]
        %v3969 = vld [vmem:[%s7 + $0x40] sm:$0xff]
        %v3970 = vld [vmem:[%s7 + $0x48] sm:$0xff]
        %v3971 = vld [vmem:[%s7 + $0x50] sm:$0xff]
        %v3972 = vld [vmem:[%s7 + $0x58] sm:$0xff]
        %v3973 = vld [vmem:[%s7 + $0x60] sm:$0xff]
        %v3974 = vld [vmem:[%s7 + $0x68] sm:$0xff]
        %v3975 = vld [vmem:[%s7 + $0x70] sm:$0xff]
        %v3976 = vld [vmem:[%s7 + $0x78] sm:$0xff]
        %v3977 = vld [vmem:[%s8] sm:$0x1]
        %v3979 = vlaneseq
        %v3980 = vshrl.u32 %v3979, 7
        %v3981 = vsub.s32 0, %v3980
        %v3982 = vrot.slane %v3977, %v3981
        %3984 = vmatprep.subr.mxu0 0.0
        %3985 = vmatpush1.msra.mxu0 %v3976
        %3986 = vmatprep.subr.mxu0 0.0
        %3987 = vmatpush1.msra.mxu0 %v3975
        %3988 = vmatprep.subr.mxu0 0.0
        %3989 = vmatpush1.msra.mxu0 %v3974
        %3990 = vmatprep.subr.mxu0 0.0
        %3991 = vmatpush1.msra.mxu0 %v3973
        %3992 = vmatprep.subr.mxu0 0.0
        %3993 = vmatpush1.msra.mxu0 %v3972
        %3994 = vmatprep.subr.mxu0 0.0
        %3995 = vmatpush1.msra.mxu0 %v3971
        %3996 = vmatprep.subr.mxu0 0.0
        %3997 = vmatpush1.msra.mxu0 %v3970
        %3998 = vmatprep.subr.mxu0 0.0
        %3999 = vmatpush1.msra.mxu0 %v3969
        %4000 = vmatprep.subr.mxu0 0.0
        %4001 = vmatpush1.msra.mxu0 %v3968
        %4002 = vmatprep.subr.mxu0 0.0
        %4003 = vmatpush1.msra.mxu0 %v3967
        %4004 = vmatprep.subr.mxu0 0.0
        %4005 = vmatpush1.msra.mxu0 %v3966
        %4006 = vmatprep.subr.mxu0 0.0
        %4007 = vmatpush1.msra.mxu0 %v3965
        %4008 = vmatprep.subr.mxu0 0.0
        %4009 = vmatpush1.msra.mxu0 %v3964
        %4010 = vmatprep.subr.mxu0 0.0
        %4011 = vmatpush1.msra.mxu0 %v3963
        %4012 = vmatprep.subr.mxu0 0.0
        %4013 = vmatpush1.msra.mxu0 %v3962
        %4014 = vmatprep.subr.mxu0 0.0
        %4015 = vmatpush1.msra.mxu0 %v3961
        %4016 = vmatprep.subr.mxu0 0.0
        %4017 = vmatpush2.msra.mxu0 0.0
        %4018 = vmatprep.subr.mxu0 0.0
        %4019 = vmatpush2.msra.mxu0 0.0
        %4020 = vmatprep.subr.mxu0 0.0
        %4021 = vmatpush2.msra.mxu0 0.0
        %4022 = vmatprep.subr.mxu0 0.0
        %4023 = vmatpush2.msra.mxu0 0.0
        %4024 = vmatprep.subr.mxu0 0.0
        %4025 = vmatpush2.msra.mxu0 0.0
        %4026 = vmatprep.subr.mxu0 0.0
        %4027 = vmatpush2.msra.mxu0 0.0
        %4028 = vmatprep.subr.mxu0 0.0
        %4029 = vmatpush2.msra.mxu0 0.0
        %4030 = vmatprep.subr.mxu0 0.0
        %4031 = vmatpush2.msra.mxu0 0.0
        %4032 = vmatprep.subr.mxu0 0.0
        %4033 = vmatpush2.msra.mxu0 0.0
        %4034 = vmatprep.subr.mxu0 0.0
        %4035 = vmatpush2.msra.mxu0 0.0
        %4036 = vmatprep.subr.mxu0 0.0
        %4037 = vmatpush2.msra.mxu0 0.0
        %4038 = vmatprep.subr.mxu0 0.0
        %4039 = vmatpush2.msra.mxu0 0.0
        %4040 = vmatprep.subr.mxu0 0.0
        %4041 = vmatpush2.msra.mxu0 0.0
        %4042 = vmatprep.subr.mxu0 0.0
        %4043 = vmatpush2.msra.mxu0 0.0
        %4044 = vmatprep.subr.mxu0 0.0
        %4045 = vmatpush2.msra.mxu0 0.0
        %4046 = vmatprep.subr.mxu0 0.0
        %4047 = vmatpush2.msra.mxu0 0.0
        %4048 = vmatprep.mubr.f32.mxu0 0.0
        %4049 = vmatmul.mubr.f32.gmra.mxu0 %v3833
        %v4050 = vpop.f32.mrf.mxu0
        %v4051 = vadd.f32 %v3982, %v4050
        %v4052 = vpop.f32.mrf.mxu0
        %4053 = vmatprep.mubr.f32.mxu0 0.0
        %4054 = vmatmul.mubr.f32.gmra.mxu0 %v3834
        %v4055 = vpop.f32.mrf.mxu0
        %v4056 = vadd.f32 %v3982, %v4055
        %v4057 = vpop.f32.mrf.mxu0
        %4058 = vmatprep.mubr.f32.mxu0 0.0
        %4059 = vmatmul.mubr.f32.gmra.mxu0 %v3835
        %v4060 = vpop.f32.mrf.mxu0
        %v4061 = vadd.f32 %v3982, %v4060
        %v4062 = vpop.f32.mrf.mxu0
        %4063 = vmatprep.mubr.f32.mxu0 0.0
        %4064 = vmatmul.mubr.f32.gmra.mxu0 %v3836
        %v4065 = vpop.f32.mrf.mxu0
        %v4066 = vadd.f32 %v3982, %v4065
        %v4067 = vpop.f32.mrf.mxu0
        %4068 = vmatprep.mubr.f32.mxu0 0.0
        %4069 = vmatmul.mubr.f32.gmra.mxu0 %v3837
        %v4070 = vpop.f32.mrf.mxu0
        %v4071 = vadd.f32 %v3982, %v4070
        %v4072 = vpop.f32.mrf.mxu0
        %4073 = vmatprep.mubr.f32.mxu0 0.0
        %4074 = vmatmul.mubr.f32.gmra.mxu0 %v3838
        %v4075 = vpop.f32.mrf.mxu0
        %v4076 = vadd.f32 %v3982, %v4075
        %v4077 = vpop.f32.mrf.mxu0
        %4078 = vmatprep.mubr.f32.mxu0 0.0
        %4079 = vmatmul.mubr.f32.gmra.mxu0 %v3839
        %v4080 = vpop.f32.mrf.mxu0
        %v4081 = vadd.f32 %v3982, %v4080
        %v4082 = vpop.f32.mrf.mxu0
        %4083 = vmatprep.mubr.f32.mxu0 0.0
        %4084 = vmatmul.mubr.f32.gmra.mxu0 %v3840
        %v4085 = vpop.f32.mrf.mxu0
        %v4086 = vadd.f32 %v3982, %v4085
        %v4087 = vpop.f32.mrf.mxu0
        %4088 = vmatprep.mubr.f32.mxu0 0.0
        %4089 = vmatmul.mubr.f32.gmra.mxu0 %v3841
        %v4090 = vpop.f32.mrf.mxu0
        %v4091 = vadd.f32 %v3982, %v4090
        %v4092 = vpop.f32.mrf.mxu0
        %4093 = vmatprep.mubr.f32.mxu0 0.0
        %4094 = vmatmul.mubr.f32.gmra.mxu0 %v3842
        %v4095 = vpop.f32.mrf.mxu0
        %v4096 = vadd.f32 %v3982, %v4095
        %v4097 = vpop.f32.mrf.mxu0
        %4098 = vmatprep.mubr.f32.mxu0 0.0
        %4099 = vmatmul.mubr.f32.gmra.mxu0 %v3843
        %v4100 = vpop.f32.mrf.mxu0
        %v4101 = vadd.f32 %v3982, %v4100
        %v4102 = vpop.f32.mrf.mxu0
        %4103 = vmatprep.mubr.f32.mxu0 0.0
        %4104 = vmatmul.mubr.f32.gmra.mxu0 %v3844
        %v4105 = vpop.f32.mrf.mxu0
        %v4106 = vadd.f32 %v3982, %v4105
        %v4107 = vpop.f32.mrf.mxu0
        %4108 = vmatprep.mubr.f32.mxu0 0.0
        %4109 = vmatmul.mubr.f32.gmra.mxu0 %v3845
        %v4110 = vpop.f32.mrf.mxu0
        %v4111 = vadd.f32 %v3982, %v4110
        %v4112 = vpop.f32.mrf.mxu0
        %4113 = vmatprep.mubr.f32.mxu0 0.0
        %4114 = vmatmul.mubr.f32.gmra.mxu0 %v3846
        %v4115 = vpop.f32.mrf.mxu0
        %v4116 = vadd.f32 %v3982, %v4115
        %v4117 = vpop.f32.mrf.mxu0
        %4118 = vmatprep.mubr.f32.mxu0 0.0
        %4119 = vmatmul.mubr.f32.gmra.mxu0 %v3847
        %v4120 = vpop.f32.mrf.mxu0
        %v4121 = vadd.f32 %v3982, %v4120
        %v4122 = vpop.f32.mrf.mxu0
        %4123 = vmatprep.mubr.f32.mxu0 0.0
        %4124 = vmatmul.mubr.f32.gmra.mxu0 %v3848
        %v4125 = vpop.f32.mrf.mxu0
        %v4126 = vadd.f32 %v3982, %v4125
        %v4127 = vpop.f32.mrf.mxu0
        %4128 = vmatprep.mubr.f32.mxu0 0.0
        %4129 = vmatmul.mubr.f32.gmra.mxu0 %v3849
        %v4130 = vpop.f32.mrf.mxu0
        %v4131 = vadd.f32 %v3982, %v4130
        %v4132 = vpop.f32.mrf.mxu0
        %4133 = vmatprep.mubr.f32.mxu0 0.0
        %4134 = vmatmul.mubr.f32.gmra.mxu0 %v3850
        %v4135 = vpop.f32.mrf.mxu0
        %v4136 = vadd.f32 %v3982, %v4135
        %v4137 = vpop.f32.mrf.mxu0
        %4138 = vmatprep.mubr.f32.mxu0 0.0
        %4139 = vmatmul.mubr.f32.gmra.mxu0 %v3851
        %v4140 = vpop.f32.mrf.mxu0
        %v4141 = vadd.f32 %v3982, %v4140
        %v4142 = vpop.f32.mrf.mxu0
        %4143 = vmatprep.mubr.f32.mxu0 0.0
        %4144 = vmatmul.mubr.f32.gmra.mxu0 %v3852
        %v4145 = vpop.f32.mrf.mxu0
        %v4146 = vadd.f32 %v3982, %v4145
        %v4147 = vpop.f32.mrf.mxu0
        %4148 = vmatprep.mubr.f32.mxu0 0.0
        %4149 = vmatmul.mubr.f32.gmra.mxu0 %v3853
        %v4150 = vpop.f32.mrf.mxu0
        %v4151 = vadd.f32 %v3982, %v4150
        %v4152 = vpop.f32.mrf.mxu0
        %4153 = vmatprep.mubr.f32.mxu0 0.0
        %4154 = vmatmul.mubr.f32.gmra.mxu0 %v3854
        %v4155 = vpop.f32.mrf.mxu0
        %v4156 = vadd.f32 %v3982, %v4155
        %v4157 = vpop.f32.mrf.mxu0
        %4158 = vmatprep.mubr.f32.mxu0 0.0
        %4159 = vmatmul.mubr.f32.gmra.mxu0 %v3855
        %v4160 = vpop.f32.mrf.mxu0
        %v4161 = vadd.f32 %v3982, %v4160
        %v4162 = vpop.f32.mrf.mxu0
        %4163 = vmatprep.mubr.f32.mxu0 0.0
        %4164 = vmatmul.mubr.f32.gmra.mxu0 %v3856
        %v4165 = vpop.f32.mrf.mxu0
        %v4166 = vadd.f32 %v3982, %v4165
        %v4167 = vpop.f32.mrf.mxu0
        %4168 = vmatprep.mubr.f32.mxu0 0.0
        %4169 = vmatmul.mubr.f32.gmra.mxu0 %v3857
        %v4170 = vpop.f32.mrf.mxu0
        %v4171 = vadd.f32 %v3982, %v4170
        %v4172 = vpop.f32.mrf.mxu0
        %4173 = vmatprep.mubr.f32.mxu0 0.0
        %4174 = vmatmul.mubr.f32.gmra.mxu0 %v3858
        %v4175 = vpop.f32.mrf.mxu0
        %v4176 = vadd.f32 %v3982, %v4175
        %v4177 = vpop.f32.mrf.mxu0
        %4178 = vmatprep.mubr.f32.mxu0 0.0
        %4179 = vmatmul.mubr.f32.gmra.mxu0 %v3859
        %v4180 = vpop.f32.mrf.mxu0
        %v4181 = vadd.f32 %v3982, %v4180
        %v4182 = vpop.f32.mrf.mxu0
        %4183 = vmatprep.mubr.f32.mxu0 0.0
        %4184 = vmatmul.mubr.f32.gmra.mxu0 %v3860
        %v4185 = vpop.f32.mrf.mxu0
        %v4186 = vadd.f32 %v3982, %v4185
        %v4187 = vpop.f32.mrf.mxu0
        %4188 = vmatprep.mubr.f32.mxu0 0.0
        %4189 = vmatmul.mubr.f32.gmra.mxu0 %v3861
        %v4190 = vpop.f32.mrf.mxu0
        %v4191 = vadd.f32 %v3982, %v4190
        %v4192 = vpop.f32.mrf.mxu0
        %4193 = vmatprep.mubr.f32.mxu0 0.0
        %4194 = vmatmul.mubr.f32.gmra.mxu0 %v3862
        %v4195 = vpop.f32.mrf.mxu0
        %v4196 = vadd.f32 %v3982, %v4195
        %v4197 = vpop.f32.mrf.mxu0
        %4198 = vmatprep.mubr.f32.mxu0 0.0
        %4199 = vmatmul.mubr.f32.gmra.mxu0 %v3863
        %v4200 = vpop.f32.mrf.mxu0
        %v4201 = vadd.f32 %v3982, %v4200
        %v4202 = vpop.f32.mrf.mxu0
        %4203 = vmatprep.mubr.f32.mxu0 0.0
        %4204 = vmatmul.mubr.f32.gmra.mxu0 %v3864
        %v4205 = vpop.f32.mrf.mxu0
        %v4206 = vadd.f32 %v3982, %v4205
        %v4207 = vpop.f32.mrf.mxu0
        %4208 = vmatprep.mubr.f32.mxu0 0.0
        %4209 = vmatmul.mubr.f32.gmra.mxu0 %v3865
        %v4210 = vpop.f32.mrf.mxu0
        %v4211 = vadd.f32 %v3982, %v4210
        %v4212 = vpop.f32.mrf.mxu0
        %4213 = vmatprep.mubr.f32.mxu0 0.0
        %4214 = vmatmul.mubr.f32.gmra.mxu0 %v3866
        %v4215 = vpop.f32.mrf.mxu0
        %v4216 = vadd.f32 %v3982, %v4215
        %v4217 = vpop.f32.mrf.mxu0
        %4218 = vmatprep.mubr.f32.mxu0 0.0
        %4219 = vmatmul.mubr.f32.gmra.mxu0 %v3867
        %v4220 = vpop.f32.mrf.mxu0
        %v4221 = vadd.f32 %v3982, %v4220
        %v4222 = vpop.f32.mrf.mxu0
        %4223 = vmatprep.mubr.f32.mxu0 0.0
        %4224 = vmatmul.mubr.f32.gmra.mxu0 %v3868
        %v4225 = vpop.f32.mrf.mxu0
        %v4226 = vadd.f32 %v3982, %v4225
        %v4227 = vpop.f32.mrf.mxu0
        %4228 = vmatprep.mubr.f32.mxu0 0.0
        %4229 = vmatmul.mubr.f32.gmra.mxu0 %v3869
        %v4230 = vpop.f32.mrf.mxu0
        %v4231 = vadd.f32 %v3982, %v4230
        %v4232 = vpop.f32.mrf.mxu0
        %4233 = vmatprep.mubr.f32.mxu0 0.0
        %4234 = vmatmul.mubr.f32.gmra.mxu0 %v3870
        %v4235 = vpop.f32.mrf.mxu0
        %v4236 = vadd.f32 %v3982, %v4235
        %v4237 = vpop.f32.mrf.mxu0
        %4238 = vmatprep.mubr.f32.mxu0 0.0
        %4239 = vmatmul.mubr.f32.gmra.mxu0 %v3871
        %v4240 = vpop.f32.mrf.mxu0
        %v4241 = vadd.f32 %v3982, %v4240
        %v4242 = vpop.f32.mrf.mxu0
        %4243 = vmatprep.mubr.f32.mxu0 0.0
        %4244 = vmatmul.mubr.f32.gmra.mxu0 %v3872
        %v4245 = vpop.f32.mrf.mxu0
        %v4246 = vadd.f32 %v3982, %v4245
        %v4247 = vpop.f32.mrf.mxu0
        %4248 = vmatprep.mubr.f32.mxu0 0.0
        %4249 = vmatmul.mubr.f32.gmra.mxu0 %v3873
        %v4250 = vpop.f32.mrf.mxu0
        %v4251 = vadd.f32 %v3982, %v4250
        %v4252 = vpop.f32.mrf.mxu0
        %4253 = vmatprep.mubr.f32.mxu0 0.0
        %4254 = vmatmul.mubr.f32.gmra.mxu0 %v3874
        %v4255 = vpop.f32.mrf.mxu0
        %v4256 = vadd.f32 %v3982, %v4255
        %v4257 = vpop.f32.mrf.mxu0
        %4258 = vmatprep.mubr.f32.mxu0 0.0
        %4259 = vmatmul.mubr.f32.gmra.mxu0 %v3875
        %v4260 = vpop.f32.mrf.mxu0
        %v4261 = vadd.f32 %v3982, %v4260
        %v4262 = vpop.f32.mrf.mxu0
        %4263 = vmatprep.mubr.f32.mxu0 0.0
        %4264 = vmatmul.mubr.f32.gmra.mxu0 %v3876
        %v4265 = vpop.f32.mrf.mxu0
        %v4266 = vadd.f32 %v3982, %v4265
        %v4267 = vpop.f32.mrf.mxu0
        %4268 = vmatprep.mubr.f32.mxu0 0.0
        %4269 = vmatmul.mubr.f32.gmra.mxu0 %v3877
        %v4270 = vpop.f32.mrf.mxu0
        %v4271 = vadd.f32 %v3982, %v4270
        %v4272 = vpop.f32.mrf.mxu0
        %4273 = vmatprep.mubr.f32.mxu0 0.0
        %4274 = vmatmul.mubr.f32.gmra.mxu0 %v3878
        %v4275 = vpop.f32.mrf.mxu0
        %v4276 = vadd.f32 %v3982, %v4275
        %v4277 = vpop.f32.mrf.mxu0
        %4278 = vmatprep.mubr.f32.mxu0 0.0
        %4279 = vmatmul.mubr.f32.gmra.mxu0 %v3879
        %v4280 = vpop.f32.mrf.mxu0
        %v4281 = vadd.f32 %v3982, %v4280
        %v4282 = vpop.f32.mrf.mxu0
        %4283 = vmatprep.mubr.f32.mxu0 0.0
        %4284 = vmatmul.mubr.f32.gmra.mxu0 %v3880
        %v4285 = vpop.f32.mrf.mxu0
        %v4286 = vadd.f32 %v3982, %v4285
        %v4287 = vpop.f32.mrf.mxu0
        %4288 = vmatprep.mubr.f32.mxu0 0.0
        %4289 = vmatmul.mubr.f32.gmra.mxu0 %v3881
        %v4290 = vpop.f32.mrf.mxu0
        %v4291 = vadd.f32 %v3982, %v4290
        %v4292 = vpop.f32.mrf.mxu0
        %4293 = vmatprep.mubr.f32.mxu0 0.0
        %4294 = vmatmul.mubr.f32.gmra.mxu0 %v3882
        %v4295 = vpop.f32.mrf.mxu0
        %v4296 = vadd.f32 %v3982, %v4295
        %v4297 = vpop.f32.mrf.mxu0
        %4298 = vmatprep.mubr.f32.mxu0 0.0
        %4299 = vmatmul.mubr.f32.gmra.mxu0 %v3883
        %v4300 = vpop.f32.mrf.mxu0
        %v4301 = vadd.f32 %v3982, %v4300
        %v4302 = vpop.f32.mrf.mxu0
        %4303 = vmatprep.mubr.f32.mxu0 0.0
        %4304 = vmatmul.mubr.f32.gmra.mxu0 %v3884
        %v4305 = vpop.f32.mrf.mxu0
        %v4306 = vadd.f32 %v3982, %v4305
        %v4307 = vpop.f32.mrf.mxu0
        %4308 = vmatprep.mubr.f32.mxu0 0.0
        %4309 = vmatmul.mubr.f32.gmra.mxu0 %v3885
        %v4310 = vpop.f32.mrf.mxu0
        %v4311 = vadd.f32 %v3982, %v4310
        %v4312 = vpop.f32.mrf.mxu0
        %4313 = vmatprep.mubr.f32.mxu0 0.0
        %4314 = vmatmul.mubr.f32.gmra.mxu0 %v3886
        %v4315 = vpop.f32.mrf.mxu0
        %v4316 = vadd.f32 %v3982, %v4315
        %v4317 = vpop.f32.mrf.mxu0
        %4318 = vmatprep.mubr.f32.mxu0 0.0
        %4319 = vmatmul.mubr.f32.gmra.mxu0 %v3887
        %v4320 = vpop.f32.mrf.mxu0
        %v4321 = vadd.f32 %v3982, %v4320
        %v4322 = vpop.f32.mrf.mxu0
        %4323 = vmatprep.mubr.f32.mxu0 0.0
        %4324 = vmatmul.mubr.f32.gmra.mxu0 %v3888
        %v4325 = vpop.f32.mrf.mxu0
        %v4326 = vadd.f32 %v3982, %v4325
        %v4327 = vpop.f32.mrf.mxu0
        %4328 = vmatprep.mubr.f32.mxu0 0.0
        %4329 = vmatmul.mubr.f32.gmra.mxu0 %v3889
        %v4330 = vpop.f32.mrf.mxu0
        %v4331 = vadd.f32 %v3982, %v4330
        %v4332 = vpop.f32.mrf.mxu0
        %4333 = vmatprep.mubr.f32.mxu0 0.0
        %4334 = vmatmul.mubr.f32.gmra.mxu0 %v3890
        %v4335 = vpop.f32.mrf.mxu0
        %v4336 = vadd.f32 %v3982, %v4335
        %v4337 = vpop.f32.mrf.mxu0
        %4338 = vmatprep.mubr.f32.mxu0 0.0
        %4339 = vmatmul.mubr.f32.gmra.mxu0 %v3891
        %v4340 = vpop.f32.mrf.mxu0
        %v4341 = vadd.f32 %v3982, %v4340
        %v4342 = vpop.f32.mrf.mxu0
        %4343 = vmatprep.mubr.f32.mxu0 0.0
        %4344 = vmatmul.mubr.f32.gmra.mxu0 %v3892
        %v4345 = vpop.f32.mrf.mxu0
        %v4346 = vadd.f32 %v3982, %v4345
        %v4347 = vpop.f32.mrf.mxu0
        %4348 = vmatprep.mubr.f32.mxu0 0.0
        %4349 = vmatmul.mubr.f32.gmra.mxu0 %v3893
        %v4350 = vpop.f32.mrf.mxu0
        %v4351 = vadd.f32 %v3982, %v4350
        %v4352 = vpop.f32.mrf.mxu0
        %4353 = vmatprep.mubr.f32.mxu0 0.0
        %4354 = vmatmul.mubr.f32.gmra.mxu0 %v3894
        %v4355 = vpop.f32.mrf.mxu0
        %v4356 = vadd.f32 %v3982, %v4355
        %v4357 = vpop.f32.mrf.mxu0
        %4358 = vmatprep.mubr.f32.mxu0 0.0
        %4359 = vmatmul.mubr.f32.gmra.mxu0 %v3895
        %v4360 = vpop.f32.mrf.mxu0
        %v4361 = vadd.f32 %v3982, %v4360
        %v4362 = vpop.f32.mrf.mxu0
        %4363 = vmatprep.mubr.f32.mxu0 0.0
        %4364 = vmatmul.mubr.f32.gmra.mxu0 %v3896
        %v4365 = vpop.f32.mrf.mxu0
        %v4366 = vadd.f32 %v3982, %v4365
        %v4367 = vpop.f32.mrf.mxu0
        %4368 = vmatprep.mubr.f32.mxu0 0.0
        %4369 = vmatmul.mubr.f32.gmra.mxu0 %v3897
        %v4370 = vpop.f32.mrf.mxu0
        %v4371 = vadd.f32 %v3982, %v4370
        %v4372 = vpop.f32.mrf.mxu0
        %4373 = vmatprep.mubr.f32.mxu0 0.0
        %4374 = vmatmul.mubr.f32.gmra.mxu0 %v3898
        %v4375 = vpop.f32.mrf.mxu0
        %v4376 = vadd.f32 %v3982, %v4375
        %v4377 = vpop.f32.mrf.mxu0
        %4378 = vmatprep.mubr.f32.mxu0 0.0
        %4379 = vmatmul.mubr.f32.gmra.mxu0 %v3899
        %v4380 = vpop.f32.mrf.mxu0
        %v4381 = vadd.f32 %v3982, %v4380
        %v4382 = vpop.f32.mrf.mxu0
        %4383 = vmatprep.mubr.f32.mxu0 0.0
        %4384 = vmatmul.mubr.f32.gmra.mxu0 %v3900
        %v4385 = vpop.f32.mrf.mxu0
        %v4386 = vadd.f32 %v3982, %v4385
        %v4387 = vpop.f32.mrf.mxu0
        %4388 = vmatprep.mubr.f32.mxu0 0.0
        %4389 = vmatmul.mubr.f32.gmra.mxu0 %v3901
        %v4390 = vpop.f32.mrf.mxu0
        %v4391 = vadd.f32 %v3982, %v4390
        %v4392 = vpop.f32.mrf.mxu0
        %4393 = vmatprep.mubr.f32.mxu0 0.0
        %4394 = vmatmul.mubr.f32.gmra.mxu0 %v3902
        %v4395 = vpop.f32.mrf.mxu0
        %v4396 = vadd.f32 %v3982, %v4395
        %v4397 = vpop.f32.mrf.mxu0
        %4398 = vmatprep.mubr.f32.mxu0 0.0
        %4399 = vmatmul.mubr.f32.gmra.mxu0 %v3903
        %v4400 = vpop.f32.mrf.mxu0
        %v4401 = vadd.f32 %v3982, %v4400
        %v4402 = vpop.f32.mrf.mxu0
        %4403 = vmatprep.mubr.f32.mxu0 0.0
        %4404 = vmatmul.mubr.f32.gmra.mxu0 %v3904
        %v4405 = vpop.f32.mrf.mxu0
        %v4406 = vadd.f32 %v3982, %v4405
        %v4407 = vpop.f32.mrf.mxu0
        %4408 = vmatprep.mubr.f32.mxu0 0.0
        %4409 = vmatmul.mubr.f32.gmra.mxu0 %v3905
        %v4410 = vpop.f32.mrf.mxu0
        %v4411 = vadd.f32 %v3982, %v4410
        %v4412 = vpop.f32.mrf.mxu0
        %4413 = vmatprep.mubr.f32.mxu0 0.0
        %4414 = vmatmul.mubr.f32.gmra.mxu0 %v3906
        %v4415 = vpop.f32.mrf.mxu0
        %v4416 = vadd.f32 %v3982, %v4415
        %v4417 = vpop.f32.mrf.mxu0
        %4418 = vmatprep.mubr.f32.mxu0 0.0
        %4419 = vmatmul.mubr.f32.gmra.mxu0 %v3907
        %v4420 = vpop.f32.mrf.mxu0
        %v4421 = vadd.f32 %v3982, %v4420
        %v4422 = vpop.f32.mrf.mxu0
        %4423 = vmatprep.mubr.f32.mxu0 0.0
        %4424 = vmatmul.mubr.f32.gmra.mxu0 %v3908
        %v4425 = vpop.f32.mrf.mxu0
        %v4426 = vadd.f32 %v3982, %v4425
        %v4427 = vpop.f32.mrf.mxu0
        %4428 = vmatprep.mubr.f32.mxu0 0.0
        %4429 = vmatmul.mubr.f32.gmra.mxu0 %v3909
        %v4430 = vpop.f32.mrf.mxu0
        %v4431 = vadd.f32 %v3982, %v4430
        %v4432 = vpop.f32.mrf.mxu0
        %4433 = vmatprep.mubr.f32.mxu0 0.0
        %4434 = vmatmul.mubr.f32.gmra.mxu0 %v3910
        %v4435 = vpop.f32.mrf.mxu0
        %v4436 = vadd.f32 %v3982, %v4435
        %v4437 = vpop.f32.mrf.mxu0
        %4438 = vmatprep.mubr.f32.mxu0 0.0
        %4439 = vmatmul.mubr.f32.gmra.mxu0 %v3911
        %v4440 = vpop.f32.mrf.mxu0
        %v4441 = vadd.f32 %v3982, %v4440
        %v4442 = vpop.f32.mrf.mxu0
        %4443 = vmatprep.mubr.f32.mxu0 0.0
        %4444 = vmatmul.mubr.f32.gmra.mxu0 %v3912
        %v4445 = vpop.f32.mrf.mxu0
        %v4446 = vadd.f32 %v3982, %v4445
        %v4447 = vpop.f32.mrf.mxu0
        %4448 = vmatprep.mubr.f32.mxu0 0.0
        %4449 = vmatmul.mubr.f32.gmra.mxu0 %v3913
        %v4450 = vpop.f32.mrf.mxu0
        %v4451 = vadd.f32 %v3982, %v4450
        %v4452 = vpop.f32.mrf.mxu0
        %4453 = vmatprep.mubr.f32.mxu0 0.0
        %4454 = vmatmul.mubr.f32.gmra.mxu0 %v3914
        %v4455 = vpop.f32.mrf.mxu0
        %v4456 = vadd.f32 %v3982, %v4455
        %v4457 = vpop.f32.mrf.mxu0
        %4458 = vmatprep.mubr.f32.mxu0 0.0
        %4459 = vmatmul.mubr.f32.gmra.mxu0 %v3915
        %v4460 = vpop.f32.mrf.mxu0
        %v4461 = vadd.f32 %v3982, %v4460
        %v4462 = vpop.f32.mrf.mxu0
        %4463 = vmatprep.mubr.f32.mxu0 0.0
        %4464 = vmatmul.mubr.f32.gmra.mxu0 %v3916
        %v4465 = vpop.f32.mrf.mxu0
        %v4466 = vadd.f32 %v3982, %v4465
        %v4467 = vpop.f32.mrf.mxu0
        %4468 = vmatprep.mubr.f32.mxu0 0.0
        %4469 = vmatmul.mubr.f32.gmra.mxu0 %v3917
        %v4470 = vpop.f32.mrf.mxu0
        %v4471 = vadd.f32 %v3982, %v4470
        %v4472 = vpop.f32.mrf.mxu0
        %4473 = vmatprep.mubr.f32.mxu0 0.0
        %4474 = vmatmul.mubr.f32.gmra.mxu0 %v3918
        %v4475 = vpop.f32.mrf.mxu0
        %v4476 = vadd.f32 %v3982, %v4475
        %v4477 = vpop.f32.mrf.mxu0
        %4478 = vmatprep.mubr.f32.mxu0 0.0
        %4479 = vmatmul.mubr.f32.gmra.mxu0 %v3919
        %v4480 = vpop.f32.mrf.mxu0
        %v4481 = vadd.f32 %v3982, %v4480
        %v4482 = vpop.f32.mrf.mxu0
        %4483 = vmatprep.mubr.f32.mxu0 0.0
        %4484 = vmatmul.mubr.f32.gmra.mxu0 %v3920
        %v4485 = vpop.f32.mrf.mxu0
        %v4486 = vadd.f32 %v3982, %v4485
        %v4487 = vpop.f32.mrf.mxu0
        %4488 = vmatprep.mubr.f32.mxu0 0.0
        %4489 = vmatmul.mubr.f32.gmra.mxu0 %v3921
        %v4490 = vpop.f32.mrf.mxu0
        %v4491 = vadd.f32 %v3982, %v4490
        %v4492 = vpop.f32.mrf.mxu0
        %4493 = vmatprep.mubr.f32.mxu0 0.0
        %4494 = vmatmul.mubr.f32.gmra.mxu0 %v3922
        %v4495 = vpop.f32.mrf.mxu0
        %v4496 = vadd.f32 %v3982, %v4495
        %v4497 = vpop.f32.mrf.mxu0
        %4498 = vmatprep.mubr.f32.mxu0 0.0
        %4499 = vmatmul.mubr.f32.gmra.mxu0 %v3923
        %v4500 = vpop.f32.mrf.mxu0
        %v4501 = vadd.f32 %v3982, %v4500
        %v4502 = vpop.f32.mrf.mxu0
        %4503 = vmatprep.mubr.f32.mxu0 0.0
        %4504 = vmatmul.mubr.f32.gmra.mxu0 %v3924
        %v4505 = vpop.f32.mrf.mxu0
        %v4506 = vadd.f32 %v3982, %v4505
        %v4507 = vpop.f32.mrf.mxu0
        %4508 = vmatprep.mubr.f32.mxu0 0.0
        %4509 = vmatmul.mubr.f32.gmra.mxu0 %v3925
        %v4510 = vpop.f32.mrf.mxu0
        %v4511 = vadd.f32 %v3982, %v4510
        %v4512 = vpop.f32.mrf.mxu0
        %4513 = vmatprep.mubr.f32.mxu0 0.0
        %4514 = vmatmul.mubr.f32.gmra.mxu0 %v3926
        %v4515 = vpop.f32.mrf.mxu0
        %v4516 = vadd.f32 %v3982, %v4515
        %v4517 = vpop.f32.mrf.mxu0
        %4518 = vmatprep.mubr.f32.mxu0 0.0
        %4519 = vmatmul.mubr.f32.gmra.mxu0 %v3927
        %v4520 = vpop.f32.mrf.mxu0
        %v4521 = vadd.f32 %v3982, %v4520
        %v4522 = vpop.f32.mrf.mxu0
        %4523 = vmatprep.mubr.f32.mxu0 0.0
        %4524 = vmatmul.mubr.f32.gmra.mxu0 %v3928
        %v4525 = vpop.f32.mrf.mxu0
        %v4526 = vadd.f32 %v3982, %v4525
        %v4527 = vpop.f32.mrf.mxu0
        %4528 = vmatprep.mubr.f32.mxu0 0.0
        %4529 = vmatmul.mubr.f32.gmra.mxu0 %v3929
        %v4530 = vpop.f32.mrf.mxu0
        %v4531 = vadd.f32 %v3982, %v4530
        %v4532 = vpop.f32.mrf.mxu0
        %4533 = vmatprep.mubr.f32.mxu0 0.0
        %4534 = vmatmul.mubr.f32.gmra.mxu0 %v3930
        %v4535 = vpop.f32.mrf.mxu0
        %v4536 = vadd.f32 %v3982, %v4535
        %v4537 = vpop.f32.mrf.mxu0
        %4538 = vmatprep.mubr.f32.mxu0 0.0
        %4539 = vmatmul.mubr.f32.gmra.mxu0 %v3931
        %v4540 = vpop.f32.mrf.mxu0
        %v4541 = vadd.f32 %v3982, %v4540
        %v4542 = vpop.f32.mrf.mxu0
        %4543 = vmatprep.mubr.f32.mxu0 0.0
        %4544 = vmatmul.mubr.f32.gmra.mxu0 %v3932
        %v4545 = vpop.f32.mrf.mxu0
        %v4546 = vadd.f32 %v3982, %v4545
        %v4547 = vpop.f32.mrf.mxu0
        %4548 = vmatprep.mubr.f32.mxu0 0.0
        %4549 = vmatmul.mubr.f32.gmra.mxu0 %v3933
        %v4550 = vpop.f32.mrf.mxu0
        %v4551 = vadd.f32 %v3982, %v4550
        %v4552 = vpop.f32.mrf.mxu0
        %4553 = vmatprep.mubr.f32.mxu0 0.0
        %4554 = vmatmul.mubr.f32.gmra.mxu0 %v3934
        %v4555 = vpop.f32.mrf.mxu0
        %v4556 = vadd.f32 %v3982, %v4555
        %v4557 = vpop.f32.mrf.mxu0
        %4558 = vmatprep.mubr.f32.mxu0 0.0
        %4559 = vmatmul.mubr.f32.gmra.mxu0 %v3935
        %v4560 = vpop.f32.mrf.mxu0
        %v4561 = vadd.f32 %v3982, %v4560
        %v4562 = vpop.f32.mrf.mxu0
        %4563 = vmatprep.mubr.f32.mxu0 0.0
        %4564 = vmatmul.mubr.f32.gmra.mxu0 %v3936
        %v4565 = vpop.f32.mrf.mxu0
        %v4566 = vadd.f32 %v3982, %v4565
        %v4567 = vpop.f32.mrf.mxu0
        %4568 = vmatprep.mubr.f32.mxu0 0.0
        %4569 = vmatmul.mubr.f32.gmra.mxu0 %v3937
        %v4570 = vpop.f32.mrf.mxu0
        %v4571 = vadd.f32 %v3982, %v4570
        %v4572 = vpop.f32.mrf.mxu0
        %4573 = vmatprep.mubr.f32.mxu0 0.0
        %4574 = vmatmul.mubr.f32.gmra.mxu0 %v3938
        %v4575 = vpop.f32.mrf.mxu0
        %v4576 = vadd.f32 %v3982, %v4575
        %v4577 = vpop.f32.mrf.mxu0
        %4578 = vmatprep.mubr.f32.mxu0 0.0
        %4579 = vmatmul.mubr.f32.gmra.mxu0 %v3939
        %v4580 = vpop.f32.mrf.mxu0
        %v4581 = vadd.f32 %v3982, %v4580
        %v4582 = vpop.f32.mrf.mxu0
        %4583 = vmatprep.mubr.f32.mxu0 0.0
        %4584 = vmatmul.mubr.f32.gmra.mxu0 %v3940
        %v4585 = vpop.f32.mrf.mxu0
        %v4586 = vadd.f32 %v3982, %v4585
        %v4587 = vpop.f32.mrf.mxu0
        %4588 = vmatprep.mubr.f32.mxu0 0.0
        %4589 = vmatmul.mubr.f32.gmra.mxu0 %v3941
        %v4590 = vpop.f32.mrf.mxu0
        %v4591 = vadd.f32 %v3982, %v4590
        %v4592 = vpop.f32.mrf.mxu0
        %4593 = vmatprep.mubr.f32.mxu0 0.0
        %4594 = vmatmul.mubr.f32.gmra.mxu0 %v3942
        %v4595 = vpop.f32.mrf.mxu0
        %v4596 = vadd.f32 %v3982, %v4595
        %v4597 = vpop.f32.mrf.mxu0
        %4598 = vmatprep.mubr.f32.mxu0 0.0
        %4599 = vmatmul.mubr.f32.gmra.mxu0 %v3943
        %v4600 = vpop.f32.mrf.mxu0
        %v4601 = vadd.f32 %v3982, %v4600
        %v4602 = vpop.f32.mrf.mxu0
        %4603 = vmatprep.mubr.f32.mxu0 0.0
        %4604 = vmatmul.mubr.f32.gmra.mxu0 %v3944
        %v4605 = vpop.f32.mrf.mxu0
        %v4606 = vadd.f32 %v3982, %v4605
        %v4607 = vpop.f32.mrf.mxu0
        %4608 = vmatprep.mubr.f32.mxu0 0.0
        %4609 = vmatmul.mubr.f32.gmra.mxu0 %v3945
        %v4610 = vpop.f32.mrf.mxu0
        %v4611 = vadd.f32 %v3982, %v4610
        %v4612 = vpop.f32.mrf.mxu0
        %4613 = vmatprep.mubr.f32.mxu0 0.0
        %4614 = vmatmul.mubr.f32.gmra.mxu0 %v3946
        %v4615 = vpop.f32.mrf.mxu0
        %v4616 = vadd.f32 %v3982, %v4615
        %v4617 = vpop.f32.mrf.mxu0
        %4618 = vmatprep.mubr.f32.mxu0 0.0
        %4619 = vmatmul.mubr.f32.gmra.mxu0 %v3947
        %v4620 = vpop.f32.mrf.mxu0
        %v4621 = vadd.f32 %v3982, %v4620
        %v4622 = vpop.f32.mrf.mxu0
        %4623 = vmatprep.mubr.f32.mxu0 0.0
        %4624 = vmatmul.mubr.f32.gmra.mxu0 %v3948
        %v4625 = vpop.f32.mrf.mxu0
        %v4626 = vadd.f32 %v3982, %v4625
        %v4627 = vpop.f32.mrf.mxu0
        %4628 = vmatprep.mubr.f32.mxu0 0.0
        %4629 = vmatmul.mubr.f32.gmra.mxu0 %v3949
        %v4630 = vpop.f32.mrf.mxu0
        %v4631 = vadd.f32 %v3982, %v4630
        %v4632 = vpop.f32.mrf.mxu0
        %4633 = vmatprep.mubr.f32.mxu0 0.0
        %4634 = vmatmul.mubr.f32.gmra.mxu0 %v3950
        %v4635 = vpop.f32.mrf.mxu0
        %v4636 = vadd.f32 %v3982, %v4635
        %v4637 = vpop.f32.mrf.mxu0
        %4638 = vmatprep.mubr.f32.mxu0 0.0
        %4639 = vmatmul.mubr.f32.gmra.mxu0 %v3951
        %v4640 = vpop.f32.mrf.mxu0
        %v4641 = vadd.f32 %v3982, %v4640
        %v4642 = vpop.f32.mrf.mxu0
        %4643 = vmatprep.mubr.f32.mxu0 0.0
        %4644 = vmatmul.mubr.f32.gmra.mxu0 %v3952
        %v4645 = vpop.f32.mrf.mxu0
        %v4646 = vadd.f32 %v3982, %v4645
        %v4647 = vpop.f32.mrf.mxu0
        %4648 = vmatprep.mubr.f32.mxu0 0.0
        %4649 = vmatmul.mubr.f32.gmra.mxu0 %v3953
        %v4650 = vpop.f32.mrf.mxu0
        %v4651 = vadd.f32 %v3982, %v4650
        %v4652 = vpop.f32.mrf.mxu0
        %4653 = vmatprep.mubr.f32.mxu0 0.0
        %4654 = vmatmul.mubr.f32.gmra.mxu0 %v3954
        %v4655 = vpop.f32.mrf.mxu0
        %v4656 = vadd.f32 %v3982, %v4655
        %v4657 = vpop.f32.mrf.mxu0
        %4658 = vmatprep.mubr.f32.mxu0 0.0
        %4659 = vmatmul.mubr.f32.gmra.mxu0 %v3955
        %v4660 = vpop.f32.mrf.mxu0
        %v4661 = vadd.f32 %v3982, %v4660
        %v4662 = vpop.f32.mrf.mxu0
        %4663 = vmatprep.mubr.f32.mxu0 0.0
        %4664 = vmatmul.mubr.f32.gmra.mxu0 %v3956
        %v4665 = vpop.f32.mrf.mxu0
        %v4666 = vadd.f32 %v3982, %v4665
        %v4667 = vpop.f32.mrf.mxu0
        %4668 = vmatprep.mubr.f32.mxu0 0.0
        %4669 = vmatmul.mubr.f32.gmra.mxu0 %v3957
        %v4670 = vpop.f32.mrf.mxu0
        %v4671 = vadd.f32 %v3982, %v4670
        %v4672 = vpop.f32.mrf.mxu0
        %4673 = vmatprep.mubr.f32.mxu0 0.0
        %4674 = vmatmul.mubr.f32.gmra.mxu0 %v3958
        %v4675 = vpop.f32.mrf.mxu0
        %v4676 = vadd.f32 %v3982, %v4675
        %v4677 = vpop.f32.mrf.mxu0
        %4678 = vmatprep.mubr.f32.mxu0 0.0
        %4679 = vmatmul.mubr.f32.gmra.mxu0 %v3959
        %v4680 = vpop.f32.mrf.mxu0
        %v4681 = vadd.f32 %v3982, %v4680
        %v4682 = vpop.f32.mrf.mxu0
        %4683 = vmatprep.mubr.f32.mxu0 0.0
        %4684 = vmatmul.mubr.f32.gmra.mxu0 %v3960
        %v4685 = vpop.f32.mrf.mxu0
        %v4686 = vadd.f32 %v3982, %v4685
        %v4687 = vpop.f32.mrf.mxu0
        %4688 = vdwg.mxu0
        %4689 = vst.msk [vmem:[%s362] sm:$0xff] %vm654, %v4051
        %4690 = vst.msk [vmem:[%s362 + $0x8] sm:$0xff] %vm654, %v4056
        %4691 = vst.msk [vmem:[%s362 + $0x10] sm:$0xff] %vm654, %v4061
        %4692 = vst.msk [vmem:[%s362 + $0x18] sm:$0xff] %vm654, %v4066
        %4693 = vst.msk [vmem:[%s362 + $0x20] sm:$0xff] %vm654, %v4071
        %4694 = vst.msk [vmem:[%s362 + $0x28] sm:$0xff] %vm654, %v4076
        %4695 = vst.msk [vmem:[%s362 + $0x30] sm:$0xff] %vm654, %v4081
        %4696 = vst.msk [vmem:[%s362 + $0x38] sm:$0xff] %vm654, %v4086
        %4697 = vst.msk [vmem:[%s362 + $0x40] sm:$0xff] %vm654, %v4091
        %4698 = vst.msk [vmem:[%s362 + $0x48] sm:$0xff] %vm654, %v4096
        %4699 = vst.msk [vmem:[%s362 + $0x50] sm:$0xff] %vm654, %v4101
        %4700 = vst.msk [vmem:[%s362 + $0x58] sm:$0xff] %vm654, %v4106
        %4701 = vst.msk [vmem:[%s362 + $0x60] sm:$0xff] %vm654, %v4111
        %4702 = vst.msk [vmem:[%s362 + $0x68] sm:$0xff] %vm654, %v4116
        %4703 = vst.msk [vmem:[%s362 + $0x70] sm:$0xff] %vm654, %v4121
        %4704 = vst.msk [vmem:[%s362 + $0x78] sm:$0xff] %vm654, %v4126
        %4705 = vst.msk [vmem:[%s362 + $0x80] sm:$0xff] %vm654, %v4131
        %4706 = vst.msk [vmem:[%s362 + $0x88] sm:$0xff] %vm654, %v4136
        %4707 = vst.msk [vmem:[%s362 + $0x90] sm:$0xff] %vm654, %v4141
        %4708 = vst.msk [vmem:[%s362 + $0x98] sm:$0xff] %vm654, %v4146
        %4709 = vst.msk [vmem:[%s362 + $0xa0] sm:$0xff] %vm654, %v4151
        %4710 = vst.msk [vmem:[%s362 + $0xa8] sm:$0xff] %vm654, %v4156
        %4711 = vst.msk [vmem:[%s362 + $0xb0] sm:$0xff] %vm654, %v4161
        %4712 = vst.msk [vmem:[%s362 + $0xb8] sm:$0xff] %vm654, %v4166
        %4713 = vst.msk [vmem:[%s362 + $0xc0] sm:$0xff] %vm654, %v4171
        %4714 = vst.msk [vmem:[%s362 + $0xc8] sm:$0xff] %vm654, %v4176
        %4715 = vst.msk [vmem:[%s362 + $0xd0] sm:$0xff] %vm654, %v4181
        %4716 = vst.msk [vmem:[%s362 + $0xd8] sm:$0xff] %vm654, %v4186
        %4717 = vst.msk [vmem:[%s362 + $0xe0] sm:$0xff] %vm654, %v4191
        %4718 = vst.msk [vmem:[%s362 + $0xe8] sm:$0xff] %vm654, %v4196
        %4719 = vst.msk [vmem:[%s362 + $0xf0] sm:$0xff] %vm654, %v4201
        %4720 = vst.msk [vmem:[%s362 + $0xf8] sm:$0xff] %vm654, %v4206
        %4721 = vst.msk [vmem:[%s362 + $0x100] sm:$0xff] %vm654, %v4211
        %4722 = vst.msk [vmem:[%s362 + $0x108] sm:$0xff] %vm654, %v4216
        %4723 = vst.msk [vmem:[%s362 + $0x110] sm:$0xff] %vm654, %v4221
        %4724 = vst.msk [vmem:[%s362 + $0x118] sm:$0xff] %vm654, %v4226
        %4725 = vst.msk [vmem:[%s362 + $0x120] sm:$0xff] %vm654, %v4231
        %4726 = vst.msk [vmem:[%s362 + $0x128] sm:$0xff] %vm654, %v4236
        %4727 = vst.msk [vmem:[%s362 + $0x130] sm:$0xff] %vm654, %v4241
        %4728 = vst.msk [vmem:[%s362 + $0x138] sm:$0xff] %vm654, %v4246
        %4729 = vst.msk [vmem:[%s362 + $0x140] sm:$0xff] %vm654, %v4251
        %4730 = vst.msk [vmem:[%s362 + $0x148] sm:$0xff] %vm654, %v4256
        %4731 = vst.msk [vmem:[%s362 + $0x150] sm:$0xff] %vm654, %v4261
        %4732 = vst.msk [vmem:[%s362 + $0x158] sm:$0xff] %vm654, %v4266
        %4733 = vst.msk [vmem:[%s362 + $0x160] sm:$0xff] %vm654, %v4271
        %4734 = vst.msk [vmem:[%s362 + $0x168] sm:$0xff] %vm654, %v4276
        %4735 = vst.msk [vmem:[%s362 + $0x170] sm:$0xff] %vm654, %v4281
        %4736 = vst.msk [vmem:[%s362 + $0x178] sm:$0xff] %vm654, %v4286
        %4737 = vst.msk [vmem:[%s362 + $0x180] sm:$0xff] %vm654, %v4291
        %4738 = vst.msk [vmem:[%s362 + $0x188] sm:$0xff] %vm654, %v4296
        %4739 = vst.msk [vmem:[%s362 + $0x190] sm:$0xff] %vm654, %v4301
        %4740 = vst.msk [vmem:[%s362 + $0x198] sm:$0xff] %vm654, %v4306
        %4741 = vst.msk [vmem:[%s362 + $0x1a0] sm:$0xff] %vm654, %v4311
        %4742 = vst.msk [vmem:[%s362 + $0x1a8] sm:$0xff] %vm654, %v4316
        %4743 = vst.msk [vmem:[%s362 + $0x1b0] sm:$0xff] %vm654, %v4321
        %4744 = vst.msk [vmem:[%s362 + $0x1b8] sm:$0xff] %vm654, %v4326
        %4745 = vst.msk [vmem:[%s362 + $0x1c0] sm:$0xff] %vm654, %v4331
        %4746 = vst.msk [vmem:[%s362 + $0x1c8] sm:$0xff] %vm654, %v4336
        %4747 = vst.msk [vmem:[%s362 + $0x1d0] sm:$0xff] %vm654, %v4341
        %4748 = vst.msk [vmem:[%s362 + $0x1d8] sm:$0xff] %vm654, %v4346
        %4749 = vst.msk [vmem:[%s362 + $0x1e0] sm:$0xff] %vm654, %v4351
        %4750 = vst.msk [vmem:[%s362 + $0x1e8] sm:$0xff] %vm654, %v4356
        %4751 = vst.msk [vmem:[%s362 + $0x1f0] sm:$0xff] %vm654, %v4361
        %4752 = vst.msk [vmem:[%s362 + $0x1f8] sm:$0xff] %vm654, %v4366
        %4753 = vst.msk [vmem:[%s362 + $0x200] sm:$0xff] %vm654, %v4371
        %4754 = vst.msk [vmem:[%s362 + $0x208] sm:$0xff] %vm654, %v4376
        %4755 = vst.msk [vmem:[%s362 + $0x210] sm:$0xff] %vm654, %v4381
        %4756 = vst.msk [vmem:[%s362 + $0x218] sm:$0xff] %vm654, %v4386
        %4757 = vst.msk [vmem:[%s362 + $0x220] sm:$0xff] %vm654, %v4391
        %4758 = vst.msk [vmem:[%s362 + $0x228] sm:$0xff] %vm654, %v4396
        %4759 = vst.msk [vmem:[%s362 + $0x230] sm:$0xff] %vm654, %v4401
        %4760 = vst.msk [vmem:[%s362 + $0x238] sm:$0xff] %vm654, %v4406
        %4761 = vst.msk [vmem:[%s362 + $0x240] sm:$0xff] %vm654, %v4411
        %4762 = vst.msk [vmem:[%s362 + $0x248] sm:$0xff] %vm654, %v4416
        %4763 = vst.msk [vmem:[%s362 + $0x250] sm:$0xff] %vm654, %v4421
        %4764 = vst.msk [vmem:[%s362 + $0x258] sm:$0xff] %vm654, %v4426
        %4765 = vst.msk [vmem:[%s362 + $0x260] sm:$0xff] %vm654, %v4431
        %4766 = vst.msk [vmem:[%s362 + $0x268] sm:$0xff] %vm654, %v4436
        %4767 = vst.msk [vmem:[%s362 + $0x270] sm:$0xff] %vm654, %v4441
        %4768 = vst.msk [vmem:[%s362 + $0x278] sm:$0xff] %vm654, %v4446
        %4769 = vst.msk [vmem:[%s362 + $0x280] sm:$0xff] %vm654, %v4451
        %4770 = vst.msk [vmem:[%s362 + $0x288] sm:$0xff] %vm654, %v4456
        %4771 = vst.msk [vmem:[%s362 + $0x290] sm:$0xff] %vm654, %v4461
        %4772 = vst.msk [vmem:[%s362 + $0x298] sm:$0xff] %vm654, %v4466
        %4773 = vst.msk [vmem:[%s362 + $0x2a0] sm:$0xff] %vm654, %v4471
        %4774 = vst.msk [vmem:[%s362 + $0x2a8] sm:$0xff] %vm654, %v4476
        %4775 = vst.msk [vmem:[%s362 + $0x2b0] sm:$0xff] %vm654, %v4481
        %4776 = vst.msk [vmem:[%s362 + $0x2b8] sm:$0xff] %vm654, %v4486
        %4777 = vst.msk [vmem:[%s362 + $0x2c0] sm:$0xff] %vm654, %v4491
        %4778 = vst.msk [vmem:[%s362 + $0x2c8] sm:$0xff] %vm654, %v4496
        %4779 = vst.msk [vmem:[%s362 + $0x2d0] sm:$0xff] %vm654, %v4501
        %4780 = vst.msk [vmem:[%s362 + $0x2d8] sm:$0xff] %vm654, %v4506
        %4781 = vst.msk [vmem:[%s362 + $0x2e0] sm:$0xff] %vm654, %v4511
        %4782 = vst.msk [vmem:[%s362 + $0x2e8] sm:$0xff] %vm654, %v4516
        %4783 = vst.msk [vmem:[%s362 + $0x2f0] sm:$0xff] %vm654, %v4521
        %4784 = vst.msk [vmem:[%s362 + $0x2f8] sm:$0xff] %vm654, %v4526
        %4785 = vst.msk [vmem:[%s362 + $0x300] sm:$0xff] %vm654, %v4531
        %4786 = vst.msk [vmem:[%s362 + $0x308] sm:$0xff] %vm654, %v4536
        %4787 = vst.msk [vmem:[%s362 + $0x310] sm:$0xff] %vm654, %v4541
        %4788 = vst.msk [vmem:[%s362 + $0x318] sm:$0xff] %vm654, %v4546
        %4789 = vst.msk [vmem:[%s362 + $0x320] sm:$0xff] %vm654, %v4551
        %4790 = vst.msk [vmem:[%s362 + $0x328] sm:$0xff] %vm654, %v4556
        %4791 = vst.msk [vmem:[%s362 + $0x330] sm:$0xff] %vm654, %v4561
        %4792 = vst.msk [vmem:[%s362 + $0x338] sm:$0xff] %vm654, %v4566
        %4793 = vst.msk [vmem:[%s362 + $0x340] sm:$0xff] %vm654, %v4571
        %4794 = vst.msk [vmem:[%s362 + $0x348] sm:$0xff] %vm654, %v4576
        %4795 = vst.msk [vmem:[%s362 + $0x350] sm:$0xff] %vm654, %v4581
        %4796 = vst.msk [vmem:[%s362 + $0x358] sm:$0xff] %vm654, %v4586
        %4797 = vst.msk [vmem:[%s362 + $0x360] sm:$0xff] %vm654, %v4591
        %4798 = vst.msk [vmem:[%s362 + $0x368] sm:$0xff] %vm654, %v4596
        %4799 = vst.msk [vmem:[%s362 + $0x370] sm:$0xff] %vm654, %v4601
        %4800 = vst.msk [vmem:[%s362 + $0x378] sm:$0xff] %vm654, %v4606
        %4801 = vst.msk [vmem:[%s362 + $0x380] sm:$0xff] %vm654, %v4611
        %4802 = vst.msk [vmem:[%s362 + $0x388] sm:$0xff] %vm654, %v4616
        %4803 = vst.msk [vmem:[%s362 + $0x390] sm:$0xff] %vm654, %v4621
        %4804 = vst.msk [vmem:[%s362 + $0x398] sm:$0xff] %vm654, %v4626
        %4805 = vst.msk [vmem:[%s362 + $0x3a0] sm:$0xff] %vm654, %v4631
        %4806 = vst.msk [vmem:[%s362 + $0x3a8] sm:$0xff] %vm654, %v4636
        %4807 = vst.msk [vmem:[%s362 + $0x3b0] sm:$0xff] %vm654, %v4641
        %4808 = vst.msk [vmem:[%s362 + $0x3b8] sm:$0xff] %vm654, %v4646
        %4809 = vst.msk [vmem:[%s362 + $0x3c0] sm:$0xff] %vm654, %v4651
        %4810 = vst.msk [vmem:[%s362 + $0x3c8] sm:$0xff] %vm654, %v4656
        %4811 = vst.msk [vmem:[%s362 + $0x3d0] sm:$0xff] %vm654, %v4661
        %4812 = vst.msk [vmem:[%s362 + $0x3d8] sm:$0xff] %vm654, %v4666
        %4813 = vst.msk [vmem:[%s362 + $0x3e0] sm:$0xff] %vm654, %v4671
        %4814 = vst.msk [vmem:[%s362 + $0x3e8] sm:$0xff] %vm654, %v4676
        %4815 = vst.msk [vmem:[%s362 + $0x3f0] sm:$0xff] %vm654, %v4681
        %4816 = vst.msk [vmem:[%s362 + $0x3f8] sm:$0xff] %vm654, %v4686
        %s4817 = sand.u32 %s227, 1
        %s4818 = sand.u32 %s227, 1
        %s4819 = smul.addr %s4818, 1024
        %s4820 = scalar_lea.vmem [#allocation2], %s4819
        // Predicated region
        $region57: #{affine_transformation_network_batched.1} parent=55 // pred_check
          %p4821 = pneg %p237
        $region58: #{affine_transformation_network_batched.1} parent=55 // pred_check_branch
          %4823 = sbr.rel (%p4821) target = $region60
        $region59: #{affine_transformation_network_batched.1} parent=55 // pred_region
          %s4824 = smul.u32 128, %s20
          %s4825 = ssub.s32 193, %s4824
          %p4826 = scmp.lt.s32.totalorder %s4825, 128
          %s4827 = scalar_select %p4826, %s4825, 128
          %s4828 = smul.u32 128, %s4827
          %p4829 = scmp.ne.s32.totalorder 0, %s4828
          %s4830 = smul.addr %s4824, 8
          %s4831 = scalar_lea.vmem %s9, %s4830
          // Predicated region
          $region61: #{affine_transformation_network_batched.1} parent=59 // pred_check
            %p4832 = pneg %p4829
          $region62: #{affine_transformation_network_batched.1} parent=59 // pred_check_branch
            %4834 = sbr.rel (%p4832) target = $region64
          $region63: #{affine_transformation_network_batched.1} parent=59 // pred_region
            // Predicated region
            $region65: #{affine_transformation_network_batched.1} parent=63 // pred_check
              _
            $region66: #{affine_transformation_network_batched.1} parent=63 // pred_check_branch
              %4836 = sbr.rel (0) target = $region68
            $region67: #{affine_transformation_network_batched.1} parent=63 // pred_region
              // Predicated region
              $region87: #{affine_transformation_network_batched.1} parent=67 // pred_check
                _
              $region88: #{affine_transformation_network_batched.1} parent=67 // pred_check_branch
                %5012 = sbr.rel (0) target = $region90
              $region89: #{affine_transformation_network_batched.1} parent=67 // pred_region
                %s5013 = sshrl.u32 %s4827, 6
                // While loop
                $region91: #{affine_transformation_network_batched.1} parent=89 // loop_pre_header
                  _
                $region92: #{affine_transformation_network_batched.1} parent=89 // loop_header
                  %s5015 = sphi 0, %s5017
                  %p5016 = scmp.ge.s32.totalorder %s5015, %s5013
                  %s5020 = sphi 0, %s5153
                  %s5021 = sphi %s4820, %s5156
                  %s5022 = sphi %s4831, %s5157
                $region93: #{affine_transformation_network_batched.1} parent=89 // loop_header_branch
                  %5019 = sbr.rel (%p5016) target = $region97
                $region94: #{affine_transformation_network_batched.1} parent=89 // loop_body
                  %v5023 = vld [vmem:[%s5021] sm:$0xff]
                  %5024 = vst [vmem:[%s5022] sm:$0xff] %v5023
                  %v5025 = vld [vmem:[%s5021 + $0x8] sm:$0xff]
                  %5026 = vst [vmem:[%s5022 + $0x8] sm:$0xff] %v5025
                  %v5027 = vld [vmem:[%s5021 + $0x10] sm:$0xff]
                  %5028 = vst [vmem:[%s5022 + $0x10] sm:$0xff] %v5027
                  %v5029 = vld [vmem:[%s5021 + $0x18] sm:$0xff]
                  %5030 = vst [vmem:[%s5022 + $0x18] sm:$0xff] %v5029
                  %v5031 = vld [vmem:[%s5021 + $0x20] sm:$0xff]
                  %5032 = vst [vmem:[%s5022 + $0x20] sm:$0xff] %v5031
                  %v5033 = vld [vmem:[%s5021 + $0x28] sm:$0xff]
                  %5034 = vst [vmem:[%s5022 + $0x28] sm:$0xff] %v5033
                  %v5035 = vld [vmem:[%s5021 + $0x30] sm:$0xff]
                  %5036 = vst [vmem:[%s5022 + $0x30] sm:$0xff] %v5035
                  %v5037 = vld [vmem:[%s5021 + $0x38] sm:$0xff]
                  %5038 = vst [vmem:[%s5022 + $0x38] sm:$0xff] %v5037
                  %v5039 = vld [vmem:[%s5021 + $0x40] sm:$0xff]
                  %5040 = vst [vmem:[%s5022 + $0x40] sm:$0xff] %v5039
                  %v5041 = vld [vmem:[%s5021 + $0x48] sm:$0xff]
                  %5042 = vst [vmem:[%s5022 + $0x48] sm:$0xff] %v5041
                  %v5043 = vld [vmem:[%s5021 + $0x50] sm:$0xff]
                  %5044 = vst [vmem:[%s5022 + $0x50] sm:$0xff] %v5043
                  %v5045 = vld [vmem:[%s5021 + $0x58] sm:$0xff]
                  %5046 = vst [vmem:[%s5022 + $0x58] sm:$0xff] %v5045
                  %v5047 = vld [vmem:[%s5021 + $0x60] sm:$0xff]
                  %5048 = vst [vmem:[%s5022 + $0x60] sm:$0xff] %v5047
                  %v5049 = vld [vmem:[%s5021 + $0x68] sm:$0xff]
                  %5050 = vst [vmem:[%s5022 + $0x68] sm:$0xff] %v5049
                  %v5051 = vld [vmem:[%s5021 + $0x70] sm:$0xff]
                  %5052 = vst [vmem:[%s5022 + $0x70] sm:$0xff] %v5051
                  %v5053 = vld [vmem:[%s5021 + $0x78] sm:$0xff]
                  %5054 = vst [vmem:[%s5022 + $0x78] sm:$0xff] %v5053
                  %v5055 = vld [vmem:[%s5021 + $0x80] sm:$0xff]
                  %5056 = vst [vmem:[%s5022 + $0x80] sm:$0xff] %v5055
                  %v5057 = vld [vmem:[%s5021 + $0x88] sm:$0xff]
                  %5058 = vst [vmem:[%s5022 + $0x88] sm:$0xff] %v5057
                  %v5059 = vld [vmem:[%s5021 + $0x90] sm:$0xff]
                  %5060 = vst [vmem:[%s5022 + $0x90] sm:$0xff] %v5059
                  %v5061 = vld [vmem:[%s5021 + $0x98] sm:$0xff]
                  %5062 = vst [vmem:[%s5022 + $0x98] sm:$0xff] %v5061
                  %v5063 = vld [vmem:[%s5021 + $0xa0] sm:$0xff]
                  %5064 = vst [vmem:[%s5022 + $0xa0] sm:$0xff] %v5063
                  %v5065 = vld [vmem:[%s5021 + $0xa8] sm:$0xff]
                  %5066 = vst [vmem:[%s5022 + $0xa8] sm:$0xff] %v5065
                  %v5067 = vld [vmem:[%s5021 + $0xb0] sm:$0xff]
                  %5068 = vst [vmem:[%s5022 + $0xb0] sm:$0xff] %v5067
                  %v5069 = vld [vmem:[%s5021 + $0xb8] sm:$0xff]
                  %5070 = vst [vmem:[%s5022 + $0xb8] sm:$0xff] %v5069
                  %v5071 = vld [vmem:[%s5021 + $0xc0] sm:$0xff]
                  %5072 = vst [vmem:[%s5022 + $0xc0] sm:$0xff] %v5071
                  %v5073 = vld [vmem:[%s5021 + $0xc8] sm:$0xff]
                  %5074 = vst [vmem:[%s5022 + $0xc8] sm:$0xff] %v5073
                  %v5075 = vld [vmem:[%s5021 + $0xd0] sm:$0xff]
                  %5076 = vst [vmem:[%s5022 + $0xd0] sm:$0xff] %v5075
                  %v5077 = vld [vmem:[%s5021 + $0xd8] sm:$0xff]
                  %5078 = vst [vmem:[%s5022 + $0xd8] sm:$0xff] %v5077
                  %v5079 = vld [vmem:[%s5021 + $0xe0] sm:$0xff]
                  %5080 = vst [vmem:[%s5022 + $0xe0] sm:$0xff] %v5079
                  %v5081 = vld [vmem:[%s5021 + $0xe8] sm:$0xff]
                  %5082 = vst [vmem:[%s5022 + $0xe8] sm:$0xff] %v5081
                  %v5083 = vld [vmem:[%s5021 + $0xf0] sm:$0xff]
                  %5084 = vst [vmem:[%s5022 + $0xf0] sm:$0xff] %v5083
                  %v5085 = vld [vmem:[%s5021 + $0xf8] sm:$0xff]
                  %5086 = vst [vmem:[%s5022 + $0xf8] sm:$0xff] %v5085
                  %v5087 = vld [vmem:[%s5021 + $0x100] sm:$0xff]
                  %5088 = vst [vmem:[%s5022 + $0x100] sm:$0xff] %v5087
                  %v5089 = vld [vmem:[%s5021 + $0x108] sm:$0xff]
                  %5090 = vst [vmem:[%s5022 + $0x108] sm:$0xff] %v5089
                  %v5091 = vld [vmem:[%s5021 + $0x110] sm:$0xff]
                  %5092 = vst [vmem:[%s5022 + $0x110] sm:$0xff] %v5091
                  %v5093 = vld [vmem:[%s5021 + $0x118] sm:$0xff]
                  %5094 = vst [vmem:[%s5022 + $0x118] sm:$0xff] %v5093
                  %v5095 = vld [vmem:[%s5021 + $0x120] sm:$0xff]
                  %5096 = vst [vmem:[%s5022 + $0x120] sm:$0xff] %v5095
                  %v5097 = vld [vmem:[%s5021 + $0x128] sm:$0xff]
                  %5098 = vst [vmem:[%s5022 + $0x128] sm:$0xff] %v5097
                  %v5099 = vld [vmem:[%s5021 + $0x130] sm:$0xff]
                  %5100 = vst [vmem:[%s5022 + $0x130] sm:$0xff] %v5099
                  %v5101 = vld [vmem:[%s5021 + $0x138] sm:$0xff]
                  %5102 = vst [vmem:[%s5022 + $0x138] sm:$0xff] %v5101
                  %v5103 = vld [vmem:[%s5021 + $0x140] sm:$0xff]
                  %5104 = vst [vmem:[%s5022 + $0x140] sm:$0xff] %v5103
                  %v5105 = vld [vmem:[%s5021 + $0x148] sm:$0xff]
                  %5106 = vst [vmem:[%s5022 + $0x148] sm:$0xff] %v5105
                  %v5107 = vld [vmem:[%s5021 + $0x150] sm:$0xff]
                  %5108 = vst [vmem:[%s5022 + $0x150] sm:$0xff] %v5107
                  %v5109 = vld [vmem:[%s5021 + $0x158] sm:$0xff]
                  %5110 = vst [vmem:[%s5022 + $0x158] sm:$0xff] %v5109
                  %v5111 = vld [vmem:[%s5021 + $0x160] sm:$0xff]
                  %5112 = vst [vmem:[%s5022 + $0x160] sm:$0xff] %v5111
                  %v5113 = vld [vmem:[%s5021 + $0x168] sm:$0xff]
                  %5114 = vst [vmem:[%s5022 + $0x168] sm:$0xff] %v5113
                  %v5115 = vld [vmem:[%s5021 + $0x170] sm:$0xff]
                  %5116 = vst [vmem:[%s5022 + $0x170] sm:$0xff] %v5115
                  %v5117 = vld [vmem:[%s5021 + $0x178] sm:$0xff]
                  %5118 = vst [vmem:[%s5022 + $0x178] sm:$0xff] %v5117
                  %v5119 = vld [vmem:[%s5021 + $0x180] sm:$0xff]
                  %5120 = vst [vmem:[%s5022 + $0x180] sm:$0xff] %v5119
                  %v5121 = vld [vmem:[%s5021 + $0x188] sm:$0xff]
                  %5122 = vst [vmem:[%s5022 + $0x188] sm:$0xff] %v5121
                  %v5123 = vld [vmem:[%s5021 + $0x190] sm:$0xff]
                  %5124 = vst [vmem:[%s5022 + $0x190] sm:$0xff] %v5123
                  %v5125 = vld [vmem:[%s5021 + $0x198] sm:$0xff]
                  %5126 = vst [vmem:[%s5022 + $0x198] sm:$0xff] %v5125
                  %v5127 = vld [vmem:[%s5021 + $0x1a0] sm:$0xff]
                  %5128 = vst [vmem:[%s5022 + $0x1a0] sm:$0xff] %v5127
                  %v5129 = vld [vmem:[%s5021 + $0x1a8] sm:$0xff]
                  %5130 = vst [vmem:[%s5022 + $0x1a8] sm:$0xff] %v5129
                  %v5131 = vld [vmem:[%s5021 + $0x1b0] sm:$0xff]
                  %5132 = vst [vmem:[%s5022 + $0x1b0] sm:$0xff] %v5131
                  %v5133 = vld [vmem:[%s5021 + $0x1b8] sm:$0xff]
                  %5134 = vst [vmem:[%s5022 + $0x1b8] sm:$0xff] %v5133
                  %v5135 = vld [vmem:[%s5021 + $0x1c0] sm:$0xff]
                  %5136 = vst [vmem:[%s5022 + $0x1c0] sm:$0xff] %v5135
                  %v5137 = vld [vmem:[%s5021 + $0x1c8] sm:$0xff]
                  %5138 = vst [vmem:[%s5022 + $0x1c8] sm:$0xff] %v5137
                  %v5139 = vld [vmem:[%s5021 + $0x1d0] sm:$0xff]
                  %5140 = vst [vmem:[%s5022 + $0x1d0] sm:$0xff] %v5139
                  %v5141 = vld [vmem:[%s5021 + $0x1d8] sm:$0xff]
                  %5142 = vst [vmem:[%s5022 + $0x1d8] sm:$0xff] %v5141
                  %v5143 = vld [vmem:[%s5021 + $0x1e0] sm:$0xff]
                  %5144 = vst [vmem:[%s5022 + $0x1e0] sm:$0xff] %v5143
                  %v5145 = vld [vmem:[%s5021 + $0x1e8] sm:$0xff]
                  %5146 = vst [vmem:[%s5022 + $0x1e8] sm:$0xff] %v5145
                  %v5147 = vld [vmem:[%s5021 + $0x1f0] sm:$0xff]
                  %5148 = vst [vmem:[%s5022 + $0x1f0] sm:$0xff] %v5147
                  %v5149 = vld [vmem:[%s5021 + $0x1f8] sm:$0xff]
                  %5150 = vst [vmem:[%s5022 + $0x1f8] sm:$0xff] %v5149
                  %s5151 = sadd.s32 1, %s5020
                  %p5152 = scmp.ge.s32.totalorder %s5151, %s5013
                  %s5153 = scalar_select %p5152, 0, %s5151
                  %s5154 = smul.u32 %s5153, 512
                  %s5155 = smul.u32 %s5153, 512
                  %s5156 = scalar_lea.vmem %s4820, %s5154 [#allocation2]
                  %s5157 = scalar_lea.vmem %s4831, %s5155
                $region95: #{affine_transformation_network_batched.1} parent=89 // loop_footer
                  %s5017 = sadd.s32 %s5015, 1
                $region96: #{affine_transformation_network_batched.1} parent=89 // loop_footer_branch
                  %5014 = sbr.rel target = $region92
                $region97: #{affine_transformation_network_batched.1} parent=89 // loop_exit
                  _
                %s5158 = sshrl.u32 %s4827, 6
                %s5159 = sand.u32 %s4827, 63
                %s5160 = smul.u32 %s5158, 64
                %s5161 = smul.u32 8, %s5160
                %s5162 = scalar_lea.vmem %s4820, %s5161 [#allocation2]
                %s5163 = smul.u32 8, %s5160
                %s5164 = scalar_lea.vmem %s4831, %s5163
                // While loop
                $region98: #{affine_transformation_network_batched.1} parent=89 // loop_pre_header
                  _
                $region99: #{affine_transformation_network_batched.1} parent=89 // loop_header
                  %s5166 = sphi 0, %s5168
                  %p5167 = scmp.ge.s32.totalorder %s5166, %s5159
                  %s5171 = sphi 0, %s5178
                  %s5172 = sphi %s5162, %s5181
                  %s5173 = sphi %s5164, %s5182
                $region100: #{affine_transformation_network_batched.1} parent=89 // loop_header_branch
                  %5170 = sbr.rel (%p5167) target = $region104
                $region101: #{affine_transformation_network_batched.1} parent=89 // loop_body
                  %v5174 = vld [vmem:[%s5172] sm:$0xff]
                  %5175 = vst [vmem:[%s5173] sm:$0xff] %v5174
                  %s5176 = sadd.s32 1, %s5171
                  %p5177 = scmp.ge.s32.totalorder %s5176, %s5159
                  %s5178 = scalar_select %p5177, 0, %s5176
                  %s5179 = smul.u32 %s5178, 8
                  %s5180 = smul.u32 %s5178, 8
                  %s5181 = scalar_lea.vmem %s5162, %s5179 [#allocation2]
                  %s5182 = scalar_lea.vmem %s5164, %s5180
                $region102: #{affine_transformation_network_batched.1} parent=89 // loop_footer
                  %s5168 = sadd.s32 %s5166, 1
                $region103: #{affine_transformation_network_batched.1} parent=89 // loop_footer_branch
                  %5165 = sbr.rel target = $region99
                $region104: #{affine_transformation_network_batched.1} parent=89 // loop_exit
                  _
              $region90: #{affine_transformation_network_batched.1} parent=67 // pred_fallthru
                _
              // Predicated region
              $region105: #{affine_transformation_network_batched.1} parent=67 // pred_check
                _
              $region106: #{affine_transformation_network_batched.1} parent=67 // pred_check_branch
                %5184 = sbr.rel target = $region108
              $region107: #{affine_transformation_network_batched.1} parent=67 // pred_region
                _
              $region108: #{affine_transformation_network_batched.1} parent=67 // pred_fallthru
                _
            $region68: #{affine_transformation_network_batched.1} parent=63 // pred_fallthru
              _
            // Predicated region
            $region69: #{affine_transformation_network_batched.1} parent=63 // pred_check
              _
            $region70: #{affine_transformation_network_batched.1} parent=63 // pred_check_branch
              %4838 = sbr.rel target = $region72
            $region71: #{affine_transformation_network_batched.1} parent=63 // pred_region
              %s4840 = ssub.s32 256, 1
              %s4841 = sshrl.u32 %s4827, 6
              // While loop
              $region73: #{affine_transformation_network_batched.1} parent=71 // loop_pre_header
                _
              $region74: #{affine_transformation_network_batched.1} parent=71 // loop_header
                %s4843 = sphi 0, %s4845
                %p4844 = scmp.ge.s32.totalorder %s4843, %s4841
                %s4848 = sphi 0, %s4981
                %s4849 = sphi %s4820, %s4984
                %s4850 = sphi %s4831, %s4985
              $region75: #{affine_transformation_network_batched.1} parent=71 // loop_header_branch
                %4847 = sbr.rel (%p4844) target = $region79
              $region76: #{affine_transformation_network_batched.1} parent=71 // loop_body
                %v4851 = vld [vmem:[%s4849] sm:%s4840]
                %4852 = vst [vmem:[%s4850] sm:%s4840] %v4851
                %v4853 = vld [vmem:[%s4849 + $0x8] sm:%s4840]
                %4854 = vst [vmem:[%s4850 + $0x8] sm:%s4840] %v4853
                %v4855 = vld [vmem:[%s4849 + $0x10] sm:%s4840]
                %4856 = vst [vmem:[%s4850 + $0x10] sm:%s4840] %v4855
                %v4857 = vld [vmem:[%s4849 + $0x18] sm:%s4840]
                %4858 = vst [vmem:[%s4850 + $0x18] sm:%s4840] %v4857
                %v4859 = vld [vmem:[%s4849 + $0x20] sm:%s4840]
                %4860 = vst [vmem:[%s4850 + $0x20] sm:%s4840] %v4859
                %v4861 = vld [vmem:[%s4849 + $0x28] sm:%s4840]
                %4862 = vst [vmem:[%s4850 + $0x28] sm:%s4840] %v4861
                %v4863 = vld [vmem:[%s4849 + $0x30] sm:%s4840]
                %4864 = vst [vmem:[%s4850 + $0x30] sm:%s4840] %v4863
                %v4865 = vld [vmem:[%s4849 + $0x38] sm:%s4840]
                %4866 = vst [vmem:[%s4850 + $0x38] sm:%s4840] %v4865
                %v4867 = vld [vmem:[%s4849 + $0x40] sm:%s4840]
                %4868 = vst [vmem:[%s4850 + $0x40] sm:%s4840] %v4867
                %v4869 = vld [vmem:[%s4849 + $0x48] sm:%s4840]
                %4870 = vst [vmem:[%s4850 + $0x48] sm:%s4840] %v4869
                %v4871 = vld [vmem:[%s4849 + $0x50] sm:%s4840]
                %4872 = vst [vmem:[%s4850 + $0x50] sm:%s4840] %v4871
                %v4873 = vld [vmem:[%s4849 + $0x58] sm:%s4840]
                %4874 = vst [vmem:[%s4850 + $0x58] sm:%s4840] %v4873
                %v4875 = vld [vmem:[%s4849 + $0x60] sm:%s4840]
                %4876 = vst [vmem:[%s4850 + $0x60] sm:%s4840] %v4875
                %v4877 = vld [vmem:[%s4849 + $0x68] sm:%s4840]
                %4878 = vst [vmem:[%s4850 + $0x68] sm:%s4840] %v4877
                %v4879 = vld [vmem:[%s4849 + $0x70] sm:%s4840]
                %4880 = vst [vmem:[%s4850 + $0x70] sm:%s4840] %v4879
                %v4881 = vld [vmem:[%s4849 + $0x78] sm:%s4840]
                %4882 = vst [vmem:[%s4850 + $0x78] sm:%s4840] %v4881
                %v4883 = vld [vmem:[%s4849 + $0x80] sm:%s4840]
                %4884 = vst [vmem:[%s4850 + $0x80] sm:%s4840] %v4883
                %v4885 = vld [vmem:[%s4849 + $0x88] sm:%s4840]
                %4886 = vst [vmem:[%s4850 + $0x88] sm:%s4840] %v4885
                %v4887 = vld [vmem:[%s4849 + $0x90] sm:%s4840]
                %4888 = vst [vmem:[%s4850 + $0x90] sm:%s4840] %v4887
                %v4889 = vld [vmem:[%s4849 + $0x98] sm:%s4840]
                %4890 = vst [vmem:[%s4850 + $0x98] sm:%s4840] %v4889
                %v4891 = vld [vmem:[%s4849 + $0xa0] sm:%s4840]
                %4892 = vst [vmem:[%s4850 + $0xa0] sm:%s4840] %v4891
                %v4893 = vld [vmem:[%s4849 + $0xa8] sm:%s4840]
                %4894 = vst [vmem:[%s4850 + $0xa8] sm:%s4840] %v4893
                %v4895 = vld [vmem:[%s4849 + $0xb0] sm:%s4840]
                %4896 = vst [vmem:[%s4850 + $0xb0] sm:%s4840] %v4895
                %v4897 = vld [vmem:[%s4849 + $0xb8] sm:%s4840]
                %4898 = vst [vmem:[%s4850 + $0xb8] sm:%s4840] %v4897
                %v4899 = vld [vmem:[%s4849 + $0xc0] sm:%s4840]
                %4900 = vst [vmem:[%s4850 + $0xc0] sm:%s4840] %v4899
                %v4901 = vld [vmem:[%s4849 + $0xc8] sm:%s4840]
                %4902 = vst [vmem:[%s4850 + $0xc8] sm:%s4840] %v4901
                %v4903 = vld [vmem:[%s4849 + $0xd0] sm:%s4840]
                %4904 = vst [vmem:[%s4850 + $0xd0] sm:%s4840] %v4903
                %v4905 = vld [vmem:[%s4849 + $0xd8] sm:%s4840]
                %4906 = vst [vmem:[%s4850 + $0xd8] sm:%s4840] %v4905
                %v4907 = vld [vmem:[%s4849 + $0xe0] sm:%s4840]
                %4908 = vst [vmem:[%s4850 + $0xe0] sm:%s4840] %v4907
                %v4909 = vld [vmem:[%s4849 + $0xe8] sm:%s4840]
                %4910 = vst [vmem:[%s4850 + $0xe8] sm:%s4840] %v4909
                %v4911 = vld [vmem:[%s4849 + $0xf0] sm:%s4840]
                %4912 = vst [vmem:[%s4850 + $0xf0] sm:%s4840] %v4911
                %v4913 = vld [vmem:[%s4849 + $0xf8] sm:%s4840]
                %4914 = vst [vmem:[%s4850 + $0xf8] sm:%s4840] %v4913
                %v4915 = vld [vmem:[%s4849 + $0x100] sm:%s4840]
                %4916 = vst [vmem:[%s4850 + $0x100] sm:%s4840] %v4915
                %v4917 = vld [vmem:[%s4849 + $0x108] sm:%s4840]
                %4918 = vst [vmem:[%s4850 + $0x108] sm:%s4840] %v4917
                %v4919 = vld [vmem:[%s4849 + $0x110] sm:%s4840]
                %4920 = vst [vmem:[%s4850 + $0x110] sm:%s4840] %v4919
                %v4921 = vld [vmem:[%s4849 + $0x118] sm:%s4840]
                %4922 = vst [vmem:[%s4850 + $0x118] sm:%s4840] %v4921
                %v4923 = vld [vmem:[%s4849 + $0x120] sm:%s4840]
                %4924 = vst [vmem:[%s4850 + $0x120] sm:%s4840] %v4923
                %v4925 = vld [vmem:[%s4849 + $0x128] sm:%s4840]
                %4926 = vst [vmem:[%s4850 + $0x128] sm:%s4840] %v4925
                %v4927 = vld [vmem:[%s4849 + $0x130] sm:%s4840]
                %4928 = vst [vmem:[%s4850 + $0x130] sm:%s4840] %v4927
                %v4929 = vld [vmem:[%s4849 + $0x138] sm:%s4840]
                %4930 = vst [vmem:[%s4850 + $0x138] sm:%s4840] %v4929
                %v4931 = vld [vmem:[%s4849 + $0x140] sm:%s4840]
                %4932 = vst [vmem:[%s4850 + $0x140] sm:%s4840] %v4931
                %v4933 = vld [vmem:[%s4849 + $0x148] sm:%s4840]
                %4934 = vst [vmem:[%s4850 + $0x148] sm:%s4840] %v4933
                %v4935 = vld [vmem:[%s4849 + $0x150] sm:%s4840]
                %4936 = vst [vmem:[%s4850 + $0x150] sm:%s4840] %v4935
                %v4937 = vld [vmem:[%s4849 + $0x158] sm:%s4840]
                %4938 = vst [vmem:[%s4850 + $0x158] sm:%s4840] %v4937
                %v4939 = vld [vmem:[%s4849 + $0x160] sm:%s4840]
                %4940 = vst [vmem:[%s4850 + $0x160] sm:%s4840] %v4939
                %v4941 = vld [vmem:[%s4849 + $0x168] sm:%s4840]
                %4942 = vst [vmem:[%s4850 + $0x168] sm:%s4840] %v4941
                %v4943 = vld [vmem:[%s4849 + $0x170] sm:%s4840]
                %4944 = vst [vmem:[%s4850 + $0x170] sm:%s4840] %v4943
                %v4945 = vld [vmem:[%s4849 + $0x178] sm:%s4840]
                %4946 = vst [vmem:[%s4850 + $0x178] sm:%s4840] %v4945
                %v4947 = vld [vmem:[%s4849 + $0x180] sm:%s4840]
                %4948 = vst [vmem:[%s4850 + $0x180] sm:%s4840] %v4947
                %v4949 = vld [vmem:[%s4849 + $0x188] sm:%s4840]
                %4950 = vst [vmem:[%s4850 + $0x188] sm:%s4840] %v4949
                %v4951 = vld [vmem:[%s4849 + $0x190] sm:%s4840]
                %4952 = vst [vmem:[%s4850 + $0x190] sm:%s4840] %v4951
                %v4953 = vld [vmem:[%s4849 + $0x198] sm:%s4840]
                %4954 = vst [vmem:[%s4850 + $0x198] sm:%s4840] %v4953
                %v4955 = vld [vmem:[%s4849 + $0x1a0] sm:%s4840]
                %4956 = vst [vmem:[%s4850 + $0x1a0] sm:%s4840] %v4955
                %v4957 = vld [vmem:[%s4849 + $0x1a8] sm:%s4840]
                %4958 = vst [vmem:[%s4850 + $0x1a8] sm:%s4840] %v4957
                %v4959 = vld [vmem:[%s4849 + $0x1b0] sm:%s4840]
                %4960 = vst [vmem:[%s4850 + $0x1b0] sm:%s4840] %v4959
                %v4961 = vld [vmem:[%s4849 + $0x1b8] sm:%s4840]
                %4962 = vst [vmem:[%s4850 + $0x1b8] sm:%s4840] %v4961
                %v4963 = vld [vmem:[%s4849 + $0x1c0] sm:%s4840]
                %4964 = vst [vmem:[%s4850 + $0x1c0] sm:%s4840] %v4963
                %v4965 = vld [vmem:[%s4849 + $0x1c8] sm:%s4840]
                %4966 = vst [vmem:[%s4850 + $0x1c8] sm:%s4840] %v4965
                %v4967 = vld [vmem:[%s4849 + $0x1d0] sm:%s4840]
                %4968 = vst [vmem:[%s4850 + $0x1d0] sm:%s4840] %v4967
                %v4969 = vld [vmem:[%s4849 + $0x1d8] sm:%s4840]
                %4970 = vst [vmem:[%s4850 + $0x1d8] sm:%s4840] %v4969
                %v4971 = vld [vmem:[%s4849 + $0x1e0] sm:%s4840]
                %4972 = vst [vmem:[%s4850 + $0x1e0] sm:%s4840] %v4971
                %v4973 = vld [vmem:[%s4849 + $0x1e8] sm:%s4840]
                %4974 = vst [vmem:[%s4850 + $0x1e8] sm:%s4840] %v4973
                %v4975 = vld [vmem:[%s4849 + $0x1f0] sm:%s4840]
                %4976 = vst [vmem:[%s4850 + $0x1f0] sm:%s4840] %v4975
                %v4977 = vld [vmem:[%s4849 + $0x1f8] sm:%s4840]
                %4978 = vst [vmem:[%s4850 + $0x1f8] sm:%s4840] %v4977
                %s4979 = sadd.s32 1, %s4848
                %p4980 = scmp.ge.s32.totalorder %s4979, %s4841
                %s4981 = scalar_select %p4980, 0, %s4979
                %s4982 = smul.u32 %s4981, 512
                %s4983 = smul.u32 %s4981, 512
                %s4984 = scalar_lea.vmem %s4820, %s4982 [#allocation2]
                %s4985 = scalar_lea.vmem %s4831, %s4983
              $region77: #{affine_transformation_network_batched.1} parent=71 // loop_footer
                %s4845 = sadd.s32 %s4843, 1
              $region78: #{affine_transformation_network_batched.1} parent=71 // loop_footer_branch
                %4842 = sbr.rel target = $region74
              $region79: #{affine_transformation_network_batched.1} parent=71 // loop_exit
                _
              %s4986 = sshrl.u32 %s4827, 6
              %s4987 = sand.u32 %s4827, 63
              %s4988 = smul.u32 %s4986, 64
              %s4989 = smul.u32 8, %s4988
              %s4990 = scalar_lea.vmem %s4820, %s4989 [#allocation2]
              %s4991 = smul.u32 8, %s4988
              %s4992 = scalar_lea.vmem %s4831, %s4991
              // While loop
              $region80: #{affine_transformation_network_batched.1} parent=71 // loop_pre_header
                _
              $region81: #{affine_transformation_network_batched.1} parent=71 // loop_header
                %s4994 = sphi 0, %s4996
                %p4995 = scmp.ge.s32.totalorder %s4994, %s4987
                %s4999 = sphi 0, %s5006
                %s5000 = sphi %s4990, %s5009
                %s5001 = sphi %s4992, %s5010
              $region82: #{affine_transformation_network_batched.1} parent=71 // loop_header_branch
                %4998 = sbr.rel (%p4995) target = $region86
              $region83: #{affine_transformation_network_batched.1} parent=71 // loop_body
                %v5002 = vld [vmem:[%s5000] sm:%s4840]
                %5003 = vst [vmem:[%s5001] sm:%s4840] %v5002
                %s5004 = sadd.s32 1, %s4999
                %p5005 = scmp.ge.s32.totalorder %s5004, %s4987
                %s5006 = scalar_select %p5005, 0, %s5004
                %s5007 = smul.u32 %s5006, 8
                %s5008 = smul.u32 %s5006, 8
                %s5009 = scalar_lea.vmem %s4990, %s5007 [#allocation2]
                %s5010 = scalar_lea.vmem %s4992, %s5008
              $region84: #{affine_transformation_network_batched.1} parent=71 // loop_footer
                %s4996 = sadd.s32 %s4994, 1
              $region85: #{affine_transformation_network_batched.1} parent=71 // loop_footer_branch
                %4993 = sbr.rel target = $region81
              $region86: #{affine_transformation_network_batched.1} parent=71 // loop_exit
                _
            $region72: #{affine_transformation_network_batched.1} parent=63 // pred_fallthru
              _
          $region64: #{affine_transformation_network_batched.1} parent=59 // pred_fallthru
            _
          %5185 = vnop
        $region60: #{affine_transformation_network_batched.1} parent=55 // pred_fallthru
          _
      $region56: #{affine_transformation_network_batched.1} parent=5 // pred_fallthru
        _
      %p5186 = scmp.le.s32.totalorder 2, %s15
      // Predicated region
      $region109: #{affine_transformation_network_batched.1} parent=5 // pred_check
        %p5187 = pneg %p5186
      $region110: #{affine_transformation_network_batched.1} parent=5 // pred_check_branch
        %5189 = sbr.rel (%p5187) target = $region112
      $region111: #{affine_transformation_network_batched.1} parent=5 // pred_region
        %s5190 = ssub.s32 %s15, 2
        // Predicated region
        $region113: #{affine_transformation_network_batched.1} parent=111 // pred_check
          %p5191 = pneg %p243
        $region114: #{affine_transformation_network_batched.1} parent=111 // pred_check_branch
          %5193 = sbr.rel (%p5191) target = $region116
        $region115: #{affine_transformation_network_batched.1} parent=111 // pred_region
          %s5194 = sand.u32 %s228, 1
          %s5195 = sand.u32 %s228, 1
          %s5196 = smul.addr %s5195, 1024
          %s5197 = scalar_lea.vmem [#allocation2], %s5196
        $region116: #{affine_transformation_network_batched.1} parent=111 // pred_fallthru
          _
      $region112: #{affine_transformation_network_batched.1} parent=5 // pred_fallthru
        _
    $region6: #{affine_transformation_network_batched.1} parent=1 // loop_footer
      %s19 = sadd.s32 1, %s15
    $region7: #{affine_transformation_network_batched.1} parent=1 // loop_footer_branch
      %14 = sbr.rel target = $region3
    $region8: #{affine_transformation_network_batched.1} parent=1 // loop_exit
      _

</llo_original>
